<compile_context>
chip_gen: v6e
topology: v6e:2x2x1
jax: 0.10.0
libtpu: 0.0.40
codegen_flags: <defaults>
</compile_context>

<pallas_src>
import jax
import jax.numpy as jnp
from jax.experimental import pallas as pl
from jax.experimental.pallas import tpu as pltpu

HIDDEN = 400      # logical hidden dim (PyTorch module)
LATENT = 15       # logical latent dim
HP = 512          # padded hidden dim (multiple of 128)
LP = 128          # padded latent dim (multiple of 128)


def _round_up(n, m):
    return ((n + m - 1) // m) * m


def _pad2(a, rows, cols):
    return jnp.pad(a, ((0, rows - a.shape[0]), (0, cols - a.shape[1])))


# ---------------------------------------------------------------------------
# Kernel
# ---------------------------------------------------------------------------
def _vae_kernel(x_ref, eps_ref,
                w1_ref, w2_ref, w3_ref, wh_ref,
                dw1_ref, dw2_ref, dw3_ref, dw4_ref,
                bias_ref,
                xhat_ref, mulv_ref):
    f32 = jnp.float32
    bf16 = jnp.bfloat16

    def dense(a, w_ref, bias_row, relu):
        n_out = w_ref.shape[1]
        b = bias_ref[bias_row:bias_row + 1, :n_out]            # (1, n_out) f32
        y = jnp.dot(a.astype(bf16), w_ref[...],
                    preferred_element_type=f32) + b            # bf16 MXU, f32 acc
        return jnp.maximum(y, 0.0) if relu else y

    x = x_ref[...]                                             # (TN, Dp) f32

    # ---- encoder: 3 x (Linear + ReLU) ----
    h = dense(x, w1_ref, 0, True)
    h = dense(h, w2_ref, 1, True)
    h = dense(h, w3_ref, 2, True)

    # ---- fused latent heads: one matmul -> [mu_pad | logvar_pad] ----
    mulv = dense(h, wh_ref, 3, False)                          # (TN, 2*LP)
    mu_pad = mulv[:, :LP]                                      # lanes >= LATENT are 0
    lv_pad = mulv[:, LP:]                                      # lanes >= LATENT are 0

    # ---- reparametrization: z = mu + eps * exp(logvar / 2) ----
    # eps is zero in padded lanes, so padded z lanes stay exactly 0.
    z = mu_pad + eps_ref[...] * jnp.exp(lv_pad * 0.5)          # (TN, LP) f32

    # ---- decoder: 3 x (Linear + ReLU), Linear, Sigmoid ----
    d = dense(z, dw1_ref, 4, True)
    d = dense(d, dw2_ref, 5, True)
    d = dense(d, dw3_ref, 6, True)
    logits = dense(d, dw4_ref, 7, False)                       # (TN, Dp)

    xhat_ref[...] = jax.nn.sigmoid(logits)
    mulv_ref[...] = mulv


# ---------------------------------------------------------------------------
# Parameter packing (padding + bf16 cast + fused heads + bias slab)
# ---------------------------------------------------------------------------
def pack_params(params, d_pad):
    """Produce padded kernel operands from the logical (PyTorch-layout) params.

    In production this would be done once, not per forward call."""
    (w1, b1, w2, b2, w3, b3, wmu, bmu, wlv, blv,
     dw1, db1, dw2, db2, dw3, db3, dw4, db4) = params
    bf16 = jnp.bfloat16

    w1p = _pad2(w1, d_pad, HP).astype(bf16)
    w2p = _pad2(w2, HP, HP).astype(bf16)
    w3p = _pad2(w3, HP, HP).astype(bf16)
    # fused mu/logvar heads: mu -> lanes [0, LP), logvar -> lanes [LP, 2*LP)
    whp = jnp.concatenate([_pad2(wmu, HP, LP), _pad2(wlv, HP, LP)],
                          axis=1).astype(bf16)
    dw1p = _pad2(dw1, LP, HP).astype(bf16)
    dw2p = _pad2(dw2, HP, HP).astype(bf16)
    dw3p = _pad2(dw3, HP, HP).astype(bf16)
    dw4p = _pad2(dw4, HP, d_pad).astype(bf16)

    slab_w = max(HP, d_pad, 2 * LP)
    bh = jnp.concatenate([_pad2(bmu, 1, LP), _pad2(blv, 1, LP)], axis=1)
    bias_rows = [b1, b2, b3, bh, db1, db2, db3, db4]
    bias_slab = jnp.concatenate([_pad2(b, 1, slab_w) for b in bias_rows],
                                axis=0).astype(jnp.float32)    # (8, slab_w)

    return (w1p, w2p, w3p, whp, dw1p, dw2p, dw3p, dw4p, bias_slab)


# ---------------------------------------------------------------------------
# Wrapper
# ---------------------------------------------------------------------------
def vae_forward(x, eps, params, *, tile_n=256):
    """x: (N, 1, H, W) f32; eps: (N, LATENT) f32; params: flat tuple (f32)."""
    N = x.shape[0]
    D = x.shape[1] * x.shape[2] * x.shape[3]
    d_pad = _round_up(D, 128)

    x_flat = x.reshape(N, D)                                   # glue (nn.Flatten)
    if d_pad != D:
        x_flat = jnp.pad(x_flat, ((0, 0), (0, d_pad - D)))

    # Batch tile: 256 rows for real batches (fills the MXU), tiny batches are
    # padded to a sublane multiple.
    tn = tile_n if N >= tile_n else _round_up(max(N, 8), 8)
    n_pad = _round_up(N, tn)
    if n_pad != N:
        x_flat = jnp.pad(x_flat, ((0, n_pad - N), (0, 0)))
    eps_p = jnp.pad(eps, ((0, n_pad - N), (0, LP - LATENT)))   # zero-pad lanes

    kparams = pack_params(params, d_pad)

    row = lambda i: (i, 0)        # batch-blocked operands
    const = lambda i: (0, 0)      # VMEM-resident weights / biases

    in_specs = ([pl.BlockSpec((tn, d_pad), row),
                 pl.BlockSpec((tn, LP), row)]
                + [pl.BlockSpec(p.shape, const) for p in kparams])
    out_specs = (pl.BlockSpec((tn, d_pad), row),
                 pl.BlockSpec((tn, 2 * LP), row))
    out_shape = (jax.ShapeDtypeStruct((n_pad, d_pad), jnp.float32),
                 jax.ShapeDtypeStruct((n_pad, 2 * LP), jnp.float32))

    xhat_flat, mulv = pl.pallas_call(
        _vae_kernel,
        grid=(n_pad // tn,),
        in_specs=in_specs,
        out_specs=out_specs,
        out_shape=out_shape,
        compiler_params=pltpu.CompilerParams(
            dimension_semantics=("parallel",),
            vmem_limit_bytes=32 * 1024 * 1024),
    )(x_flat, eps_p, *kparams)

    x_hat = xhat_flat[:N, :D].reshape(x.shape)                 # glue (nn.Unflatten)
    mu = mulv[:N, :LATENT]
    logvar = mulv[:N, LP:LP + LATENT]
    return x_hat, mu, logvar


# ---------------------------------------------------------------------------
# Init + reference
# ---------------------------------------------------------------------------
def init_params(key, input_size, hidden=HIDDEN, latent=LATENT):
    """PyTorch-Linear-style init: U(-1/sqrt(fan_in), 1/sqrt(fan_in)).
    Weights stored as (in, out); biases as (1, out); all f32 / unpadded."""
    dims = [
        (input_size, hidden),  # encoder l1
        (hidden, hidden),      # encoder l2
        (hidden, hidden),      # encoder l3
        (hidden, latent),      # mu head
        (hidden, latent),      # logvar head
        (latent, hidden),      # decoder l1
        (hidden, hidden),      # decoder l2
        (hidden, hidden),      # decoder l3
        (hidden, input_size),  # decoder l4
    ]
    params = []
    for (fan_in, fan_out) in dims:
        key, kw, kb = jax.random.split(key, 3)
        bound = 1.0 / jnp.sqrt(jnp.float32(fan_in))
        w = jax.random.uniform(kw, (fan_in, fan_out), jnp.float32, -bound, bound)
        b = jax.random.uniform(kb, (1, fan_out), jnp.float32, -bound, bound)
        params += [w, b]
    return tuple(params)


def reference_forward(x, eps, params):
    """Pure-JAX reference matching the kernel's numerics (bf16 matmul operands,
    f32 accumulation and elementwise)."""
    (w1, b1, w2, b2, w3, b3, wmu, bmu, wlv, blv,
     dw1, db1, dw2, db2, dw3, db3, dw4, db4) = params
    bf16, f32 = jnp.bfloat16, jnp.float32

    def dense(a, w, b, relu=False):
        y = jnp.dot(a.astype(bf16), w.astype(bf16),
                    preferred_element_type=f32) + b
        return jax.nn.relu(y) if relu else y

    N = x.shape[0]
    xf = x.reshape(N, -1)
    h = dense(xf, w1, b1, True)
    h = dense(h, w2, b2, True)
    h = dense(h, w3, b3, True)
    mu = dense(h, wmu, bmu)
    logvar = dense(h, wlv, blv)
    z = mu + eps * jnp.exp(logvar / 2.0)
    d = dense(z, dw1, db1, True)
    d = dense(d, dw2, db2, True)
    d = dense(d, dw3, db3, True)
    x_hat = jax.nn.sigmoid(dense(d, dw4, db4))
    return x_hat.reshape(x.shape), mu, logvar


if __name__ == "__main__":
    # Small shapes: batch=2, single channel, 16x16 image -> input_size = 256.
    N, H, W = 2, 16, 16
    INPUT_SIZE = H * W

    key = jax.random.PRNGKey(0)
    key, kx, keps, kp = jax.random.split(key, 4)

    x = jax.random.uniform(kx, (N, 1, H, W), jnp.float32)
    # Reparametrization noise eps ~ N(0, 1) is sampled in plain JAX and fed to
    # the kernel so the forward is deterministic and reproducible.
    eps = jax.random.normal(keps, (N, LATENT), jnp.float32)

    params = init_params(kp, INPUT_SIZE)

    x_hat, mu, logvar = vae_forward(x, eps, params)
    jax.block_until_ready((x_hat, mu, logvar))

    # Sanity check against the pure-JAX reference.
    xr, mur, lvr = reference_forward(x, eps, params)
    assert x_hat.shape == x.shape
    assert mu.shape == (N, LATENT) and logvar.shape == (N, LATENT)
    assert jnp.allclose(x_hat, xr, atol=1e-2, rtol=1e-2)
    assert jnp.allclose(mu, mur, atol=1e-2, rtol=1e-2)
    assert jnp.allclose(logvar, lvr, atol=1e-2, rtol=1e-2)

    print("KERNEL_OK")
</pallas_src>

<mosaic_0001>
module attributes {stable_mosaic.version = 11 : i64} {
  func.func @_vae_kernel(%arg0: i32, %arg1: memref<8x256xf32, #tpu.memory_space<vmem>>, %arg2: memref<8x128xf32, #tpu.memory_space<vmem>>, %arg3: memref<256x512xbf16, #tpu.memory_space<vmem>>, %arg4: memref<512x512xbf16, #tpu.memory_space<vmem>>, %arg5: memref<512x512xbf16, #tpu.memory_space<vmem>>, %arg6: memref<512x256xbf16, #tpu.memory_space<vmem>>, %arg7: memref<128x512xbf16, #tpu.memory_space<vmem>>, %arg8: memref<512x512xbf16, #tpu.memory_space<vmem>>, %arg9: memref<512x512xbf16, #tpu.memory_space<vmem>>, %arg10: memref<512x256xbf16, #tpu.memory_space<vmem>>, %arg11: memref<8x512xf32, #tpu.memory_space<vmem>>, %arg12: memref<8x256xf32, #tpu.memory_space<vmem>>, %arg13: memref<8x256xf32, #tpu.memory_space<vmem>>) attributes {dimension_semantics = [#tpu.dimension_semantics<parallel>], iteration_bounds = array<i64: 1>, scalar_prefetch = 0 : i64, scratch_operands = 0 : i64, tpu.core_type = #tpu.core_type<tc>, window_params = [{transform_indices = @transform_0, window_bounds = array<i64: 8, 256>}, {transform_indices = @transform_1, window_bounds = array<i64: 8, 128>}, {pipeline_mode = #tpu.pipeline_mode<synchronous>, transform_indices = @transform_2, window_bounds = array<i64: 256, 512>}, {pipeline_mode = #tpu.pipeline_mode<synchronous>, transform_indices = @transform_3, window_bounds = array<i64: 512, 512>}, {pipeline_mode = #tpu.pipeline_mode<synchronous>, transform_indices = @transform_4, window_bounds = array<i64: 512, 512>}, {pipeline_mode = #tpu.pipeline_mode<synchronous>, transform_indices = @transform_5, window_bounds = array<i64: 512, 256>}, {pipeline_mode = #tpu.pipeline_mode<synchronous>, transform_indices = @transform_6, window_bounds = array<i64: 128, 512>}, {pipeline_mode = #tpu.pipeline_mode<synchronous>, transform_indices = @transform_7, window_bounds = array<i64: 512, 512>}, {pipeline_mode = #tpu.pipeline_mode<synchronous>, transform_indices = @transform_8, window_bounds = array<i64: 512, 512>}, {pipeline_mode = #tpu.pipeline_mode<synchronous>, transform_indices = @transform_9, window_bounds = array<i64: 512, 256>}, {pipeline_mode = #tpu.pipeline_mode<synchronous>, transform_indices = @transform_10, window_bounds = array<i64: 8, 512>}, {transform_indices = @transform_11, window_bounds = array<i64: 8, 256>}, {transform_indices = @transform_12, window_bounds = array<i64: 8, 256>}]} {
    %c0 = arith.constant 0 : index
    %c0_0 = arith.constant 0 : index
    %0 = vector.load %arg1[%c0, %c0_0] : memref<8x256xf32, #tpu.memory_space<vmem>>, vector<8x256xf32>
    %c0_1 = arith.constant 0 : index
    %c0_2 = arith.constant 0 : index
    %1 = vector.load %arg11[%c0_1, %c0_2] : memref<8x512xf32, #tpu.memory_space<vmem>>, vector<1x512xf32>
    %2 = arith.truncf %0 : vector<8x256xf32> to vector<8x256xbf16>
    %c0_3 = arith.constant 0 : index
    %c0_4 = arith.constant 0 : index
    %3 = vector.load %arg3[%c0_3, %c0_4] : memref<256x512xbf16, #tpu.memory_space<vmem>>, vector<256x512xbf16>
    %cst = arith.constant dense<0.000000e+00> : vector<8x512xf32>
    %4 = tpu.matmul %2, %3, %cst {dimension_numbers = #tpu.dot_dimension_numbers<[1], [0], [0], [1], [0, 0, 1, 1], [], []>} : vector<8x256xbf16>, vector<256x512xbf16>, vector<8x512xf32> -> vector<8x512xf32>
    %5 = vector.broadcast %1 : vector<1x512xf32> to vector<8x512xf32>
    %6 = arith.addf %4, %5 : vector<8x512xf32>
    %cst_5 = arith.constant 0.000000e+00 : f32
    %7 = vector.broadcast %cst_5 : f32 to vector<8x512xf32>
    %8 = arith.maximumf %6, %7 : vector<8x512xf32>
    %c1 = arith.constant 1 : index
    %c0_6 = arith.constant 0 : index
    %9 = vector.load %arg11[%c1, %c0_6] : memref<8x512xf32, #tpu.memory_space<vmem>>, vector<1x512xf32>
    %10 = arith.truncf %8 : vector<8x512xf32> to vector<8x512xbf16>
    %c0_7 = arith.constant 0 : index
    %c0_8 = arith.constant 0 : index
    %11 = vector.load %arg4[%c0_7, %c0_8] : memref<512x512xbf16, #tpu.memory_space<vmem>>, vector<512x512xbf16>
    %cst_9 = arith.constant dense<0.000000e+00> : vector<8x512xf32>
    %12 = tpu.matmul %10, %11, %cst_9 {dimension_numbers = #tpu.dot_dimension_numbers<[1], [0], [0], [1], [0, 0, 1, 1], [], []>} : vector<8x512xbf16>, vector<512x512xbf16>, vector<8x512xf32> -> vector<8x512xf32>
    %13 = vector.broadcast %9 : vector<1x512xf32> to vector<8x512xf32>
    %14 = arith.addf %12, %13 : vector<8x512xf32>
    %cst_10 = arith.constant 0.000000e+00 : f32
    %15 = vector.broadcast %cst_10 : f32 to vector<8x512xf32>
    %16 = arith.maximumf %14, %15 : vector<8x512xf32>
    %c2 = arith.constant 2 : index
    %c0_11 = arith.constant 0 : index
    %17 = vector.load %arg11[%c2, %c0_11] : memref<8x512xf32, #tpu.memory_space<vmem>>, vector<1x512xf32>
    %18 = arith.truncf %16 : vector<8x512xf32> to vector<8x512xbf16>
    %c0_12 = arith.constant 0 : index
    %c0_13 = arith.constant 0 : index
    %19 = vector.load %arg5[%c0_12, %c0_13] : memref<512x512xbf16, #tpu.memory_space<vmem>>, vector<512x512xbf16>
    %cst_14 = arith.constant dense<0.000000e+00> : vector<8x512xf32>
    %20 = tpu.matmul %18, %19, %cst_14 {dimension_numbers = #tpu.dot_dimension_numbers<[1], [0], [0], [1], [0, 0, 1, 1], [], []>} : vector<8x512xbf16>, vector<512x512xbf16>, vector<8x512xf32> -> vector<8x512xf32>
    %21 = vector.broadcast %17 : vector<1x512xf32> to vector<8x512xf32>
    %22 = arith.addf %20, %21 : vector<8x512xf32>
    %cst_15 = arith.constant 0.000000e+00 : f32
    %23 = vector.broadcast %cst_15 : f32 to vector<8x512xf32>
    %24 = arith.maximumf %22, %23 : vector<8x512xf32>
    %c3 = arith.constant 3 : index
    %c0_16 = arith.constant 0 : index
    %25 = vector.load %arg11[%c3, %c0_16] : memref<8x512xf32, #tpu.memory_space<vmem>>, vector<1x256xf32>
    %26 = arith.truncf %24 : vector<8x512xf32> to vector<8x512xbf16>
    %c0_17 = arith.constant 0 : index
    %c0_18 = arith.constant 0 : index
    %27 = vector.load %arg6[%c0_17, %c0_18] : memref<512x256xbf16, #tpu.memory_space<vmem>>, vector<512x256xbf16>
    %cst_19 = arith.constant dense<0.000000e+00> : vector<8x256xf32>
    %28 = tpu.matmul %26, %27, %cst_19 {dimension_numbers = #tpu.dot_dimension_numbers<[1], [0], [0], [1], [0, 0, 1, 1], [], []>} : vector<8x512xbf16>, vector<512x256xbf16>, vector<8x256xf32> -> vector<8x256xf32>
    %29 = vector.broadcast %25 : vector<1x256xf32> to vector<8x256xf32>
    %30 = arith.addf %28, %29 : vector<8x256xf32>
    %31 = vector.extract_strided_slice %30 {offsets = [0, 0], sizes = [8, 128], strides = [1, 1]} : vector<8x256xf32> to vector<8x128xf32>
    %32 = vector.extract_strided_slice %30 {offsets = [0, 128], sizes = [8, 128], strides = [1, 1]} : vector<8x256xf32> to vector<8x128xf32>
    %c0_20 = arith.constant 0 : index
    %c0_21 = arith.constant 0 : index
    %33 = vector.load %arg2[%c0_20, %c0_21] : memref<8x128xf32, #tpu.memory_space<vmem>>, vector<8x128xf32>
    %cst_22 = arith.constant 5.000000e-01 : f32
    %34 = vector.broadcast %cst_22 : f32 to vector<8x128xf32>
    %35 = arith.mulf %32, %34 : vector<8x128xf32>
    %36 = math.exp %35 : vector<8x128xf32>
    %37 = arith.mulf %33, %36 : vector<8x128xf32>
    %38 = arith.addf %31, %37 : vector<8x128xf32>
    %c4 = arith.constant 4 : index
    %c0_23 = arith.constant 0 : index
    %39 = vector.load %arg11[%c4, %c0_23] : memref<8x512xf32, #tpu.memory_space<vmem>>, vector<1x512xf32>
    %40 = arith.truncf %38 : vector<8x128xf32> to vector<8x128xbf16>
    %c0_24 = arith.constant 0 : index
    %c0_25 = arith.constant 0 : index
    %41 = vector.load %arg7[%c0_24, %c0_25] : memref<128x512xbf16, #tpu.memory_space<vmem>>, vector<128x512xbf16>
    %cst_26 = arith.constant dense<0.000000e+00> : vector<8x512xf32>
    %42 = tpu.matmul %40, %41, %cst_26 {dimension_numbers = #tpu.dot_dimension_numbers<[1], [0], [0], [1], [0, 0, 1, 1], [], []>} : vector<8x128xbf16>, vector<128x512xbf16>, vector<8x512xf32> -> vector<8x512xf32>
    %43 = vector.broadcast %39 : vector<1x512xf32> to vector<8x512xf32>
    %44 = arith.addf %42, %43 : vector<8x512xf32>
    %cst_27 = arith.constant 0.000000e+00 : f32
    %45 = vector.broadcast %cst_27 : f32 to vector<8x512xf32>
    %46 = arith.maximumf %44, %45 : vector<8x512xf32>
    %c5 = arith.constant 5 : index
    %c0_28 = arith.constant 0 : index
    %47 = vector.load %arg11[%c5, %c0_28] : memref<8x512xf32, #tpu.memory_space<vmem>>, vector<1x512xf32>
    %48 = arith.truncf %46 : vector<8x512xf32> to vector<8x512xbf16>
    %c0_29 = arith.constant 0 : index
    %c0_30 = arith.constant 0 : index
    %49 = vector.load %arg8[%c0_29, %c0_30] : memref<512x512xbf16, #tpu.memory_space<vmem>>, vector<512x512xbf16>
    %cst_31 = arith.constant dense<0.000000e+00> : vector<8x512xf32>
    %50 = tpu.matmul %48, %49, %cst_31 {dimension_numbers = #tpu.dot_dimension_numbers<[1], [0], [0], [1], [0, 0, 1, 1], [], []>} : vector<8x512xbf16>, vector<512x512xbf16>, vector<8x512xf32> -> vector<8x512xf32>
    %51 = vector.broadcast %47 : vector<1x512xf32> to vector<8x512xf32>
    %52 = arith.addf %50, %51 : vector<8x512xf32>
    %cst_32 = arith.constant 0.000000e+00 : f32
    %53 = vector.broadcast %cst_32 : f32 to vector<8x512xf32>
    %54 = arith.maximumf %52, %53 : vector<8x512xf32>
    %c6 = arith.constant 6 : index
    %c0_33 = arith.constant 0 : index
    %55 = vector.load %arg11[%c6, %c0_33] : memref<8x512xf32, #tpu.memory_space<vmem>>, vector<1x512xf32>
    %56 = arith.truncf %54 : vector<8x512xf32> to vector<8x512xbf16>
    %c0_34 = arith.constant 0 : index
    %c0_35 = arith.constant 0 : index
    %57 = vector.load %arg9[%c0_34, %c0_35] : memref<512x512xbf16, #tpu.memory_space<vmem>>, vector<512x512xbf16>
    %cst_36 = arith.constant dense<0.000000e+00> : vector<8x512xf32>
    %58 = tpu.matmul %56, %57, %cst_36 {dimension_numbers = #tpu.dot_dimension_numbers<[1], [0], [0], [1], [0, 0, 1, 1], [], []>} : vector<8x512xbf16>, vector<512x512xbf16>, vector<8x512xf32> -> vector<8x512xf32>
    %59 = vector.broadcast %55 : vector<1x512xf32> to vector<8x512xf32>
    %60 = arith.addf %58, %59 : vector<8x512xf32>
    %cst_37 = arith.constant 0.000000e+00 : f32
    %61 = vector.broadcast %cst_37 : f32 to vector<8x512xf32>
    %62 = arith.maximumf %60, %61 : vector<8x512xf32>
    %c7 = arith.constant 7 : index
    %c0_38 = arith.constant 0 : index
    %63 = vector.load %arg11[%c7, %c0_38] : memref<8x512xf32, #tpu.memory_space<vmem>>, vector<1x256xf32>
    %64 = arith.truncf %62 : vector<8x512xf32> to vector<8x512xbf16>
    %c0_39 = arith.constant 0 : index
    %c0_40 = arith.constant 0 : index
    %65 = vector.load %arg10[%c0_39, %c0_40] : memref<512x256xbf16, #tpu.memory_space<vmem>>, vector<512x256xbf16>
    %cst_41 = arith.constant dense<0.000000e+00> : vector<8x256xf32>
    %66 = tpu.matmul %64, %65, %cst_41 {dimension_numbers = #tpu.dot_dimension_numbers<[1], [0], [0], [1], [0, 0, 1, 1], [], []>} : vector<8x512xbf16>, vector<512x256xbf16>, vector<8x256xf32> -> vector<8x256xf32>
    %67 = vector.broadcast %63 : vector<1x256xf32> to vector<8x256xf32>
    %68 = arith.addf %66, %67 : vector<8x256xf32>
    %69 = arith.negf %68 : vector<8x256xf32>
    %70 = math.exp %69 : vector<8x256xf32>
    %cst_42 = arith.constant 1.000000e+00 : f32
    %71 = vector.broadcast %cst_42 : f32 to vector<8x256xf32>
    %72 = arith.addf %71, %70 : vector<8x256xf32>
    %73 = arith.divf %71, %72 : vector<8x256xf32>
    %c0_43 = arith.constant 0 : index
    %c0_44 = arith.constant 0 : index
    %74 = vector.load %arg12[%c0_43, %c0_44] : memref<8x256xf32, #tpu.memory_space<vmem>>, vector<8x256xf32>
    tpu.vector_store %arg12[%c0_43, %c0_44], %73 {strides = array<i32>} : memref<8x256xf32, #tpu.memory_space<vmem>>, vector<8x256xf32>,
    %c0_45 = arith.constant 0 : index
    %c0_46 = arith.constant 0 : index
    %75 = vector.load %arg13[%c0_45, %c0_46] : memref<8x256xf32, #tpu.memory_space<vmem>>, vector<8x256xf32>
    tpu.vector_store %arg13[%c0_45, %c0_46], %30 {strides = array<i32>} : memref<8x256xf32, #tpu.memory_space<vmem>>, vector<8x256xf32>,
    return
  }
  func.func @transform_0(%arg0: i32) -> (i32, i32) {
    %c0_i32 = arith.constant 0 : i32
    %c0_i32_0 = arith.constant 0 : i32
    return %arg0, %c0_i32 : i32, i32
  }
  func.func @transform_1(%arg0: i32) -> (i32, i32) {
    %c0_i32 = arith.constant 0 : i32
    %c0_i32_0 = arith.constant 0 : i32
    return %arg0, %c0_i32 : i32, i32
  }
  func.func @transform_2(%arg0: i32) -> (i32, i32) {
    %c0_i32 = arith.constant 0 : i32
    %c0_i32_0 = arith.constant 0 : i32
    %c0_i32_1 = arith.constant 0 : i32
    return %c0_i32, %c0_i32_0 : i32, i32
  }
  func.func @transform_3(%arg0: i32) -> (i32, i32) {
    %c0_i32 = arith.constant 0 : i32
    %c0_i32_0 = arith.constant 0 : i32
    %c0_i32_1 = arith.constant 0 : i32
    return %c0_i32, %c0_i32_0 : i32, i32
  }
  func.func @transform_4(%arg0: i32) -> (i32, i32) {
    %c0_i32 = arith.constant 0 : i32
    %c0_i32_0 = arith.constant 0 : i32
    %c0_i32_1 = arith.constant 0 : i32
    return %c0_i32, %c0_i32_0 : i32, i32
  }
  func.func @transform_5(%arg0: i32) -> (i32, i32) {
    %c0_i32 = arith.constant 0 : i32
    %c0_i32_0 = arith.constant 0 : i32
    %c0_i32_1 = arith.constant 0 : i32
    return %c0_i32, %c0_i32_0 : i32, i32
  }
  func.func @transform_6(%arg0: i32) -> (i32, i32) {
    %c0_i32 = arith.constant 0 : i32
    %c0_i32_0 = arith.constant 0 : i32
    %c0_i32_1 = arith.constant 0 : i32
    return %c0_i32, %c0_i32_0 : i32, i32
  }
  func.func @transform_7(%arg0: i32) -> (i32, i32) {
    %c0_i32 = arith.constant 0 : i32
    %c0_i32_0 = arith.constant 0 : i32
    %c0_i32_1 = arith.constant 0 : i32
    return %c0_i32, %c0_i32_0 : i32, i32
  }
  func.func @transform_8(%arg0: i32) -> (i32, i32) {
    %c0_i32 = arith.constant 0 : i32
    %c0_i32_0 = arith.constant 0 : i32
    %c0_i32_1 = arith.constant 0 : i32
    return %c0_i32, %c0_i32_0 : i32, i32
  }
  func.func @transform_9(%arg0: i32) -> (i32, i32) {
    %c0_i32 = arith.constant 0 : i32
    %c0_i32_0 = arith.constant 0 : i32
    %c0_i32_1 = arith.constant 0 : i32
    return %c0_i32, %c0_i32_0 : i32, i32
  }
  func.func @transform_10(%arg0: i32) -> (i32, i32) {
    %c0_i32 = arith.constant 0 : i32
    %c0_i32_0 = arith.constant 0 : i32
    %c0_i32_1 = arith.constant 0 : i32
    return %c0_i32, %c0_i32_0 : i32, i32
  }
  func.func @transform_11(%arg0: i32) -> (i32, i32) {
    %c0_i32 = arith.constant 0 : i32
    %c0_i32_0 = arith.constant 0 : i32
    return %arg0, %c0_i32 : i32, i32
  }
  func.func @transform_12(%arg0: i32) -> (i32, i32) {
    %c0_i32 = arith.constant 0 : i32
    %c0_i32_0 = arith.constant 0 : i32
    return %arg0, %c0_i32 : i32, i32
  }
}

</mosaic_0001>

<llo_original>
// kernel: tpu_custom_call.1
$region0: #{tpu_custom_call.1}
  #allocation0 [shape = 'u32[]', space=smem, size = 0x4, offset = 0x4, fixed_abs, tag = 'smem constant byte address 0x4 - core index']
  #allocation1 [shape = 'u32[144,128]{1,0:T(1,128)}', space=vmem, size = 0x12000, scoped, tag = 'internal scratch']
  %s0 = inlined_call_operand.hbm [shape: f32[8,256], index: 0, kind: input, shape index: {}]
  %s1 = inlined_call_operand.hbm [shape: f32[8,128], index: 1, kind: input, shape index: {}]
  %s2 = inlined_call_operand.hbm [shape: bf16[256,512], index: 2, kind: input, shape index: {}]
  %s3 = inlined_call_operand.hbm [shape: bf16[512,512], index: 3, kind: input, shape index: {}]
  %s4 = inlined_call_operand.hbm [shape: bf16[512,512], index: 4, kind: input, shape index: {}]
  %s5 = inlined_call_operand.hbm [shape: bf16[512,256], index: 5, kind: input, shape index: {}]
  %s6 = inlined_call_operand.hbm [shape: bf16[128,512], index: 6, kind: input, shape index: {}]
  %s7 = inlined_call_operand.hbm [shape: bf16[512,512], index: 7, kind: input, shape index: {}]
  %s8 = inlined_call_operand.hbm [shape: bf16[512,512], index: 8, kind: input, shape index: {}]
  %s9 = inlined_call_operand.hbm [shape: bf16[512,256], index: 9, kind: input, shape index: {}]
  %s10 = inlined_call_operand.hbm [shape: f32[8,512], index: 10, kind: input, shape index: {}]
  %s11 = inlined_call_operand.hbm [shape: f32[8,256], index: 11, kind: output, shape index: {0}]
  %s12 = inlined_call_operand.hbm [shape: f32[8,256], index: 12, kind: output, shape index: {1}]
  %13 = xla_tuple %s11, %s12
  %s14 = sld [smem:[#allocation0]]
  $region106: #{tpu_custom_call.1} parent=0
    _
  %s16 = ssub.s32 1, %s14
  %s17 = scalar_select 0, %s16, %s14
  $region1: #{tpu_custom_call.1} parent=0
    #allocation2 [shape = 'u8[8192]{0}', space=vmem, size = 0x2000, scoped, tag = 'input window, operand 0, single buffered']
    #allocation3 [shape = 's32[1]{0}', space=sflag, size = 0x4, scoped, tag = 'scoped memory for tpu_custom_call.1']
    #allocation4 [shape = 's32[1]{0}', space=sflag, size = 0x4, scoped, tag = 'scoped memory for tpu_custom_call.1']
    #allocation5 [shape = 'u8[4096]{0}', space=vmem, size = 0x1000, scoped, tag = 'input window, operand 1, single buffered']
    #allocation6 [shape = 's32[1]{0}', space=sflag, size = 0x4, scoped, tag = 'scoped memory for tpu_custom_call.1']
    #allocation7 [shape = 'u8[262144]{0}', space=vmem, size = 0x40000, scoped, tag = 'input window, operand 2, single buffered']
    #allocation8 [shape = 'u8[524288]{0}', space=vmem, size = 0x80000, scoped, tag = 'input window, operand 3, single buffered']
    #allocation9 [shape = 's32[1]{0}', space=sflag, size = 0x4, scoped, tag = 'scoped memory for tpu_custom_call.1']
    #allocation10 [shape = 'u8[524288]{0}', space=vmem, size = 0x80000, scoped, tag = 'input window, operand 4, single buffered']
    #allocation11 [shape = 'u8[262144]{0}', space=vmem, size = 0x40000, scoped, tag = 'input window, operand 5, single buffered']
    #allocation12 [shape = 's32[1]{0}', space=sflag, size = 0x4, scoped, tag = 'scoped memory for tpu_custom_call.1']
    #allocation13 [shape = 'u8[131072]{0}', space=vmem, size = 0x20000, scoped, tag = 'input window, operand 6, single buffered']
    #allocation14 [shape = 'u8[524288]{0}', space=vmem, size = 0x80000, scoped, tag = 'input window, operand 7, single buffered']
    #allocation15 [shape = 's32[1]{0}', space=sflag, size = 0x4, scoped, tag = 'scoped memory for tpu_custom_call.1']
    #allocation16 [shape = 'u8[524288]{0}', space=vmem, size = 0x80000, scoped, tag = 'input window, operand 8, single buffered']
    #allocation17 [shape = 'u8[262144]{0}', space=vmem, size = 0x40000, scoped, tag = 'input window, operand 9, single buffered']
    #allocation18 [shape = 's32[1]{0}', space=sflag, size = 0x4, scoped, tag = 'scoped memory for tpu_custom_call.1']
    #allocation19 [shape = 'u8[16384]{0}', space=vmem, size = 0x4000, scoped, tag = 'input window, operand 10, single buffered']
    #allocation20 [shape = 'u8[8192]{0}', space=vmem, size = 0x2000, scoped, tag = 'output window, operand 0, single buffered']
    #allocation21 [shape = 'u8[8192]{0}', space=vmem, size = 0x2000, scoped, tag = 'output window, operand 1, single buffered']
    #allocation22 [shape = 's32[1]{0}', space=sflag, size = 0x4, scoped, tag = 'scoped memory for tpu_custom_call.1']
    %18 = vsyncpa [#allocation3], 0
    %19 = vsyncpa [#allocation6], 0
    %20 = vsyncpa [#allocation9], 0
    %21 = vsyncpa [#allocation12], 0
    %22 = vsyncpa [#allocation15], 0
    %23 = vsyncpa [#allocation18], 0
    %24 = vsyncpa [#allocation4], 0
    %25 = vsyncpa [#allocation22], 0
    // Predicated region
    $region2: #{tpu_custom_call.1} parent=1 // pred_check
      _
    $region3: #{tpu_custom_call.1} parent=1 // pred_check_branch
      %27 = sbr.rel (0) target = $region5
    $region4: #{tpu_custom_call.1} parent=1 // pred_region
      %s29 = ssub.s32 256, 256
      %30 = vsyncadd [#allocation3], %s29
      %s32 = sshll.u32 [#allocation2], 4
      %s33 = int_to_ptr.vmem [resolvable:$true] %s32
      %35 = dma.hbm_to_vmem [thread:$0]  %s0, 256, %s33, [#allocation3]
    $region5: #{tpu_custom_call.1} parent=1 // pred_fallthru
      _
    // Predicated region
    $region6: #{tpu_custom_call.1} parent=1 // pred_check
      _
    $region7: #{tpu_custom_call.1} parent=1 // pred_check_branch
      %37 = sbr.rel (0) target = $region9
    $region8: #{tpu_custom_call.1} parent=1 // pred_region
      %s39 = ssub.s32 128, 128
      %40 = vsyncadd [#allocation6], %s39
      %s42 = sshll.u32 [#allocation5], 4
      %s43 = int_to_ptr.vmem [resolvable:$true] %s42
      %45 = dma.hbm_to_vmem [thread:$0]  %s1, 128, %s43, [#allocation6]
    $region9: #{tpu_custom_call.1} parent=1 // pred_fallthru
      _
    // Predicated region
    $region10: #{tpu_custom_call.1} parent=1 // pred_check
      _
    $region11: #{tpu_custom_call.1} parent=1 // pred_check_branch
      %47 = sbr.rel (0) target = $region13
    $region12: #{tpu_custom_call.1} parent=1 // pred_region
      %s49 = ssub.s32 8192, 8192
      %50 = vsyncadd [#allocation6], %s49
      %s51 = sshll.u32 [#allocation7], 4
      %s52 = int_to_ptr.vmem [resolvable:$true] %s51
      %57 = dma.hbm_to_vmem [thread:$0]  %s2, 8192, %s52, [#allocation6], 256, 256, 16
    $region13: #{tpu_custom_call.1} parent=1 // pred_fallthru
      _
    // Predicated region
    $region14: #{tpu_custom_call.1} parent=1 // pred_check
      _
    $region15: #{tpu_custom_call.1} parent=1 // pred_check_branch
      %59 = sbr.rel (0) target = $region17
    $region16: #{tpu_custom_call.1} parent=1 // pred_region
      %s61 = ssub.s32 16384, 16384
      %62 = vsyncadd [#allocation9], %s61
      %s63 = sshll.u32 [#allocation8], 4
      %s64 = int_to_ptr.vmem [resolvable:$true] %s63
      %69 = dma.hbm_to_vmem [thread:$0]  %s3, 16384, %s64, [#allocation9], 256, 256, 16
    $region17: #{tpu_custom_call.1} parent=1 // pred_fallthru
      _
    // Predicated region
    $region18: #{tpu_custom_call.1} parent=1 // pred_check
      _
    $region19: #{tpu_custom_call.1} parent=1 // pred_check_branch
      %71 = sbr.rel (0) target = $region21
    $region20: #{tpu_custom_call.1} parent=1 // pred_region
      %s73 = ssub.s32 16384, 16384
      %74 = vsyncadd [#allocation9], %s73
      %s75 = sshll.u32 [#allocation10], 4
      %s76 = int_to_ptr.vmem [resolvable:$true] %s75
      %81 = dma.hbm_to_vmem [thread:$0]  %s4, 16384, %s76, [#allocation9], 256, 256, 16
    $region21: #{tpu_custom_call.1} parent=1 // pred_fallthru
      _
    // Predicated region
    $region22: #{tpu_custom_call.1} parent=1 // pred_check
      _
    $region23: #{tpu_custom_call.1} parent=1 // pred_check_branch
      %83 = sbr.rel (0) target = $region25
    $region24: #{tpu_custom_call.1} parent=1 // pred_region
      %s85 = ssub.s32 8192, 8192
      %86 = vsyncadd [#allocation12], %s85
      %s87 = sshll.u32 [#allocation11], 4
      %s88 = int_to_ptr.vmem [resolvable:$true] %s87
      %93 = dma.hbm_to_vmem [thread:$0]  %s5, 8192, %s88, [#allocation12], 128, 128, 8
    $region25: #{tpu_custom_call.1} parent=1 // pred_fallthru
      _
    // Predicated region
    $region26: #{tpu_custom_call.1} parent=1 // pred_check
      _
    $region27: #{tpu_custom_call.1} parent=1 // pred_check_branch
      %95 = sbr.rel (0) target = $region29
    $region28: #{tpu_custom_call.1} parent=1 // pred_region
      %s97 = ssub.s32 4096, 4096
      %98 = vsyncadd [#allocation12], %s97
      %s99 = sshll.u32 [#allocation13], 4
      %s100 = int_to_ptr.vmem [resolvable:$true] %s99
      %105 = dma.hbm_to_vmem [thread:$0]  %s6, 4096, %s100, [#allocation12], 256, 256, 16
    $region29: #{tpu_custom_call.1} parent=1 // pred_fallthru
      _
    // Predicated region
    $region30: #{tpu_custom_call.1} parent=1 // pred_check
      _
    $region31: #{tpu_custom_call.1} parent=1 // pred_check_branch
      %107 = sbr.rel (0) target = $region33
    $region32: #{tpu_custom_call.1} parent=1 // pred_region
      %s109 = ssub.s32 16384, 16384
      %110 = vsyncadd [#allocation15], %s109
      %s111 = sshll.u32 [#allocation14], 4
      %s112 = int_to_ptr.vmem [resolvable:$true] %s111
      %117 = dma.hbm_to_vmem [thread:$0]  %s7, 16384, %s112, [#allocation15], 256, 256, 16
    $region33: #{tpu_custom_call.1} parent=1 // pred_fallthru
      _
    // Predicated region
    $region34: #{tpu_custom_call.1} parent=1 // pred_check
      _
    $region35: #{tpu_custom_call.1} parent=1 // pred_check_branch
      %119 = sbr.rel (0) target = $region37
    $region36: #{tpu_custom_call.1} parent=1 // pred_region
      %s121 = ssub.s32 16384, 16384
      %122 = vsyncadd [#allocation15], %s121
      %s123 = sshll.u32 [#allocation16], 4
      %s124 = int_to_ptr.vmem [resolvable:$true] %s123
      %129 = dma.hbm_to_vmem [thread:$0]  %s8, 16384, %s124, [#allocation15], 256, 256, 16
    $region37: #{tpu_custom_call.1} parent=1 // pred_fallthru
      _
    // Predicated region
    $region38: #{tpu_custom_call.1} parent=1 // pred_check
      _
    $region39: #{tpu_custom_call.1} parent=1 // pred_check_branch
      %131 = sbr.rel (0) target = $region41
    $region40: #{tpu_custom_call.1} parent=1 // pred_region
      %s133 = ssub.s32 8192, 8192
      %134 = vsyncadd [#allocation18], %s133
      %s135 = sshll.u32 [#allocation17], 4
      %s136 = int_to_ptr.vmem [resolvable:$true] %s135
      %141 = dma.hbm_to_vmem [thread:$0]  %s9, 8192, %s136, [#allocation18], 128, 128, 8
    $region41: #{tpu_custom_call.1} parent=1 // pred_fallthru
      _
    // Predicated region
    $region42: #{tpu_custom_call.1} parent=1 // pred_check
      _
    $region43: #{tpu_custom_call.1} parent=1 // pred_check_branch
      %143 = sbr.rel (0) target = $region45
    $region44: #{tpu_custom_call.1} parent=1 // pred_region
      %s145 = ssub.s32 512, 512
      %146 = vsyncadd [#allocation18], %s145
      %s148 = sshll.u32 [#allocation19], 4
      %s149 = int_to_ptr.vmem [resolvable:$true] %s148
      %151 = dma.hbm_to_vmem [thread:$0]  %s10, 512, %s149, [#allocation18]
    $region45: #{tpu_custom_call.1} parent=1 // pred_fallthru
      _
    // Predicated region
    $region46: #{tpu_custom_call.1} parent=1 // pred_check
      _
    $region47: #{tpu_custom_call.1} parent=1 // pred_check_branch
      %153 = sbr.rel (0) target = $region49
    $region48: #{tpu_custom_call.1} parent=1 // pred_region
      %154 = dma.done [#allocation3], 256
    $region49: #{tpu_custom_call.1} parent=1 // pred_fallthru
      _
    // Predicated region
    $region50: #{tpu_custom_call.1} parent=1 // pred_check
      _
    $region51: #{tpu_custom_call.1} parent=1 // pred_check_branch
      %156 = sbr.rel (0) target = $region53
    $region52: #{tpu_custom_call.1} parent=1 // pred_region
      %157 = dma.done [#allocation6], 128
    $region53: #{tpu_custom_call.1} parent=1 // pred_fallthru
      _
    // Predicated region
    $region54: #{tpu_custom_call.1} parent=1 // pred_check
      _
    $region55: #{tpu_custom_call.1} parent=1 // pred_check_branch
      %159 = sbr.rel (0) target = $region57
    $region56: #{tpu_custom_call.1} parent=1 // pred_region
      %160 = dma.done [#allocation6], 8192
    $region57: #{tpu_custom_call.1} parent=1 // pred_fallthru
      _
    // Predicated region
    $region58: #{tpu_custom_call.1} parent=1 // pred_check
      _
    $region59: #{tpu_custom_call.1} parent=1 // pred_check_branch
      %162 = sbr.rel (0) target = $region61
    $region60: #{tpu_custom_call.1} parent=1 // pred_region
      %163 = dma.done [#allocation9], 16384
    $region61: #{tpu_custom_call.1} parent=1 // pred_fallthru
      _
    // Predicated region
    $region62: #{tpu_custom_call.1} parent=1 // pred_check
      _
    $region63: #{tpu_custom_call.1} parent=1 // pred_check_branch
      %165 = sbr.rel (0) target = $region65
    $region64: #{tpu_custom_call.1} parent=1 // pred_region
      %166 = dma.done [#allocation9], 16384
    $region65: #{tpu_custom_call.1} parent=1 // pred_fallthru
      _
    // Predicated region
    $region66: #{tpu_custom_call.1} parent=1 // pred_check
      _
    $region67: #{tpu_custom_call.1} parent=1 // pred_check_branch
      %168 = sbr.rel (0) target = $region69
    $region68: #{tpu_custom_call.1} parent=1 // pred_region
      %169 = dma.done [#allocation12], 8192
    $region69: #{tpu_custom_call.1} parent=1 // pred_fallthru
      _
    // Predicated region
    $region70: #{tpu_custom_call.1} parent=1 // pred_check
      _
    $region71: #{tpu_custom_call.1} parent=1 // pred_check_branch
      %171 = sbr.rel (0) target = $region73
    $region72: #{tpu_custom_call.1} parent=1 // pred_region
      %172 = dma.done [#allocation12], 4096
    $region73: #{tpu_custom_call.1} parent=1 // pred_fallthru
      _
    // Predicated region
    $region74: #{tpu_custom_call.1} parent=1 // pred_check
      _
    $region75: #{tpu_custom_call.1} parent=1 // pred_check_branch
      %174 = sbr.rel (0) target = $region77
    $region76: #{tpu_custom_call.1} parent=1 // pred_region
      %175 = dma.done [#allocation15], 16384
    $region77: #{tpu_custom_call.1} parent=1 // pred_fallthru
      _
    // Predicated region
    $region78: #{tpu_custom_call.1} parent=1 // pred_check
      _
    $region79: #{tpu_custom_call.1} parent=1 // pred_check_branch
      %177 = sbr.rel (0) target = $region81
    $region80: #{tpu_custom_call.1} parent=1 // pred_region
      %178 = dma.done [#allocation15], 16384
    $region81: #{tpu_custom_call.1} parent=1 // pred_fallthru
      _
    // Predicated region
    $region82: #{tpu_custom_call.1} parent=1 // pred_check
      _
    $region83: #{tpu_custom_call.1} parent=1 // pred_check_branch
      %180 = sbr.rel (0) target = $region85
    $region84: #{tpu_custom_call.1} parent=1 // pred_region
      %181 = dma.done [#allocation18], 8192
    $region85: #{tpu_custom_call.1} parent=1 // pred_fallthru
      _
    // Predicated region
    $region86: #{tpu_custom_call.1} parent=1 // pred_check
      _
    $region87: #{tpu_custom_call.1} parent=1 // pred_check_branch
      %183 = sbr.rel (0) target = $region89
    $region88: #{tpu_custom_call.1} parent=1 // pred_region
      %184 = dma.done [#allocation18], 512
    $region89: #{tpu_custom_call.1} parent=1 // pred_fallthru
      _
    %v186 = vld [vmem:[#allocation2] sm:$0xff]
    %v187 = vld [vmem:[#allocation2 + $0x8] sm:$0xff]
    %v188 = vld [vmem:[#allocation19] ss:$8 sm:$0xf]
    %v189 = vpack.c.bf16 %v186, %v186
    %v190 = vpack.c.bf16 %v187, %v187
    %v191 = vld [vmem:[#allocation7] sm:$0xff]
    %v192 = vld [vmem:[#allocation7 + $0x8] sm:$0xff]
    %v193 = vld [vmem:[#allocation7 + $0x10] sm:$0xff]
    %v194 = vld [vmem:[#allocation7 + $0x18] sm:$0xff]
    %v195 = vld [vmem:[#allocation7 + $0x20] sm:$0xff]
    %v196 = vld [vmem:[#allocation7 + $0x28] sm:$0xff]
    %v197 = vld [vmem:[#allocation7 + $0x30] sm:$0xff]
    %v198 = vld [vmem:[#allocation7 + $0x38] sm:$0xff]
    %v199 = vld [vmem:[#allocation7 + $0x40] sm:$0xff]
    %v200 = vld [vmem:[#allocation7 + $0x48] sm:$0xff]
    %v201 = vld [vmem:[#allocation7 + $0x50] sm:$0xff]
    %v202 = vld [vmem:[#allocation7 + $0x58] sm:$0xff]
    %v203 = vld [vmem:[#allocation7 + $0x60] sm:$0xff]
    %v204 = vld [vmem:[#allocation7 + $0x68] sm:$0xff]
    %v205 = vld [vmem:[#allocation7 + $0x70] sm:$0xff]
    %v206 = vld [vmem:[#allocation7 + $0x78] sm:$0xff]
    %v207 = vld [vmem:[#allocation7 + $0x80] sm:$0xff]
    %v208 = vld [vmem:[#allocation7 + $0x88] sm:$0xff]
    %v209 = vld [vmem:[#allocation7 + $0x90] sm:$0xff]
    %v210 = vld [vmem:[#allocation7 + $0x98] sm:$0xff]
    %v211 = vld [vmem:[#allocation7 + $0xa0] sm:$0xff]
    %v212 = vld [vmem:[#allocation7 + $0xa8] sm:$0xff]
    %v213 = vld [vmem:[#allocation7 + $0xb0] sm:$0xff]
    %v214 = vld [vmem:[#allocation7 + $0xb8] sm:$0xff]
    %v215 = vld [vmem:[#allocation7 + $0xc0] sm:$0xff]
    %v216 = vld [vmem:[#allocation7 + $0xc8] sm:$0xff]
    %v217 = vld [vmem:[#allocation7 + $0xd0] sm:$0xff]
    %v218 = vld [vmem:[#allocation7 + $0xd8] sm:$0xff]
    %v219 = vld [vmem:[#allocation7 + $0xe0] sm:$0xff]
    %v220 = vld [vmem:[#allocation7 + $0xe8] sm:$0xff]
    %v221 = vld [vmem:[#allocation7 + $0xf0] sm:$0xff]
    %v222 = vld [vmem:[#allocation7 + $0xf8] sm:$0xff]
    %v223 = vld [vmem:[#allocation7 + $0x100] sm:$0xff]
    %v224 = vld [vmem:[#allocation7 + $0x108] sm:$0xff]
    %v225 = vld [vmem:[#allocation7 + $0x110] sm:$0xff]
    %v226 = vld [vmem:[#allocation7 + $0x118] sm:$0xff]
    %v227 = vld [vmem:[#allocation7 + $0x120] sm:$0xff]
    %v228 = vld [vmem:[#allocation7 + $0x128] sm:$0xff]
    %v229 = vld [vmem:[#allocation7 + $0x130] sm:$0xff]
    %v230 = vld [vmem:[#allocation7 + $0x138] sm:$0xff]
    %v231 = vld [vmem:[#allocation7 + $0x140] sm:$0xff]
    %v232 = vld [vmem:[#allocation7 + $0x148] sm:$0xff]
    %v233 = vld [vmem:[#allocation7 + $0x150] sm:$0xff]
    %v234 = vld [vmem:[#allocation7 + $0x158] sm:$0xff]
    %v235 = vld [vmem:[#allocation7 + $0x160] sm:$0xff]
    %v236 = vld [vmem:[#allocation7 + $0x168] sm:$0xff]
    %v237 = vld [vmem:[#allocation7 + $0x170] sm:$0xff]
    %v238 = vld [vmem:[#allocation7 + $0x178] sm:$0xff]
    %v239 = vld [vmem:[#allocation7 + $0x180] sm:$0xff]
    %v240 = vld [vmem:[#allocation7 + $0x188] sm:$0xff]
    %v241 = vld [vmem:[#allocation7 + $0x190] sm:$0xff]
    %v242 = vld [vmem:[#allocation7 + $0x198] sm:$0xff]
    %v243 = vld [vmem:[#allocation7 + $0x1a0] sm:$0xff]
    %v244 = vld [vmem:[#allocation7 + $0x1a8] sm:$0xff]
    %v245 = vld [vmem:[#allocation7 + $0x1b0] sm:$0xff]
    %v246 = vld [vmem:[#allocation7 + $0x1b8] sm:$0xff]
    %v247 = vld [vmem:[#allocation7 + $0x1c0] sm:$0xff]
    %v248 = vld [vmem:[#allocation7 + $0x1c8] sm:$0xff]
    %v249 = vld [vmem:[#allocation7 + $0x1d0] sm:$0xff]
    %v250 = vld [vmem:[#allocation7 + $0x1d8] sm:$0xff]
    %v251 = vld [vmem:[#allocation7 + $0x1e0] sm:$0xff]
    %v252 = vld [vmem:[#allocation7 + $0x1e8] sm:$0xff]
    %v253 = vld [vmem:[#allocation7 + $0x1f0] sm:$0xff]
    %v254 = vld [vmem:[#allocation7 + $0x1f8] sm:$0xff]
    %v256 = vlaneseq
    %v257 = vshrl.u32 %v256, 7
    %v258 = vsub.s32 0, %v257
    %v259 = vrot.slane %v188, %v258
    %v260 = vlaneseq
    %v261 = vshrl.u32 %v260, 7
    %v262 = vsub.s32 1, %v261
    %v263 = vrot.slane %v188, %v262
    %v264 = vlaneseq
    %v265 = vshrl.u32 %v264, 7
    %v266 = vsub.s32 2, %v265
    %v267 = vrot.slane %v188, %v266
    %v268 = vlaneseq
    %v269 = vshrl.u32 %v268, 7
    %v270 = vsub.s32 3, %v269
    %v271 = vrot.slane %v188, %v270
    %v340 = vunpack.c.l.b16 %v191
    %v341 = vunpack.c.h.b16 %v191
    %v342 = vunpack.c.l.b16 %v192
    %v343 = vunpack.c.h.b16 %v192
    %v344 = vunpack.c.l.b16 %v193
    %v345 = vunpack.c.h.b16 %v193
    %v346 = vunpack.c.l.b16 %v194
    %v347 = vunpack.c.h.b16 %v194
    %v348 = vunpack.c.l.b16 %v195
    %v349 = vunpack.c.h.b16 %v195
    %v350 = vunpack.c.l.b16 %v196
    %v351 = vunpack.c.h.b16 %v196
    %v352 = vunpack.c.l.b16 %v197
    %v353 = vunpack.c.h.b16 %v197
    %v354 = vunpack.c.l.b16 %v198
    %v355 = vunpack.c.h.b16 %v198
    %v356 = vunpack.c.l.b16 %v199
    %v357 = vunpack.c.h.b16 %v199
    %v358 = vunpack.c.l.b16 %v200
    %v359 = vunpack.c.h.b16 %v200
    %v360 = vunpack.c.l.b16 %v201
    %v361 = vunpack.c.h.b16 %v201
    %v362 = vunpack.c.l.b16 %v202
    %v363 = vunpack.c.h.b16 %v202
    %v364 = vunpack.c.l.b16 %v203
    %v365 = vunpack.c.h.b16 %v203
    %v366 = vunpack.c.l.b16 %v204
    %v367 = vunpack.c.h.b16 %v204
    %v368 = vunpack.c.l.b16 %v205
    %v369 = vunpack.c.h.b16 %v205
    %v370 = vunpack.c.l.b16 %v206
    %v371 = vunpack.c.h.b16 %v206
    %v372 = vunpack.c.l.b16 %v207
    %v373 = vunpack.c.h.b16 %v207
    %v374 = vunpack.c.l.b16 %v208
    %v375 = vunpack.c.h.b16 %v208
    %v376 = vunpack.c.l.b16 %v209
    %v377 = vunpack.c.h.b16 %v209
    %v378 = vunpack.c.l.b16 %v210
    %v379 = vunpack.c.h.b16 %v210
    %v380 = vunpack.c.l.b16 %v211
    %v381 = vunpack.c.h.b16 %v211
    %v382 = vunpack.c.l.b16 %v212
    %v383 = vunpack.c.h.b16 %v212
    %v384 = vunpack.c.l.b16 %v213
    %v385 = vunpack.c.h.b16 %v213
    %v386 = vunpack.c.l.b16 %v214
    %v387 = vunpack.c.h.b16 %v214
    %v388 = vunpack.c.l.b16 %v215
    %v389 = vunpack.c.h.b16 %v215
    %v390 = vunpack.c.l.b16 %v216
    %v391 = vunpack.c.h.b16 %v216
    %v392 = vunpack.c.l.b16 %v217
    %v393 = vunpack.c.h.b16 %v217
    %v394 = vunpack.c.l.b16 %v218
    %v395 = vunpack.c.h.b16 %v218
    %v396 = vunpack.c.l.b16 %v219
    %v397 = vunpack.c.h.b16 %v219
    %v398 = vunpack.c.l.b16 %v220
    %v399 = vunpack.c.h.b16 %v220
    %v400 = vunpack.c.l.b16 %v221
    %v401 = vunpack.c.h.b16 %v221
    %v402 = vunpack.c.l.b16 %v222
    %v403 = vunpack.c.h.b16 %v222
    %v404 = vunpack.c.l.b16 %v223
    %v405 = vunpack.c.h.b16 %v223
    %v406 = vunpack.c.l.b16 %v224
    %v407 = vunpack.c.h.b16 %v224
    %v408 = vunpack.c.l.b16 %v225
    %v409 = vunpack.c.h.b16 %v225
    %v410 = vunpack.c.l.b16 %v226
    %v411 = vunpack.c.h.b16 %v226
    %v412 = vunpack.c.l.b16 %v227
    %v413 = vunpack.c.h.b16 %v227
    %v414 = vunpack.c.l.b16 %v228
    %v415 = vunpack.c.h.b16 %v228
    %v416 = vunpack.c.l.b16 %v229
    %v417 = vunpack.c.h.b16 %v229
    %v418 = vunpack.c.l.b16 %v230
    %v419 = vunpack.c.h.b16 %v230
    %v420 = vunpack.c.l.b16 %v231
    %v421 = vunpack.c.h.b16 %v231
    %v422 = vunpack.c.l.b16 %v232
    %v423 = vunpack.c.h.b16 %v232
    %v424 = vunpack.c.l.b16 %v233
    %v425 = vunpack.c.h.b16 %v233
    %v426 = vunpack.c.l.b16 %v234
    %v427 = vunpack.c.h.b16 %v234
    %v428 = vunpack.c.l.b16 %v235
    %v429 = vunpack.c.h.b16 %v235
    %v430 = vunpack.c.l.b16 %v236
    %v431 = vunpack.c.h.b16 %v236
    %v432 = vunpack.c.l.b16 %v237
    %v433 = vunpack.c.h.b16 %v237
    %v434 = vunpack.c.l.b16 %v238
    %v435 = vunpack.c.h.b16 %v238
    %v436 = vunpack.c.l.b16 %v239
    %v437 = vunpack.c.h.b16 %v239
    %v438 = vunpack.c.l.b16 %v240
    %v439 = vunpack.c.h.b16 %v240
    %v440 = vunpack.c.l.b16 %v241
    %v441 = vunpack.c.h.b16 %v241
    %v442 = vunpack.c.l.b16 %v242
    %v443 = vunpack.c.h.b16 %v242
    %v444 = vunpack.c.l.b16 %v243
    %v445 = vunpack.c.h.b16 %v243
    %v446 = vunpack.c.l.b16 %v244
    %v447 = vunpack.c.h.b16 %v244
    %v448 = vunpack.c.l.b16 %v245
    %v449 = vunpack.c.h.b16 %v245
    %v450 = vunpack.c.l.b16 %v246
    %v451 = vunpack.c.h.b16 %v246
    %v452 = vunpack.c.l.b16 %v247
    %v453 = vunpack.c.h.b16 %v247
    %v454 = vunpack.c.l.b16 %v248
    %v455 = vunpack.c.h.b16 %v248
    %v456 = vunpack.c.l.b16 %v249
    %v457 = vunpack.c.h.b16 %v249
    %v458 = vunpack.c.l.b16 %v250
    %v459 = vunpack.c.h.b16 %v250
    %v460 = vunpack.c.l.b16 %v251
    %v461 = vunpack.c.h.b16 %v251
    %v462 = vunpack.c.l.b16 %v252
    %v463 = vunpack.c.h.b16 %v252
    %v464 = vunpack.c.l.b16 %v253
    %v465 = vunpack.c.h.b16 %v253
    %v466 = vunpack.c.l.b16 %v254
    %v467 = vunpack.c.h.b16 %v254
    %v468 = vpack.c.b16 %v344, %v340
    %v469 = vpack.c.b16 %v345, %v341
    %v470 = vpack.c.b16 %v346, %v342
    %v471 = vpack.c.b16 %v347, %v343
    %v472 = vpack.c.b16 %v352, %v348
    %v473 = vpack.c.b16 %v353, %v349
    %v474 = vpack.c.b16 %v354, %v350
    %v475 = vpack.c.b16 %v355, %v351
    %v476 = vpack.c.b16 %v360, %v356
    %v477 = vpack.c.b16 %v361, %v357
    %v478 = vpack.c.b16 %v362, %v358
    %v479 = vpack.c.b16 %v363, %v359
    %v480 = vpack.c.b16 %v368, %v364
    %v481 = vpack.c.b16 %v369, %v365
    %v482 = vpack.c.b16 %v370, %v366
    %v483 = vpack.c.b16 %v371, %v367
    %v484 = vpack.c.b16 %v376, %v372
    %v485 = vpack.c.b16 %v377, %v373
    %v486 = vpack.c.b16 %v378, %v374
    %v487 = vpack.c.b16 %v379, %v375
    %v488 = vpack.c.b16 %v384, %v380
    %v489 = vpack.c.b16 %v385, %v381
    %v490 = vpack.c.b16 %v386, %v382
    %v491 = vpack.c.b16 %v387, %v383
    %v492 = vpack.c.b16 %v392, %v388
    %v493 = vpack.c.b16 %v393, %v389
    %v494 = vpack.c.b16 %v394, %v390
    %v495 = vpack.c.b16 %v395, %v391
    %v496 = vpack.c.b16 %v400, %v396
    %v497 = vpack.c.b16 %v401, %v397
    %v498 = vpack.c.b16 %v402, %v398
    %v499 = vpack.c.b16 %v403, %v399
    %v500 = vpack.c.b16 %v408, %v404
    %v501 = vpack.c.b16 %v409, %v405
    %v502 = vpack.c.b16 %v410, %v406
    %v503 = vpack.c.b16 %v411, %v407
    %v504 = vpack.c.b16 %v416, %v412
    %v505 = vpack.c.b16 %v417, %v413
    %v506 = vpack.c.b16 %v418, %v414
    %v507 = vpack.c.b16 %v419, %v415
    %v508 = vpack.c.b16 %v424, %v420
    %v509 = vpack.c.b16 %v425, %v421
    %v510 = vpack.c.b16 %v426, %v422
    %v511 = vpack.c.b16 %v427, %v423
    %v512 = vpack.c.b16 %v432, %v428
    %v513 = vpack.c.b16 %v433, %v429
    %v514 = vpack.c.b16 %v434, %v430
    %v515 = vpack.c.b16 %v435, %v431
    %v516 = vpack.c.b16 %v440, %v436
    %v517 = vpack.c.b16 %v441, %v437
    %v518 = vpack.c.b16 %v442, %v438
    %v519 = vpack.c.b16 %v443, %v439
    %v520 = vpack.c.b16 %v448, %v444
    %v521 = vpack.c.b16 %v449, %v445
    %v522 = vpack.c.b16 %v450, %v446
    %v523 = vpack.c.b16 %v451, %v447
    %v524 = vpack.c.b16 %v456, %v452
    %v525 = vpack.c.b16 %v457, %v453
    %v526 = vpack.c.b16 %v458, %v454
    %v527 = vpack.c.b16 %v459, %v455
    %v528 = vpack.c.b16 %v464, %v460
    %v529 = vpack.c.b16 %v465, %v461
    %v530 = vpack.c.b16 %v466, %v462
    %v531 = vpack.c.b16 %v467, %v463
    %596 = vmatprep.subr.bf16.mxu0 %v497
    %597 = vmatpush1.bf16.msra.mxu0 %v496
    %598 = vmatprep.subr.bf16.mxu0 %v493
    %599 = vmatpush1.bf16.msra.mxu0 %v492
    %600 = vmatprep.subr.bf16.mxu0 %v489
    %601 = vmatpush1.bf16.msra.mxu0 %v488
    %602 = vmatprep.subr.bf16.mxu0 %v485
    %603 = vmatpush1.bf16.msra.mxu0 %v484
    %604 = vmatprep.subr.bf16.mxu0 %v481
    %605 = vmatpush1.bf16.msra.mxu0 %v480
    %606 = vmatprep.subr.bf16.mxu0 %v477
    %607 = vmatpush1.bf16.msra.mxu0 %v476
    %608 = vmatprep.subr.bf16.mxu0 %v473
    %609 = vmatpush1.bf16.msra.mxu0 %v472
    %610 = vmatprep.subr.bf16.mxu0 %v469
    %611 = vmatpush1.bf16.msra.mxu0 %v468
    %612 = vmatprep.subr.bf16.mxu0 %v529
    %613 = vmatpush2.bf16.msra.mxu0 %v528
    %614 = vmatprep.subr.bf16.mxu0 %v525
    %615 = vmatpush2.bf16.msra.mxu0 %v524
    %616 = vmatprep.subr.bf16.mxu0 %v521
    %617 = vmatpush2.bf16.msra.mxu0 %v520
    %618 = vmatprep.subr.bf16.mxu0 %v517
    %619 = vmatpush2.bf16.msra.mxu0 %v516
    %620 = vmatprep.subr.bf16.mxu0 %v513
    %621 = vmatpush2.bf16.msra.mxu0 %v512
    %622 = vmatprep.subr.bf16.mxu0 %v509
    %623 = vmatpush2.bf16.msra.mxu0 %v508
    %624 = vmatprep.subr.bf16.mxu0 %v505
    %625 = vmatpush2.bf16.msra.mxu0 %v504
    %626 = vmatprep.subr.bf16.mxu0 %v501
    %627 = vmatpush2.bf16.msra.mxu0 %v500
    %628 = vmatprep.mubr.bf16.mxu0 %v190
    %629 = vmatmul.mubr.bf16.gmra.mxu0 %v189
    %v630 = vpop.f32.mrf.mxu0
    %v631 = vadd.f32 %v259, %v630
    %v632 = vpop.f32.mrf.mxu0
    %v633 = vadd.f32 %v263, %v632
    %v634 = vpop.f32.mrf.mxu0
    %v635 = vpop.f32.mrf.mxu0
    %636 = vdwg.mxu0
    %637 = vmatprep.subr.bf16.mxu0 %v499
    %638 = vmatpush1.bf16.msra.mxu0 %v498
    %639 = vmatprep.subr.bf16.mxu0 %v495
    %640 = vmatpush1.bf16.msra.mxu0 %v494
    %641 = vmatprep.subr.bf16.mxu0 %v491
    %642 = vmatpush1.bf16.msra.mxu0 %v490
    %643 = vmatprep.subr.bf16.mxu0 %v487
    %644 = vmatpush1.bf16.msra.mxu0 %v486
    %645 = vmatprep.subr.bf16.mxu0 %v483
    %646 = vmatpush1.bf16.msra.mxu0 %v482
    %647 = vmatprep.subr.bf16.mxu0 %v479
    %648 = vmatpush1.bf16.msra.mxu0 %v478
    %649 = vmatprep.subr.bf16.mxu0 %v475
    %650 = vmatpush1.bf16.msra.mxu0 %v474
    %651 = vmatprep.subr.bf16.mxu0 %v471
    %652 = vmatpush1.bf16.msra.mxu0 %v470
    %653 = vmatprep.subr.bf16.mxu0 %v531
    %654 = vmatpush2.bf16.msra.mxu0 %v530
    %655 = vmatprep.subr.bf16.mxu0 %v527
    %656 = vmatpush2.bf16.msra.mxu0 %v526
    %657 = vmatprep.subr.bf16.mxu0 %v523
    %658 = vmatpush2.bf16.msra.mxu0 %v522
    %659 = vmatprep.subr.bf16.mxu0 %v519
    %660 = vmatpush2.bf16.msra.mxu0 %v518
    %661 = vmatprep.subr.bf16.mxu0 %v515
    %662 = vmatpush2.bf16.msra.mxu0 %v514
    %663 = vmatprep.subr.bf16.mxu0 %v511
    %664 = vmatpush2.bf16.msra.mxu0 %v510
    %665 = vmatprep.subr.bf16.mxu0 %v507
    %666 = vmatpush2.bf16.msra.mxu0 %v506
    %667 = vmatprep.subr.bf16.mxu0 %v503
    %668 = vmatpush2.bf16.msra.mxu0 %v502
    %669 = vmatprep.mubr.bf16.mxu0 %v190
    %670 = vmatmul.mubr.bf16.gmra.mxu0 %v189
    %v671 = vpop.f32.mrf.mxu0
    %v672 = vadd.f32 %v267, %v671
    %v673 = vpop.f32.mrf.mxu0
    %v674 = vadd.f32 %v271, %v673
    %v675 = vpop.f32.mrf.mxu0
    %v676 = vpop.f32.mrf.mxu0
    %677 = vdwg.mxu0
    %v678 = vmax.f32 %v631, 0.0
    %v679 = vmax.f32 %v633, 0.0
    %v680 = vmax.f32 %v672, 0.0
    %v681 = vmax.f32 %v674, 0.0
    %s682 = scalar_lea.vmem [#allocation19], 1
    %v683 = vld [vmem:[%s682] ss:$8 sm:$0xf]
    %v684 = vpack.c.bf16 %v678, %v678
    %v685 = vpack.c.bf16 %v679, %v679
    %v686 = vpack.c.bf16 %v680, %v680
    %v687 = vpack.c.bf16 %v681, %v681
    %v688 = vld [vmem:[#allocation8] sm:$0xff]
    %v689 = vld [vmem:[#allocation8 + $0x8] sm:$0xff]
    %v690 = vld [vmem:[#allocation8 + $0x10] sm:$0xff]
    %v691 = vld [vmem:[#allocation8 + $0x18] sm:$0xff]
    %v692 = vld [vmem:[#allocation8 + $0x20] sm:$0xff]
    %v693 = vld [vmem:[#allocation8 + $0x28] sm:$0xff]
    %v694 = vld [vmem:[#allocation8 + $0x30] sm:$0xff]
    %v695 = vld [vmem:[#allocation8 + $0x38] sm:$0xff]
    %v696 = vld [vmem:[#allocation8 + $0x40] sm:$0xff]
    %v697 = vld [vmem:[#allocation8 + $0x48] sm:$0xff]
    %v698 = vld [vmem:[#allocation8 + $0x50] sm:$0xff]
    %v699 = vld [vmem:[#allocation8 + $0x58] sm:$0xff]
    %v700 = vld [vmem:[#allocation8 + $0x60] sm:$0xff]
    %v701 = vld [vmem:[#allocation8 + $0x68] sm:$0xff]
    %v702 = vld [vmem:[#allocation8 + $0x70] sm:$0xff]
    %v703 = vld [vmem:[#allocation8 + $0x78] sm:$0xff]
    %v704 = vld [vmem:[#allocation8 + $0x80] sm:$0xff]
    %v705 = vld [vmem:[#allocation8 + $0x88] sm:$0xff]
    %v706 = vld [vmem:[#allocation8 + $0x90] sm:$0xff]
    %v707 = vld [vmem:[#allocation8 + $0x98] sm:$0xff]
    %v708 = vld [vmem:[#allocation8 + $0xa0] sm:$0xff]
    %v709 = vld [vmem:[#allocation8 + $0xa8] sm:$0xff]
    %v710 = vld [vmem:[#allocation8 + $0xb0] sm:$0xff]
    %v711 = vld [vmem:[#allocation8 + $0xb8] sm:$0xff]
    %v712 = vld [vmem:[#allocation8 + $0xc0] sm:$0xff]
    %v713 = vld [vmem:[#allocation8 + $0xc8] sm:$0xff]
    %v714 = vld [vmem:[#allocation8 + $0xd0] sm:$0xff]
    %v715 = vld [vmem:[#allocation8 + $0xd8] sm:$0xff]
    %v716 = vld [vmem:[#allocation8 + $0xe0] sm:$0xff]
    %v717 = vld [vmem:[#allocation8 + $0xe8] sm:$0xff]
    %v718 = vld [vmem:[#allocation8 + $0xf0] sm:$0xff]
    %v719 = vld [vmem:[#allocation8 + $0xf8] sm:$0xff]
    %v720 = vld [vmem:[#allocation8 + $0x100] sm:$0xff]
    %v721 = vld [vmem:[#allocation8 + $0x108] sm:$0xff]
    %v722 = vld [vmem:[#allocation8 + $0x110] sm:$0xff]
    %v723 = vld [vmem:[#allocation8 + $0x118] sm:$0xff]
    %v724 = vld [vmem:[#allocation8 + $0x120] sm:$0xff]
    %v725 = vld [vmem:[#allocation8 + $0x128] sm:$0xff]
    %v726 = vld [vmem:[#allocation8 + $0x130] sm:$0xff]
    %v727 = vld [vmem:[#allocation8 + $0x138] sm:$0xff]
    %v728 = vld [vmem:[#allocation8 + $0x140] sm:$0xff]
    %v729 = vld [vmem:[#allocation8 + $0x148] sm:$0xff]
    %v730 = vld [vmem:[#allocation8 + $0x150] sm:$0xff]
    %v731 = vld [vmem:[#allocation8 + $0x158] sm:$0xff]
    %v732 = vld [vmem:[#allocation8 + $0x160] sm:$0xff]
    %v733 = vld [vmem:[#allocation8 + $0x168] sm:$0xff]
    %v734 = vld [vmem:[#allocation8 + $0x170] sm:$0xff]
    %v735 = vld [vmem:[#allocation8 + $0x178] sm:$0xff]
    %v736 = vld [vmem:[#allocation8 + $0x180] sm:$0xff]
    %v737 = vld [vmem:[#allocation8 + $0x188] sm:$0xff]
    %v738 = vld [vmem:[#allocation8 + $0x190] sm:$0xff]
    %v739 = vld [vmem:[#allocation8 + $0x198] sm:$0xff]
    %v740 = vld [vmem:[#allocation8 + $0x1a0] sm:$0xff]
    %v741 = vld [vmem:[#allocation8 + $0x1a8] sm:$0xff]
    %v742 = vld [vmem:[#allocation8 + $0x1b0] sm:$0xff]
    %v743 = vld [vmem:[#allocation8 + $0x1b8] sm:$0xff]
    %v744 = vld [vmem:[#allocation8 + $0x1c0] sm:$0xff]
    %v745 = vld [vmem:[#allocation8 + $0x1c8] sm:$0xff]
    %v746 = vld [vmem:[#allocation8 + $0x1d0] sm:$0xff]
    %v747 = vld [vmem:[#allocation8 + $0x1d8] sm:$0xff]
    %v748 = vld [vmem:[#allocation8 + $0x1e0] sm:$0xff]
    %v749 = vld [vmem:[#allocation8 + $0x1e8] sm:$0xff]
    %v750 = vld [vmem:[#allocation8 + $0x1f0] sm:$0xff]
    %v751 = vld [vmem:[#allocation8 + $0x1f8] sm:$0xff]
    %v752 = vld [vmem:[#allocation8 + $0x200] sm:$0xff]
    %v753 = vld [vmem:[#allocation8 + $0x208] sm:$0xff]
    %v754 = vld [vmem:[#allocation8 + $0x210] sm:$0xff]
    %v755 = vld [vmem:[#allocation8 + $0x218] sm:$0xff]
    %v756 = vld [vmem:[#allocation8 + $0x220] sm:$0xff]
    %v757 = vld [vmem:[#allocation8 + $0x228] sm:$0xff]
    %v758 = vld [vmem:[#allocation8 + $0x230] sm:$0xff]
    %v759 = vld [vmem:[#allocation8 + $0x238] sm:$0xff]
    %v760 = vld [vmem:[#allocation8 + $0x240] sm:$0xff]
    %v761 = vld [vmem:[#allocation8 + $0x248] sm:$0xff]
    %v762 = vld [vmem:[#allocation8 + $0x250] sm:$0xff]
    %v763 = vld [vmem:[#allocation8 + $0x258] sm:$0xff]
    %v764 = vld [vmem:[#allocation8 + $0x260] sm:$0xff]
    %v765 = vld [vmem:[#allocation8 + $0x268] sm:$0xff]
    %v766 = vld [vmem:[#allocation8 + $0x270] sm:$0xff]
    %v767 = vld [vmem:[#allocation8 + $0x278] sm:$0xff]
    %v768 = vld [vmem:[#allocation8 + $0x280] sm:$0xff]
    %v769 = vld [vmem:[#allocation8 + $0x288] sm:$0xff]
    %v770 = vld [vmem:[#allocation8 + $0x290] sm:$0xff]
    %v771 = vld [vmem:[#allocation8 + $0x298] sm:$0xff]
    %v772 = vld [vmem:[#allocation8 + $0x2a0] sm:$0xff]
    %v773 = vld [vmem:[#allocation8 + $0x2a8] sm:$0xff]
    %v774 = vld [vmem:[#allocation8 + $0x2b0] sm:$0xff]
    %v775 = vld [vmem:[#allocation8 + $0x2b8] sm:$0xff]
    %v776 = vld [vmem:[#allocation8 + $0x2c0] sm:$0xff]
    %v777 = vld [vmem:[#allocation8 + $0x2c8] sm:$0xff]
    %v778 = vld [vmem:[#allocation8 + $0x2d0] sm:$0xff]
    %v779 = vld [vmem:[#allocation8 + $0x2d8] sm:$0xff]
    %v780 = vld [vmem:[#allocation8 + $0x2e0] sm:$0xff]
    %v781 = vld [vmem:[#allocation8 + $0x2e8] sm:$0xff]
    %v782 = vld [vmem:[#allocation8 + $0x2f0] sm:$0xff]
    %v783 = vld [vmem:[#allocation8 + $0x2f8] sm:$0xff]
    %v784 = vld [vmem:[#allocation8 + $0x300] sm:$0xff]
    %v785 = vld [vmem:[#allocation8 + $0x308] sm:$0xff]
    %v786 = vld [vmem:[#allocation8 + $0x310] sm:$0xff]
    %v787 = vld [vmem:[#allocation8 + $0x318] sm:$0xff]
    %v788 = vld [vmem:[#allocation8 + $0x320] sm:$0xff]
    %v789 = vld [vmem:[#allocation8 + $0x328] sm:$0xff]
    %v790 = vld [vmem:[#allocation8 + $0x330] sm:$0xff]
    %v791 = vld [vmem:[#allocation8 + $0x338] sm:$0xff]
    %v792 = vld [vmem:[#allocation8 + $0x340] sm:$0xff]
    %v793 = vld [vmem:[#allocation8 + $0x348] sm:$0xff]
    %v794 = vld [vmem:[#allocation8 + $0x350] sm:$0xff]
    %v795 = vld [vmem:[#allocation8 + $0x358] sm:$0xff]
    %v796 = vld [vmem:[#allocation8 + $0x360] sm:$0xff]
    %v797 = vld [vmem:[#allocation8 + $0x368] sm:$0xff]
    %v798 = vld [vmem:[#allocation8 + $0x370] sm:$0xff]
    %v799 = vld [vmem:[#allocation8 + $0x378] sm:$0xff]
    %v800 = vld [vmem:[#allocation8 + $0x380] sm:$0xff]
    %v801 = vld [vmem:[#allocation8 + $0x388] sm:$0xff]
    %v802 = vld [vmem:[#allocation8 + $0x390] sm:$0xff]
    %v803 = vld [vmem:[#allocation8 + $0x398] sm:$0xff]
    %v804 = vld [vmem:[#allocation8 + $0x3a0] sm:$0xff]
    %v805 = vld [vmem:[#allocation8 + $0x3a8] sm:$0xff]
    %v806 = vld [vmem:[#allocation8 + $0x3b0] sm:$0xff]
    %v807 = vld [vmem:[#allocation8 + $0x3b8] sm:$0xff]
    %v808 = vld [vmem:[#allocation8 + $0x3c0] sm:$0xff]
    %v809 = vld [vmem:[#allocation8 + $0x3c8] sm:$0xff]
    %v810 = vld [vmem:[#allocation8 + $0x3d0] sm:$0xff]
    %v811 = vld [vmem:[#allocation8 + $0x3d8] sm:$0xff]
    %v812 = vld [vmem:[#allocation8 + $0x3e0] sm:$0xff]
    %v813 = vld [vmem:[#allocation8 + $0x3e8] sm:$0xff]
    %v814 = vld [vmem:[#allocation8 + $0x3f0] sm:$0xff]
    %v815 = vld [vmem:[#allocation8 + $0x3f8] sm:$0xff]
    %v817 = vlaneseq
    %v818 = vshrl.u32 %v817, 7
    %v819 = vsub.s32 0, %v818
    %v820 = vrot.slane %v683, %v819
    %v821 = vlaneseq
    %v822 = vshrl.u32 %v821, 7
    %v823 = vsub.s32 1, %v822
    %v824 = vrot.slane %v683, %v823
    %v825 = vlaneseq
    %v826 = vshrl.u32 %v825, 7
    %v827 = vsub.s32 2, %v826
    %v828 = vrot.slane %v683, %v827
    %v829 = vlaneseq
    %v830 = vshrl.u32 %v829, 7
    %v831 = vsub.s32 3, %v830
    %v832 = vrot.slane %v683, %v831
    %v965 = vunpack.c.l.b16 %v688
    %v966 = vunpack.c.h.b16 %v688
    %v967 = vunpack.c.l.b16 %v689
    %v968 = vunpack.c.h.b16 %v689
    %v969 = vunpack.c.l.b16 %v690
    %v970 = vunpack.c.h.b16 %v690
    %v971 = vunpack.c.l.b16 %v691
    %v972 = vunpack.c.h.b16 %v691
    %v973 = vunpack.c.l.b16 %v692
    %v974 = vunpack.c.h.b16 %v692
    %v975 = vunpack.c.l.b16 %v693
    %v976 = vunpack.c.h.b16 %v693
    %v977 = vunpack.c.l.b16 %v694
    %v978 = vunpack.c.h.b16 %v694
    %v979 = vunpack.c.l.b16 %v695
    %v980 = vunpack.c.h.b16 %v695
    %v981 = vunpack.c.l.b16 %v696
    %v982 = vunpack.c.h.b16 %v696
    %v983 = vunpack.c.l.b16 %v697
    %v984 = vunpack.c.h.b16 %v697
    %v985 = vunpack.c.l.b16 %v698
    %v986 = vunpack.c.h.b16 %v698
    %v987 = vunpack.c.l.b16 %v699
    %v988 = vunpack.c.h.b16 %v699
    %v989 = vunpack.c.l.b16 %v700
    %v990 = vunpack.c.h.b16 %v700
    %v991 = vunpack.c.l.b16 %v701
    %v992 = vunpack.c.h.b16 %v701
    %v993 = vunpack.c.l.b16 %v702
    %v994 = vunpack.c.h.b16 %v702
    %v995 = vunpack.c.l.b16 %v703
    %v996 = vunpack.c.h.b16 %v703
    %v997 = vunpack.c.l.b16 %v704
    %v998 = vunpack.c.h.b16 %v704
    %v999 = vunpack.c.l.b16 %v705
    %v1000 = vunpack.c.h.b16 %v705
    %v1001 = vunpack.c.l.b16 %v706
    %v1002 = vunpack.c.h.b16 %v706
    %v1003 = vunpack.c.l.b16 %v707
    %v1004 = vunpack.c.h.b16 %v707
    %v1005 = vunpack.c.l.b16 %v708
    %v1006 = vunpack.c.h.b16 %v708
    %v1007 = vunpack.c.l.b16 %v709
    %v1008 = vunpack.c.h.b16 %v709
    %v1009 = vunpack.c.l.b16 %v710
    %v1010 = vunpack.c.h.b16 %v710
    %v1011 = vunpack.c.l.b16 %v711
    %v1012 = vunpack.c.h.b16 %v711
    %v1013 = vunpack.c.l.b16 %v712
    %v1014 = vunpack.c.h.b16 %v712
    %v1015 = vunpack.c.l.b16 %v713
    %v1016 = vunpack.c.h.b16 %v713
    %v1017 = vunpack.c.l.b16 %v714
    %v1018 = vunpack.c.h.b16 %v714
    %v1019 = vunpack.c.l.b16 %v715
    %v1020 = vunpack.c.h.b16 %v715
    %v1021 = vunpack.c.l.b16 %v716
    %v1022 = vunpack.c.h.b16 %v716
    %v1023 = vunpack.c.l.b16 %v717
    %v1024 = vunpack.c.h.b16 %v717
    %v1025 = vunpack.c.l.b16 %v718
    %v1026 = vunpack.c.h.b16 %v718
    %v1027 = vunpack.c.l.b16 %v719
    %v1028 = vunpack.c.h.b16 %v719
    %v1029 = vunpack.c.l.b16 %v720
    %v1030 = vunpack.c.h.b16 %v720
    %v1031 = vunpack.c.l.b16 %v721
    %v1032 = vunpack.c.h.b16 %v721
    %v1033 = vunpack.c.l.b16 %v722
    %v1034 = vunpack.c.h.b16 %v722
    %v1035 = vunpack.c.l.b16 %v723
    %v1036 = vunpack.c.h.b16 %v723
    %v1037 = vunpack.c.l.b16 %v724
    %v1038 = vunpack.c.h.b16 %v724
    %v1039 = vunpack.c.l.b16 %v725
    %v1040 = vunpack.c.h.b16 %v725
    %v1041 = vunpack.c.l.b16 %v726
    %v1042 = vunpack.c.h.b16 %v726
    %v1043 = vunpack.c.l.b16 %v727
    %v1044 = vunpack.c.h.b16 %v727
    %v1045 = vunpack.c.l.b16 %v728
    %v1046 = vunpack.c.h.b16 %v728
    %v1047 = vunpack.c.l.b16 %v729
    %v1048 = vunpack.c.h.b16 %v729
    %v1049 = vunpack.c.l.b16 %v730
    %v1050 = vunpack.c.h.b16 %v730
    %v1051 = vunpack.c.l.b16 %v731
    %v1052 = vunpack.c.h.b16 %v731
    %v1053 = vunpack.c.l.b16 %v732
    %v1054 = vunpack.c.h.b16 %v732
    %v1055 = vunpack.c.l.b16 %v733
    %v1056 = vunpack.c.h.b16 %v733
    %v1057 = vunpack.c.l.b16 %v734
    %v1058 = vunpack.c.h.b16 %v734
    %v1059 = vunpack.c.l.b16 %v735
    %v1060 = vunpack.c.h.b16 %v735
    %v1061 = vunpack.c.l.b16 %v736
    %v1062 = vunpack.c.h.b16 %v736
    %v1063 = vunpack.c.l.b16 %v737
    %v1064 = vunpack.c.h.b16 %v737
    %v1065 = vunpack.c.l.b16 %v738
    %v1066 = vunpack.c.h.b16 %v738
    %v1067 = vunpack.c.l.b16 %v739
    %v1068 = vunpack.c.h.b16 %v739
    %v1069 = vunpack.c.l.b16 %v740
    %v1070 = vunpack.c.h.b16 %v740
    %v1071 = vunpack.c.l.b16 %v741
    %v1072 = vunpack.c.h.b16 %v741
    %v1073 = vunpack.c.l.b16 %v742
    %v1074 = vunpack.c.h.b16 %v742
    %v1075 = vunpack.c.l.b16 %v743
    %v1076 = vunpack.c.h.b16 %v743
    %v1077 = vunpack.c.l.b16 %v744
    %v1078 = vunpack.c.h.b16 %v744
    %v1079 = vunpack.c.l.b16 %v745
    %v1080 = vunpack.c.h.b16 %v745
    %v1081 = vunpack.c.l.b16 %v746
    %v1082 = vunpack.c.h.b16 %v746
    %v1083 = vunpack.c.l.b16 %v747
    %v1084 = vunpack.c.h.b16 %v747
    %v1085 = vunpack.c.l.b16 %v748
    %v1086 = vunpack.c.h.b16 %v748
    %v1087 = vunpack.c.l.b16 %v749
    %v1088 = vunpack.c.h.b16 %v749
    %v1089 = vunpack.c.l.b16 %v750
    %v1090 = vunpack.c.h.b16 %v750
    %v1091 = vunpack.c.l.b16 %v751
    %v1092 = vunpack.c.h.b16 %v751
    %v1093 = vunpack.c.l.b16 %v752
    %v1094 = vunpack.c.h.b16 %v752
    %v1095 = vunpack.c.l.b16 %v753
    %v1096 = vunpack.c.h.b16 %v753
    %v1097 = vunpack.c.l.b16 %v754
    %v1098 = vunpack.c.h.b16 %v754
    %v1099 = vunpack.c.l.b16 %v755
    %v1100 = vunpack.c.h.b16 %v755
    %v1101 = vunpack.c.l.b16 %v756
    %v1102 = vunpack.c.h.b16 %v756
    %v1103 = vunpack.c.l.b16 %v757
    %v1104 = vunpack.c.h.b16 %v757
    %v1105 = vunpack.c.l.b16 %v758
    %v1106 = vunpack.c.h.b16 %v758
    %v1107 = vunpack.c.l.b16 %v759
    %v1108 = vunpack.c.h.b16 %v759
    %v1109 = vunpack.c.l.b16 %v760
    %v1110 = vunpack.c.h.b16 %v760
    %v1111 = vunpack.c.l.b16 %v761
    %v1112 = vunpack.c.h.b16 %v761
    %v1113 = vunpack.c.l.b16 %v762
    %v1114 = vunpack.c.h.b16 %v762
    %v1115 = vunpack.c.l.b16 %v763
    %v1116 = vunpack.c.h.b16 %v763
    %v1117 = vunpack.c.l.b16 %v764
    %v1118 = vunpack.c.h.b16 %v764
    %v1119 = vunpack.c.l.b16 %v765
    %v1120 = vunpack.c.h.b16 %v765
    %v1121 = vunpack.c.l.b16 %v766
    %v1122 = vunpack.c.h.b16 %v766
    %v1123 = vunpack.c.l.b16 %v767
    %v1124 = vunpack.c.h.b16 %v767
    %v1125 = vunpack.c.l.b16 %v768
    %v1126 = vunpack.c.h.b16 %v768
    %v1127 = vunpack.c.l.b16 %v769
    %v1128 = vunpack.c.h.b16 %v769
    %v1129 = vunpack.c.l.b16 %v770
    %v1130 = vunpack.c.h.b16 %v770
    %v1131 = vunpack.c.l.b16 %v771
    %v1132 = vunpack.c.h.b16 %v771
    %v1133 = vunpack.c.l.b16 %v772
    %v1134 = vunpack.c.h.b16 %v772
    %v1135 = vunpack.c.l.b16 %v773
    %v1136 = vunpack.c.h.b16 %v773
    %v1137 = vunpack.c.l.b16 %v774
    %v1138 = vunpack.c.h.b16 %v774
    %v1139 = vunpack.c.l.b16 %v775
    %v1140 = vunpack.c.h.b16 %v775
    %v1141 = vunpack.c.l.b16 %v776
    %v1142 = vunpack.c.h.b16 %v776
    %v1143 = vunpack.c.l.b16 %v777
    %v1144 = vunpack.c.h.b16 %v777
    %v1145 = vunpack.c.l.b16 %v778
    %v1146 = vunpack.c.h.b16 %v778
    %v1147 = vunpack.c.l.b16 %v779
    %v1148 = vunpack.c.h.b16 %v779
    %v1149 = vunpack.c.l.b16 %v780
    %v1150 = vunpack.c.h.b16 %v780
    %v1151 = vunpack.c.l.b16 %v781
    %v1152 = vunpack.c.h.b16 %v781
    %v1153 = vunpack.c.l.b16 %v782
    %v1154 = vunpack.c.h.b16 %v782
    %v1155 = vunpack.c.l.b16 %v783
    %v1156 = vunpack.c.h.b16 %v783
    %v1157 = vunpack.c.l.b16 %v784
    %v1158 = vunpack.c.h.b16 %v784
    %v1159 = vunpack.c.l.b16 %v785
    %v1160 = vunpack.c.h.b16 %v785
    %v1161 = vunpack.c.l.b16 %v786
    %v1162 = vunpack.c.h.b16 %v786
    %v1163 = vunpack.c.l.b16 %v787
    %v1164 = vunpack.c.h.b16 %v787
    %v1165 = vunpack.c.l.b16 %v788
    %v1166 = vunpack.c.h.b16 %v788
    %v1167 = vunpack.c.l.b16 %v789
    %v1168 = vunpack.c.h.b16 %v789
    %v1169 = vunpack.c.l.b16 %v790
    %v1170 = vunpack.c.h.b16 %v790
    %v1171 = vunpack.c.l.b16 %v791
    %v1172 = vunpack.c.h.b16 %v791
    %v1173 = vunpack.c.l.b16 %v792
    %v1174 = vunpack.c.h.b16 %v792
    %v1175 = vunpack.c.l.b16 %v793
    %v1176 = vunpack.c.h.b16 %v793
    %v1177 = vunpack.c.l.b16 %v794
    %v1178 = vunpack.c.h.b16 %v794
    %v1179 = vunpack.c.l.b16 %v795
    %v1180 = vunpack.c.h.b16 %v795
    %v1181 = vunpack.c.l.b16 %v796
    %v1182 = vunpack.c.h.b16 %v796
    %v1183 = vunpack.c.l.b16 %v797
    %v1184 = vunpack.c.h.b16 %v797
    %v1185 = vunpack.c.l.b16 %v798
    %v1186 = vunpack.c.h.b16 %v798
    %v1187 = vunpack.c.l.b16 %v799
    %v1188 = vunpack.c.h.b16 %v799
    %v1189 = vunpack.c.l.b16 %v800
    %v1190 = vunpack.c.h.b16 %v800
    %v1191 = vunpack.c.l.b16 %v801
    %v1192 = vunpack.c.h.b16 %v801
    %v1193 = vunpack.c.l.b16 %v802
    %v1194 = vunpack.c.h.b16 %v802
    %v1195 = vunpack.c.l.b16 %v803
    %v1196 = vunpack.c.h.b16 %v803
    %v1197 = vunpack.c.l.b16 %v804
    %v1198 = vunpack.c.h.b16 %v804
    %v1199 = vunpack.c.l.b16 %v805
    %v1200 = vunpack.c.h.b16 %v805
    %v1201 = vunpack.c.l.b16 %v806
    %v1202 = vunpack.c.h.b16 %v806
    %v1203 = vunpack.c.l.b16 %v807
    %v1204 = vunpack.c.h.b16 %v807
    %v1205 = vunpack.c.l.b16 %v808
    %v1206 = vunpack.c.h.b16 %v808
    %v1207 = vunpack.c.l.b16 %v809
    %v1208 = vunpack.c.h.b16 %v809
    %v1209 = vunpack.c.l.b16 %v810
    %v1210 = vunpack.c.h.b16 %v810
    %v1211 = vunpack.c.l.b16 %v811
    %v1212 = vunpack.c.h.b16 %v811
    %v1213 = vunpack.c.l.b16 %v812
    %v1214 = vunpack.c.h.b16 %v812
    %v1215 = vunpack.c.l.b16 %v813
    %v1216 = vunpack.c.h.b16 %v813
    %v1217 = vunpack.c.l.b16 %v814
    %v1218 = vunpack.c.h.b16 %v814
    %v1219 = vunpack.c.l.b16 %v815
    %v1220 = vunpack.c.h.b16 %v815
    %v1221 = vpack.c.b16 %v969, %v965
    %v1222 = vpack.c.b16 %v970, %v966
    %v1223 = vpack.c.b16 %v971, %v967
    %v1224 = vpack.c.b16 %v972, %v968
    %v1225 = vpack.c.b16 %v977, %v973
    %v1226 = vpack.c.b16 %v978, %v974
    %v1227 = vpack.c.b16 %v979, %v975
    %v1228 = vpack.c.b16 %v980, %v976
    %v1229 = vpack.c.b16 %v985, %v981
    %v1230 = vpack.c.b16 %v986, %v982
    %v1231 = vpack.c.b16 %v987, %v983
    %v1232 = vpack.c.b16 %v988, %v984
    %v1233 = vpack.c.b16 %v993, %v989
    %v1234 = vpack.c.b16 %v994, %v990
    %v1235 = vpack.c.b16 %v995, %v991
    %v1236 = vpack.c.b16 %v996, %v992
    %v1237 = vpack.c.b16 %v1001, %v997
    %v1238 = vpack.c.b16 %v1002, %v998
    %v1239 = vpack.c.b16 %v1003, %v999
    %v1240 = vpack.c.b16 %v1004, %v1000
    %v1241 = vpack.c.b16 %v1009, %v1005
    %v1242 = vpack.c.b16 %v1010, %v1006
    %v1243 = vpack.c.b16 %v1011, %v1007
    %v1244 = vpack.c.b16 %v1012, %v1008
    %v1245 = vpack.c.b16 %v1017, %v1013
    %v1246 = vpack.c.b16 %v1018, %v1014
    %v1247 = vpack.c.b16 %v1019, %v1015
    %v1248 = vpack.c.b16 %v1020, %v1016
    %v1249 = vpack.c.b16 %v1025, %v1021
    %v1250 = vpack.c.b16 %v1026, %v1022
    %v1251 = vpack.c.b16 %v1027, %v1023
    %v1252 = vpack.c.b16 %v1028, %v1024
    %v1253 = vpack.c.b16 %v1033, %v1029
    %v1254 = vpack.c.b16 %v1034, %v1030
    %v1255 = vpack.c.b16 %v1035, %v1031
    %v1256 = vpack.c.b16 %v1036, %v1032
    %v1257 = vpack.c.b16 %v1041, %v1037
    %v1258 = vpack.c.b16 %v1042, %v1038
    %v1259 = vpack.c.b16 %v1043, %v1039
    %v1260 = vpack.c.b16 %v1044, %v1040
    %v1261 = vpack.c.b16 %v1049, %v1045
    %v1262 = vpack.c.b16 %v1050, %v1046
    %v1263 = vpack.c.b16 %v1051, %v1047
    %v1264 = vpack.c.b16 %v1052, %v1048
    %v1265 = vpack.c.b16 %v1057, %v1053
    %v1266 = vpack.c.b16 %v1058, %v1054
    %v1267 = vpack.c.b16 %v1059, %v1055
    %v1268 = vpack.c.b16 %v1060, %v1056
    %v1269 = vpack.c.b16 %v1065, %v1061
    %v1270 = vpack.c.b16 %v1066, %v1062
    %v1271 = vpack.c.b16 %v1067, %v1063
    %v1272 = vpack.c.b16 %v1068, %v1064
    %v1273 = vpack.c.b16 %v1073, %v1069
    %v1274 = vpack.c.b16 %v1074, %v1070
    %v1275 = vpack.c.b16 %v1075, %v1071
    %v1276 = vpack.c.b16 %v1076, %v1072
    %v1277 = vpack.c.b16 %v1081, %v1077
    %v1278 = vpack.c.b16 %v1082, %v1078
    %v1279 = vpack.c.b16 %v1083, %v1079
    %v1280 = vpack.c.b16 %v1084, %v1080
    %v1281 = vpack.c.b16 %v1089, %v1085
    %v1282 = vpack.c.b16 %v1090, %v1086
    %v1283 = vpack.c.b16 %v1091, %v1087
    %v1284 = vpack.c.b16 %v1092, %v1088
    %v1285 = vpack.c.b16 %v1097, %v1093
    %v1286 = vpack.c.b16 %v1098, %v1094
    %v1287 = vpack.c.b16 %v1099, %v1095
    %v1288 = vpack.c.b16 %v1100, %v1096
    %v1289 = vpack.c.b16 %v1105, %v1101
    %v1290 = vpack.c.b16 %v1106, %v1102
    %v1291 = vpack.c.b16 %v1107, %v1103
    %v1292 = vpack.c.b16 %v1108, %v1104
    %v1293 = vpack.c.b16 %v1113, %v1109
    %v1294 = vpack.c.b16 %v1114, %v1110
    %v1295 = vpack.c.b16 %v1115, %v1111
    %v1296 = vpack.c.b16 %v1116, %v1112
    %v1297 = vpack.c.b16 %v1121, %v1117
    %v1298 = vpack.c.b16 %v1122, %v1118
    %v1299 = vpack.c.b16 %v1123, %v1119
    %v1300 = vpack.c.b16 %v1124, %v1120
    %v1301 = vpack.c.b16 %v1129, %v1125
    %v1302 = vpack.c.b16 %v1130, %v1126
    %v1303 = vpack.c.b16 %v1131, %v1127
    %v1304 = vpack.c.b16 %v1132, %v1128
    %v1305 = vpack.c.b16 %v1137, %v1133
    %v1306 = vpack.c.b16 %v1138, %v1134
    %v1307 = vpack.c.b16 %v1139, %v1135
    %v1308 = vpack.c.b16 %v1140, %v1136
    %v1309 = vpack.c.b16 %v1145, %v1141
    %v1310 = vpack.c.b16 %v1146, %v1142
    %v1311 = vpack.c.b16 %v1147, %v1143
    %v1312 = vpack.c.b16 %v1148, %v1144
    %v1313 = vpack.c.b16 %v1153, %v1149
    %v1314 = vpack.c.b16 %v1154, %v1150
    %v1315 = vpack.c.b16 %v1155, %v1151
    %v1316 = vpack.c.b16 %v1156, %v1152
    %v1317 = vpack.c.b16 %v1161, %v1157
    %v1318 = vpack.c.b16 %v1162, %v1158
    %v1319 = vpack.c.b16 %v1163, %v1159
    %v1320 = vpack.c.b16 %v1164, %v1160
    %v1321 = vpack.c.b16 %v1169, %v1165
    %v1322 = vpack.c.b16 %v1170, %v1166
    %v1323 = vpack.c.b16 %v1171, %v1167
    %v1324 = vpack.c.b16 %v1172, %v1168
    %v1325 = vpack.c.b16 %v1177, %v1173
    %v1326 = vpack.c.b16 %v1178, %v1174
    %v1327 = vpack.c.b16 %v1179, %v1175
    %v1328 = vpack.c.b16 %v1180, %v1176
    %v1329 = vpack.c.b16 %v1185, %v1181
    %v1330 = vpack.c.b16 %v1186, %v1182
    %v1331 = vpack.c.b16 %v1187, %v1183
    %v1332 = vpack.c.b16 %v1188, %v1184
    %v1333 = vpack.c.b16 %v1193, %v1189
    %v1334 = vpack.c.b16 %v1194, %v1190
    %v1335 = vpack.c.b16 %v1195, %v1191
    %v1336 = vpack.c.b16 %v1196, %v1192
    %v1337 = vpack.c.b16 %v1201, %v1197
    %v1338 = vpack.c.b16 %v1202, %v1198
    %v1339 = vpack.c.b16 %v1203, %v1199
    %v1340 = vpack.c.b16 %v1204, %v1200
    %v1341 = vpack.c.b16 %v1209, %v1205
    %v1342 = vpack.c.b16 %v1210, %v1206
    %v1343 = vpack.c.b16 %v1211, %v1207
    %v1344 = vpack.c.b16 %v1212, %v1208
    %v1345 = vpack.c.b16 %v1217, %v1213
    %v1346 = vpack.c.b16 %v1218, %v1214
    %v1347 = vpack.c.b16 %v1219, %v1215
    %v1348 = vpack.c.b16 %v1220, %v1216
    %1477 = vmatprep.subr.bf16.mxu0 %v1250
    %1478 = vmatpush1.bf16.msra.mxu0 %v1249
    %1479 = vmatprep.subr.bf16.mxu0 %v1246
    %1480 = vmatpush1.bf16.msra.mxu0 %v1245
    %1481 = vmatprep.subr.bf16.mxu0 %v1242
    %1482 = vmatpush1.bf16.msra.mxu0 %v1241
    %1483 = vmatprep.subr.bf16.mxu0 %v1238
    %1484 = vmatpush1.bf16.msra.mxu0 %v1237
    %1485 = vmatprep.subr.bf16.mxu0 %v1234
    %1486 = vmatpush1.bf16.msra.mxu0 %v1233
    %1487 = vmatprep.subr.bf16.mxu0 %v1230
    %1488 = vmatpush1.bf16.msra.mxu0 %v1229
    %1489 = vmatprep.subr.bf16.mxu0 %v1226
    %1490 = vmatpush1.bf16.msra.mxu0 %v1225
    %1491 = vmatprep.subr.bf16.mxu0 %v1222
    %1492 = vmatpush1.bf16.msra.mxu0 %v1221
    %1493 = vmatprep.subr.bf16.mxu0 %v1282
    %1494 = vmatpush2.bf16.msra.mxu0 %v1281
    %1495 = vmatprep.subr.bf16.mxu0 %v1278
    %1496 = vmatpush2.bf16.msra.mxu0 %v1277
    %1497 = vmatprep.subr.bf16.mxu0 %v1274
    %1498 = vmatpush2.bf16.msra.mxu0 %v1273
    %1499 = vmatprep.subr.bf16.mxu0 %v1270
    %1500 = vmatpush2.bf16.msra.mxu0 %v1269
    %1501 = vmatprep.subr.bf16.mxu0 %v1266
    %1502 = vmatpush2.bf16.msra.mxu0 %v1265
    %1503 = vmatprep.subr.bf16.mxu0 %v1262
    %1504 = vmatpush2.bf16.msra.mxu0 %v1261
    %1505 = vmatprep.subr.bf16.mxu0 %v1258
    %1506 = vmatpush2.bf16.msra.mxu0 %v1257
    %1507 = vmatprep.subr.bf16.mxu0 %v1254
    %1508 = vmatpush2.bf16.msra.mxu0 %v1253
    %1509 = vmatprep.mubr.bf16.mxu0 %v685
    %1510 = vmatmul.mubr.bf16.gmra.mxu0 %v684
    %v1511 = vpop.f32.mrf.mxu0
    %v1512 = vadd.f32 %v820, %v1511
    %v1513 = vpop.f32.mrf.mxu0
    %v1514 = vadd.f32 %v824, %v1513
    %v1515 = vpop.f32.mrf.mxu0
    %v1516 = vpop.f32.mrf.mxu0
    %1517 = vdwg.mxu0
    %1518 = vmatprep.subr.bf16.mxu0 %v1314
    %1519 = vmatpush1.bf16.msra.mxu0 %v1313
    %1520 = vmatprep.subr.bf16.mxu0 %v1310
    %1521 = vmatpush1.bf16.msra.mxu0 %v1309
    %1522 = vmatprep.subr.bf16.mxu0 %v1306
    %1523 = vmatpush1.bf16.msra.mxu0 %v1305
    %1524 = vmatprep.subr.bf16.mxu0 %v1302
    %1525 = vmatpush1.bf16.msra.mxu0 %v1301
    %1526 = vmatprep.subr.bf16.mxu0 %v1298
    %1527 = vmatpush1.bf16.msra.mxu0 %v1297
    %1528 = vmatprep.subr.bf16.mxu0 %v1294
    %1529 = vmatpush1.bf16.msra.mxu0 %v1293
    %1530 = vmatprep.subr.bf16.mxu0 %v1290
    %1531 = vmatpush1.bf16.msra.mxu0 %v1289
    %1532 = vmatprep.subr.bf16.mxu0 %v1286
    %1533 = vmatpush1.bf16.msra.mxu0 %v1285
    %1534 = vmatprep.subr.bf16.mxu0 %v1346
    %1535 = vmatpush2.bf16.msra.mxu0 %v1345
    %1536 = vmatprep.subr.bf16.mxu0 %v1342
    %1537 = vmatpush2.bf16.msra.mxu0 %v1341
    %1538 = vmatprep.subr.bf16.mxu0 %v1338
    %1539 = vmatpush2.bf16.msra.mxu0 %v1337
    %1540 = vmatprep.subr.bf16.mxu0 %v1334
    %1541 = vmatpush2.bf16.msra.mxu0 %v1333
    %1542 = vmatprep.subr.bf16.mxu0 %v1330
    %1543 = vmatpush2.bf16.msra.mxu0 %v1329
    %1544 = vmatprep.subr.bf16.mxu0 %v1326
    %1545 = vmatpush2.bf16.msra.mxu0 %v1325
    %1546 = vmatprep.subr.bf16.mxu0 %v1322
    %1547 = vmatpush2.bf16.msra.mxu0 %v1321
    %1548 = vmatprep.subr.bf16.mxu0 %v1318
    %1549 = vmatpush2.bf16.msra.mxu0 %v1317
    %1550 = vmatprep.mubr.bf16.mxu0 %v687
    %1551 = vmatmul.mubr.bf16.gmra.mxu0 %v686
    %v1552 = vpop.f32.mrf.mxu0
    %v1553 = vadd.f32 %v1512, %v1552
    %v1554 = vpop.f32.mrf.mxu0
    %v1555 = vadd.f32 %v1514, %v1554
    %v1556 = vpop.f32.mrf.mxu0
    %v1557 = vpop.f32.mrf.mxu0
    %1558 = vdwg.mxu0
    %1559 = vmatprep.subr.bf16.mxu0 %v1252
    %1560 = vmatpush1.bf16.msra.mxu0 %v1251
    %1561 = vmatprep.subr.bf16.mxu0 %v1248
    %1562 = vmatpush1.bf16.msra.mxu0 %v1247
    %1563 = vmatprep.subr.bf16.mxu0 %v1244
    %1564 = vmatpush1.bf16.msra.mxu0 %v1243
    %1565 = vmatprep.subr.bf16.mxu0 %v1240
    %1566 = vmatpush1.bf16.msra.mxu0 %v1239
    %1567 = vmatprep.subr.bf16.mxu0 %v1236
    %1568 = vmatpush1.bf16.msra.mxu0 %v1235
    %1569 = vmatprep.subr.bf16.mxu0 %v1232
    %1570 = vmatpush1.bf16.msra.mxu0 %v1231
    %1571 = vmatprep.subr.bf16.mxu0 %v1228
    %1572 = vmatpush1.bf16.msra.mxu0 %v1227
    %1573 = vmatprep.subr.bf16.mxu0 %v1224
    %1574 = vmatpush1.bf16.msra.mxu0 %v1223
    %1575 = vmatprep.subr.bf16.mxu0 %v1284
    %1576 = vmatpush2.bf16.msra.mxu0 %v1283
    %1577 = vmatprep.subr.bf16.mxu0 %v1280
    %1578 = vmatpush2.bf16.msra.mxu0 %v1279
    %1579 = vmatprep.subr.bf16.mxu0 %v1276
    %1580 = vmatpush2.bf16.msra.mxu0 %v1275
    %1581 = vmatprep.subr.bf16.mxu0 %v1272
    %1582 = vmatpush2.bf16.msra.mxu0 %v1271
    %1583 = vmatprep.subr.bf16.mxu0 %v1268
    %1584 = vmatpush2.bf16.msra.mxu0 %v1267
    %1585 = vmatprep.subr.bf16.mxu0 %v1264
    %1586 = vmatpush2.bf16.msra.mxu0 %v1263
    %1587 = vmatprep.subr.bf16.mxu0 %v1260
    %1588 = vmatpush2.bf16.msra.mxu0 %v1259
    %1589 = vmatprep.subr.bf16.mxu0 %v1256
    %1590 = vmatpush2.bf16.msra.mxu0 %v1255
    %1591 = vmatprep.mubr.bf16.mxu0 %v685
    %1592 = vmatmul.mubr.bf16.gmra.mxu0 %v684
    %v1593 = vpop.f32.mrf.mxu0
    %v1594 = vadd.f32 %v828, %v1593
    %v1595 = vpop.f32.mrf.mxu0
    %v1596 = vadd.f32 %v832, %v1595
    %v1597 = vpop.f32.mrf.mxu0
    %v1598 = vpop.f32.mrf.mxu0
    %1599 = vdwg.mxu0
    %1600 = vmatprep.subr.bf16.mxu0 %v1316
    %1601 = vmatpush1.bf16.msra.mxu0 %v1315
    %1602 = vmatprep.subr.bf16.mxu0 %v1312
    %1603 = vmatpush1.bf16.msra.mxu0 %v1311
    %1604 = vmatprep.subr.bf16.mxu0 %v1308
    %1605 = vmatpush1.bf16.msra.mxu0 %v1307
    %1606 = vmatprep.subr.bf16.mxu0 %v1304
    %1607 = vmatpush1.bf16.msra.mxu0 %v1303
    %1608 = vmatprep.subr.bf16.mxu0 %v1300
    %1609 = vmatpush1.bf16.msra.mxu0 %v1299
    %1610 = vmatprep.subr.bf16.mxu0 %v1296
    %1611 = vmatpush1.bf16.msra.mxu0 %v1295
    %1612 = vmatprep.subr.bf16.mxu0 %v1292
    %1613 = vmatpush1.bf16.msra.mxu0 %v1291
    %1614 = vmatprep.subr.bf16.mxu0 %v1288
    %1615 = vmatpush1.bf16.msra.mxu0 %v1287
    %1616 = vmatprep.subr.bf16.mxu0 %v1348
    %1617 = vmatpush2.bf16.msra.mxu0 %v1347
    %1618 = vmatprep.subr.bf16.mxu0 %v1344
    %1619 = vmatpush2.bf16.msra.mxu0 %v1343
    %1620 = vmatprep.subr.bf16.mxu0 %v1340
    %1621 = vmatpush2.bf16.msra.mxu0 %v1339
    %1622 = vmatprep.subr.bf16.mxu0 %v1336
    %1623 = vmatpush2.bf16.msra.mxu0 %v1335
    %1624 = vmatprep.subr.bf16.mxu0 %v1332
    %1625 = vmatpush2.bf16.msra.mxu0 %v1331
    %1626 = vmatprep.subr.bf16.mxu0 %v1328
    %1627 = vmatpush2.bf16.msra.mxu0 %v1327
    %1628 = vmatprep.subr.bf16.mxu0 %v1324
    %1629 = vmatpush2.bf16.msra.mxu0 %v1323
    %1630 = vmatprep.subr.bf16.mxu0 %v1320
    %1631 = vmatpush2.bf16.msra.mxu0 %v1319
    %1632 = vmatprep.mubr.bf16.mxu0 %v687
    %1633 = vmatmul.mubr.bf16.gmra.mxu0 %v686
    %v1634 = vpop.f32.mrf.mxu0
    %v1635 = vadd.f32 %v1594, %v1634
    %v1636 = vpop.f32.mrf.mxu0
    %v1637 = vadd.f32 %v1596, %v1636
    %v1638 = vpop.f32.mrf.mxu0
    %v1639 = vpop.f32.mrf.mxu0
    %1640 = vdwg.mxu0
    %v1641 = vmax.f32 %v1553, 0.0
    %v1642 = vmax.f32 %v1555, 0.0
    %v1643 = vmax.f32 %v1635, 0.0
    %v1644 = vmax.f32 %v1637, 0.0
    %s1645 = scalar_lea.vmem [#allocation19], 2
    %v1646 = vld [vmem:[%s1645] ss:$8 sm:$0xf]
    %v1647 = vpack.c.bf16 %v1641, %v1641
    %v1648 = vpack.c.bf16 %v1642, %v1642
    %v1649 = vpack.c.bf16 %v1643, %v1643
    %v1650 = vpack.c.bf16 %v1644, %v1644
    %v1651 = vld [vmem:[#allocation10] sm:$0xff]
    %v1652 = vld [vmem:[#allocation10 + $0x8] sm:$0xff]
    %v1653 = vld [vmem:[#allocation10 + $0x10] sm:$0xff]
    %v1654 = vld [vmem:[#allocation10 + $0x18] sm:$0xff]
    %v1655 = vld [vmem:[#allocation10 + $0x20] sm:$0xff]
    %v1656 = vld [vmem:[#allocation10 + $0x28] sm:$0xff]
    %v1657 = vld [vmem:[#allocation10 + $0x30] sm:$0xff]
    %v1658 = vld [vmem:[#allocation10 + $0x38] sm:$0xff]
    %v1659 = vld [vmem:[#allocation10 + $0x40] sm:$0xff]
    %v1660 = vld [vmem:[#allocation10 + $0x48] sm:$0xff]
    %v1661 = vld [vmem:[#allocation10 + $0x50] sm:$0xff]
    %v1662 = vld [vmem:[#allocation10 + $0x58] sm:$0xff]
    %v1663 = vld [vmem:[#allocation10 + $0x60] sm:$0xff]
    %v1664 = vld [vmem:[#allocation10 + $0x68] sm:$0xff]
    %v1665 = vld [vmem:[#allocation10 + $0x70] sm:$0xff]
    %v1666 = vld [vmem:[#allocation10 + $0x78] sm:$0xff]
    %v1667 = vld [vmem:[#allocation10 + $0x80] sm:$0xff]
    %v1668 = vld [vmem:[#allocation10 + $0x88] sm:$0xff]
    %v1669 = vld [vmem:[#allocation10 + $0x90] sm:$0xff]
    %v1670 = vld [vmem:[#allocation10 + $0x98] sm:$0xff]
    %v1671 = vld [vmem:[#allocation10 + $0xa0] sm:$0xff]
    %v1672 = vld [vmem:[#allocation10 + $0xa8] sm:$0xff]
    %v1673 = vld [vmem:[#allocation10 + $0xb0] sm:$0xff]
    %v1674 = vld [vmem:[#allocation10 + $0xb8] sm:$0xff]
    %v1675 = vld [vmem:[#allocation10 + $0xc0] sm:$0xff]
    %v1676 = vld [vmem:[#allocation10 + $0xc8] sm:$0xff]
    %v1677 = vld [vmem:[#allocation10 + $0xd0] sm:$0xff]
    %v1678 = vld [vmem:[#allocation10 + $0xd8] sm:$0xff]
    %v1679 = vld [vmem:[#allocation10 + $0xe0] sm:$0xff]
    %v1680 = vld [vmem:[#allocation10 + $0xe8] sm:$0xff]
    %v1681 = vld [vmem:[#allocation10 + $0xf0] sm:$0xff]
    %v1682 = vld [vmem:[#allocation10 + $0xf8] sm:$0xff]
    %v1683 = vld [vmem:[#allocation10 + $0x100] sm:$0xff]
    %v1684 = vld [vmem:[#allocation10 + $0x108] sm:$0xff]
    %v1685 = vld [vmem:[#allocation10 + $0x110] sm:$0xff]
    %v1686 = vld [vmem:[#allocation10 + $0x118] sm:$0xff]
    %v1687 = vld [vmem:[#allocation10 + $0x120] sm:$0xff]
    %v1688 = vld [vmem:[#allocation10 + $0x128] sm:$0xff]
    %v1689 = vld [vmem:[#allocation10 + $0x130] sm:$0xff]
    %v1690 = vld [vmem:[#allocation10 + $0x138] sm:$0xff]
    %v1691 = vld [vmem:[#allocation10 + $0x140] sm:$0xff]
    %v1692 = vld [vmem:[#allocation10 + $0x148] sm:$0xff]
    %v1693 = vld [vmem:[#allocation10 + $0x150] sm:$0xff]
    %v1694 = vld [vmem:[#allocation10 + $0x158] sm:$0xff]
    %v1695 = vld [vmem:[#allocation10 + $0x160] sm:$0xff]
    %v1696 = vld [vmem:[#allocation10 + $0x168] sm:$0xff]
    %v1697 = vld [vmem:[#allocation10 + $0x170] sm:$0xff]
    %v1698 = vld [vmem:[#allocation10 + $0x178] sm:$0xff]
    %v1699 = vld [vmem:[#allocation10 + $0x180] sm:$0xff]
    %v1700 = vld [vmem:[#allocation10 + $0x188] sm:$0xff]
    %v1701 = vld [vmem:[#allocation10 + $0x190] sm:$0xff]
    %v1702 = vld [vmem:[#allocation10 + $0x198] sm:$0xff]
    %v1703 = vld [vmem:[#allocation10 + $0x1a0] sm:$0xff]
    %v1704 = vld [vmem:[#allocation10 + $0x1a8] sm:$0xff]
    %v1705 = vld [vmem:[#allocation10 + $0x1b0] sm:$0xff]
    %v1706 = vld [vmem:[#allocation10 + $0x1b8] sm:$0xff]
    %v1707 = vld [vmem:[#allocation10 + $0x1c0] sm:$0xff]
    %v1708 = vld [vmem:[#allocation10 + $0x1c8] sm:$0xff]
    %v1709 = vld [vmem:[#allocation10 + $0x1d0] sm:$0xff]
    %v1710 = vld [vmem:[#allocation10 + $0x1d8] sm:$0xff]
    %v1711 = vld [vmem:[#allocation10 + $0x1e0] sm:$0xff]
    %v1712 = vld [vmem:[#allocation10 + $0x1e8] sm:$0xff]
    %v1713 = vld [vmem:[#allocation10 + $0x1f0] sm:$0xff]
    %v1714 = vld [vmem:[#allocation10 + $0x1f8] sm:$0xff]
    %v1715 = vld [vmem:[#allocation10 + $0x200] sm:$0xff]
    %v1716 = vld [vmem:[#allocation10 + $0x208] sm:$0xff]
    %v1717 = vld [vmem:[#allocation10 + $0x210] sm:$0xff]
    %v1718 = vld [vmem:[#allocation10 + $0x218] sm:$0xff]
    %v1719 = vld [vmem:[#allocation10 + $0x220] sm:$0xff]
    %v1720 = vld [vmem:[#allocation10 + $0x228] sm:$0xff]
    %v1721 = vld [vmem:[#allocation10 + $0x230] sm:$0xff]
    %v1722 = vld [vmem:[#allocation10 + $0x238] sm:$0xff]
    %v1723 = vld [vmem:[#allocation10 + $0x240] sm:$0xff]
    %v1724 = vld [vmem:[#allocation10 + $0x248] sm:$0xff]
    %v1725 = vld [vmem:[#allocation10 + $0x250] sm:$0xff]
    %v1726 = vld [vmem:[#allocation10 + $0x258] sm:$0xff]
    %v1727 = vld [vmem:[#allocation10 + $0x260] sm:$0xff]
    %v1728 = vld [vmem:[#allocation10 + $0x268] sm:$0xff]
    %v1729 = vld [vmem:[#allocation10 + $0x270] sm:$0xff]
    %v1730 = vld [vmem:[#allocation10 + $0x278] sm:$0xff]
    %v1731 = vld [vmem:[#allocation10 + $0x280] sm:$0xff]
    %v1732 = vld [vmem:[#allocation10 + $0x288] sm:$0xff]
    %v1733 = vld [vmem:[#allocation10 + $0x290] sm:$0xff]
    %v1734 = vld [vmem:[#allocation10 + $0x298] sm:$0xff]
    %v1735 = vld [vmem:[#allocation10 + $0x2a0] sm:$0xff]
    %v1736 = vld [vmem:[#allocation10 + $0x2a8] sm:$0xff]
    %v1737 = vld [vmem:[#allocation10 + $0x2b0] sm:$0xff]
    %v1738 = vld [vmem:[#allocation10 + $0x2b8] sm:$0xff]
    %v1739 = vld [vmem:[#allocation10 + $0x2c0] sm:$0xff]
    %v1740 = vld [vmem:[#allocation10 + $0x2c8] sm:$0xff]
    %v1741 = vld [vmem:[#allocation10 + $0x2d0] sm:$0xff]
    %v1742 = vld [vmem:[#allocation10 + $0x2d8] sm:$0xff]
    %v1743 = vld [vmem:[#allocation10 + $0x2e0] sm:$0xff]
    %v1744 = vld [vmem:[#allocation10 + $0x2e8] sm:$0xff]
    %v1745 = vld [vmem:[#allocation10 + $0x2f0] sm:$0xff]
    %v1746 = vld [vmem:[#allocation10 + $0x2f8] sm:$0xff]
    %v1747 = vld [vmem:[#allocation10 + $0x300] sm:$0xff]
    %v1748 = vld [vmem:[#allocation10 + $0x308] sm:$0xff]
    %v1749 = vld [vmem:[#allocation10 + $0x310] sm:$0xff]
    %v1750 = vld [vmem:[#allocation10 + $0x318] sm:$0xff]
    %v1751 = vld [vmem:[#allocation10 + $0x320] sm:$0xff]
    %v1752 = vld [vmem:[#allocation10 + $0x328] sm:$0xff]
    %v1753 = vld [vmem:[#allocation10 + $0x330] sm:$0xff]
    %v1754 = vld [vmem:[#allocation10 + $0x338] sm:$0xff]
    %v1755 = vld [vmem:[#allocation10 + $0x340] sm:$0xff]
    %v1756 = vld [vmem:[#allocation10 + $0x348] sm:$0xff]
    %v1757 = vld [vmem:[#allocation10 + $0x350] sm:$0xff]
    %v1758 = vld [vmem:[#allocation10 + $0x358] sm:$0xff]
    %v1759 = vld [vmem:[#allocation10 + $0x360] sm:$0xff]
    %v1760 = vld [vmem:[#allocation10 + $0x368] sm:$0xff]
    %v1761 = vld [vmem:[#allocation10 + $0x370] sm:$0xff]
    %v1762 = vld [vmem:[#allocation10 + $0x378] sm:$0xff]
    %v1763 = vld [vmem:[#allocation10 + $0x380] sm:$0xff]
    %v1764 = vld [vmem:[#allocation10 + $0x388] sm:$0xff]
    %v1765 = vld [vmem:[#allocation10 + $0x390] sm:$0xff]
    %v1766 = vld [vmem:[#allocation10 + $0x398] sm:$0xff]
    %v1767 = vld [vmem:[#allocation10 + $0x3a0] sm:$0xff]
    %v1768 = vld [vmem:[#allocation10 + $0x3a8] sm:$0xff]
    %v1769 = vld [vmem:[#allocation10 + $0x3b0] sm:$0xff]
    %v1770 = vld [vmem:[#allocation10 + $0x3b8] sm:$0xff]
    %v1771 = vld [vmem:[#allocation10 + $0x3c0] sm:$0xff]
    %v1772 = vld [vmem:[#allocation10 + $0x3c8] sm:$0xff]
    %v1773 = vld [vmem:[#allocation10 + $0x3d0] sm:$0xff]
    %v1774 = vld [vmem:[#allocation10 + $0x3d8] sm:$0xff]
    %v1775 = vld [vmem:[#allocation10 + $0x3e0] sm:$0xff]
    %v1776 = vld [vmem:[#allocation10 + $0x3e8] sm:$0xff]
    %v1777 = vld [vmem:[#allocation10 + $0x3f0] sm:$0xff]
    %v1778 = vld [vmem:[#allocation10 + $0x3f8] sm:$0xff]
    %v1780 = vlaneseq
    %v1781 = vshrl.u32 %v1780, 7
    %v1782 = vsub.s32 0, %v1781
    %v1783 = vrot.slane %v1646, %v1782
    %v1784 = vlaneseq
    %v1785 = vshrl.u32 %v1784, 7
    %v1786 = vsub.s32 1, %v1785
    %v1787 = vrot.slane %v1646, %v1786
    %v1788 = vlaneseq
    %v1789 = vshrl.u32 %v1788, 7
    %v1790 = vsub.s32 2, %v1789
    %v1791 = vrot.slane %v1646, %v1790
    %v1792 = vlaneseq
    %v1793 = vshrl.u32 %v1792, 7
    %v1794 = vsub.s32 3, %v1793
    %v1795 = vrot.slane %v1646, %v1794
    %v1928 = vunpack.c.l.b16 %v1651
    %v1929 = vunpack.c.h.b16 %v1651
    %v1930 = vunpack.c.l.b16 %v1652
    %v1931 = vunpack.c.h.b16 %v1652
    %v1932 = vunpack.c.l.b16 %v1653
    %v1933 = vunpack.c.h.b16 %v1653
    %v1934 = vunpack.c.l.b16 %v1654
    %v1935 = vunpack.c.h.b16 %v1654
    %v1936 = vunpack.c.l.b16 %v1655
    %v1937 = vunpack.c.h.b16 %v1655
    %v1938 = vunpack.c.l.b16 %v1656
    %v1939 = vunpack.c.h.b16 %v1656
    %v1940 = vunpack.c.l.b16 %v1657
    %v1941 = vunpack.c.h.b16 %v1657
    %v1942 = vunpack.c.l.b16 %v1658
    %v1943 = vunpack.c.h.b16 %v1658
    %v1944 = vunpack.c.l.b16 %v1659
    %v1945 = vunpack.c.h.b16 %v1659
    %v1946 = vunpack.c.l.b16 %v1660
    %v1947 = vunpack.c.h.b16 %v1660
    %v1948 = vunpack.c.l.b16 %v1661
    %v1949 = vunpack.c.h.b16 %v1661
    %v1950 = vunpack.c.l.b16 %v1662
    %v1951 = vunpack.c.h.b16 %v1662
    %v1952 = vunpack.c.l.b16 %v1663
    %v1953 = vunpack.c.h.b16 %v1663
    %v1954 = vunpack.c.l.b16 %v1664
    %v1955 = vunpack.c.h.b16 %v1664
    %v1956 = vunpack.c.l.b16 %v1665
    %v1957 = vunpack.c.h.b16 %v1665
    %v1958 = vunpack.c.l.b16 %v1666
    %v1959 = vunpack.c.h.b16 %v1666
    %v1960 = vunpack.c.l.b16 %v1667
    %v1961 = vunpack.c.h.b16 %v1667
    %v1962 = vunpack.c.l.b16 %v1668
    %v1963 = vunpack.c.h.b16 %v1668
    %v1964 = vunpack.c.l.b16 %v1669
    %v1965 = vunpack.c.h.b16 %v1669
    %v1966 = vunpack.c.l.b16 %v1670
    %v1967 = vunpack.c.h.b16 %v1670
    %v1968 = vunpack.c.l.b16 %v1671
    %v1969 = vunpack.c.h.b16 %v1671
    %v1970 = vunpack.c.l.b16 %v1672
    %v1971 = vunpack.c.h.b16 %v1672
    %v1972 = vunpack.c.l.b16 %v1673
    %v1973 = vunpack.c.h.b16 %v1673
    %v1974 = vunpack.c.l.b16 %v1674
    %v1975 = vunpack.c.h.b16 %v1674
    %v1976 = vunpack.c.l.b16 %v1675
    %v1977 = vunpack.c.h.b16 %v1675
    %v1978 = vunpack.c.l.b16 %v1676
    %v1979 = vunpack.c.h.b16 %v1676
    %v1980 = vunpack.c.l.b16 %v1677
    %v1981 = vunpack.c.h.b16 %v1677
    %v1982 = vunpack.c.l.b16 %v1678
    %v1983 = vunpack.c.h.b16 %v1678
    %v1984 = vunpack.c.l.b16 %v1679
    %v1985 = vunpack.c.h.b16 %v1679
    %v1986 = vunpack.c.l.b16 %v1680
    %v1987 = vunpack.c.h.b16 %v1680
    %v1988 = vunpack.c.l.b16 %v1681
    %v1989 = vunpack.c.h.b16 %v1681
    %v1990 = vunpack.c.l.b16 %v1682
    %v1991 = vunpack.c.h.b16 %v1682
    %v1992 = vunpack.c.l.b16 %v1683
    %v1993 = vunpack.c.h.b16 %v1683
    %v1994 = vunpack.c.l.b16 %v1684
    %v1995 = vunpack.c.h.b16 %v1684
    %v1996 = vunpack.c.l.b16 %v1685
    %v1997 = vunpack.c.h.b16 %v1685
    %v1998 = vunpack.c.l.b16 %v1686
    %v1999 = vunpack.c.h.b16 %v1686
    %v2000 = vunpack.c.l.b16 %v1687
    %v2001 = vunpack.c.h.b16 %v1687
    %v2002 = vunpack.c.l.b16 %v1688
    %v2003 = vunpack.c.h.b16 %v1688
    %v2004 = vunpack.c.l.b16 %v1689
    %v2005 = vunpack.c.h.b16 %v1689
    %v2006 = vunpack.c.l.b16 %v1690
    %v2007 = vunpack.c.h.b16 %v1690
    %v2008 = vunpack.c.l.b16 %v1691
    %v2009 = vunpack.c.h.b16 %v1691
    %v2010 = vunpack.c.l.b16 %v1692
    %v2011 = vunpack.c.h.b16 %v1692
    %v2012 = vunpack.c.l.b16 %v1693
    %v2013 = vunpack.c.h.b16 %v1693
    %v2014 = vunpack.c.l.b16 %v1694
    %v2015 = vunpack.c.h.b16 %v1694
    %v2016 = vunpack.c.l.b16 %v1695
    %v2017 = vunpack.c.h.b16 %v1695
    %v2018 = vunpack.c.l.b16 %v1696
    %v2019 = vunpack.c.h.b16 %v1696
    %v2020 = vunpack.c.l.b16 %v1697
    %v2021 = vunpack.c.h.b16 %v1697
    %v2022 = vunpack.c.l.b16 %v1698
    %v2023 = vunpack.c.h.b16 %v1698
    %v2024 = vunpack.c.l.b16 %v1699
    %v2025 = vunpack.c.h.b16 %v1699
    %v2026 = vunpack.c.l.b16 %v1700
    %v2027 = vunpack.c.h.b16 %v1700
    %v2028 = vunpack.c.l.b16 %v1701
    %v2029 = vunpack.c.h.b16 %v1701
    %v2030 = vunpack.c.l.b16 %v1702
    %v2031 = vunpack.c.h.b16 %v1702
    %v2032 = vunpack.c.l.b16 %v1703
    %v2033 = vunpack.c.h.b16 %v1703
    %v2034 = vunpack.c.l.b16 %v1704
    %v2035 = vunpack.c.h.b16 %v1704
    %v2036 = vunpack.c.l.b16 %v1705
    %v2037 = vunpack.c.h.b16 %v1705
    %v2038 = vunpack.c.l.b16 %v1706
    %v2039 = vunpack.c.h.b16 %v1706
    %v2040 = vunpack.c.l.b16 %v1707
    %v2041 = vunpack.c.h.b16 %v1707
    %v2042 = vunpack.c.l.b16 %v1708
    %v2043 = vunpack.c.h.b16 %v1708
    %v2044 = vunpack.c.l.b16 %v1709
    %v2045 = vunpack.c.h.b16 %v1709
    %v2046 = vunpack.c.l.b16 %v1710
    %v2047 = vunpack.c.h.b16 %v1710
    %v2048 = vunpack.c.l.b16 %v1711
    %v2049 = vunpack.c.h.b16 %v1711
    %v2050 = vunpack.c.l.b16 %v1712
    %v2051 = vunpack.c.h.b16 %v1712
    %v2052 = vunpack.c.l.b16 %v1713
    %v2053 = vunpack.c.h.b16 %v1713
    %v2054 = vunpack.c.l.b16 %v1714
    %v2055 = vunpack.c.h.b16 %v1714
    %v2056 = vunpack.c.l.b16 %v1715
    %v2057 = vunpack.c.h.b16 %v1715
    %v2058 = vunpack.c.l.b16 %v1716
    %v2059 = vunpack.c.h.b16 %v1716
    %v2060 = vunpack.c.l.b16 %v1717
    %v2061 = vunpack.c.h.b16 %v1717
    %v2062 = vunpack.c.l.b16 %v1718
    %v2063 = vunpack.c.h.b16 %v1718
    %v2064 = vunpack.c.l.b16 %v1719
    %v2065 = vunpack.c.h.b16 %v1719
    %v2066 = vunpack.c.l.b16 %v1720
    %v2067 = vunpack.c.h.b16 %v1720
    %v2068 = vunpack.c.l.b16 %v1721
    %v2069 = vunpack.c.h.b16 %v1721
    %v2070 = vunpack.c.l.b16 %v1722
    %v2071 = vunpack.c.h.b16 %v1722
    %v2072 = vunpack.c.l.b16 %v1723
    %v2073 = vunpack.c.h.b16 %v1723
    %v2074 = vunpack.c.l.b16 %v1724
    %v2075 = vunpack.c.h.b16 %v1724
    %v2076 = vunpack.c.l.b16 %v1725
    %v2077 = vunpack.c.h.b16 %v1725
    %v2078 = vunpack.c.l.b16 %v1726
    %v2079 = vunpack.c.h.b16 %v1726
    %v2080 = vunpack.c.l.b16 %v1727
    %v2081 = vunpack.c.h.b16 %v1727
    %v2082 = vunpack.c.l.b16 %v1728
    %v2083 = vunpack.c.h.b16 %v1728
    %v2084 = vunpack.c.l.b16 %v1729
    %v2085 = vunpack.c.h.b16 %v1729
    %v2086 = vunpack.c.l.b16 %v1730
    %v2087 = vunpack.c.h.b16 %v1730
    %v2088 = vunpack.c.l.b16 %v1731
    %v2089 = vunpack.c.h.b16 %v1731
    %v2090 = vunpack.c.l.b16 %v1732
    %v2091 = vunpack.c.h.b16 %v1732
    %v2092 = vunpack.c.l.b16 %v1733
    %v2093 = vunpack.c.h.b16 %v1733
    %v2094 = vunpack.c.l.b16 %v1734
    %v2095 = vunpack.c.h.b16 %v1734
    %v2096 = vunpack.c.l.b16 %v1735
    %v2097 = vunpack.c.h.b16 %v1735
    %v2098 = vunpack.c.l.b16 %v1736
    %v2099 = vunpack.c.h.b16 %v1736
    %v2100 = vunpack.c.l.b16 %v1737
    %v2101 = vunpack.c.h.b16 %v1737
    %v2102 = vunpack.c.l.b16 %v1738
    %v2103 = vunpack.c.h.b16 %v1738
    %v2104 = vunpack.c.l.b16 %v1739
    %v2105 = vunpack.c.h.b16 %v1739
    %v2106 = vunpack.c.l.b16 %v1740
    %v2107 = vunpack.c.h.b16 %v1740
    %v2108 = vunpack.c.l.b16 %v1741
    %v2109 = vunpack.c.h.b16 %v1741
    %v2110 = vunpack.c.l.b16 %v1742
    %v2111 = vunpack.c.h.b16 %v1742
    %v2112 = vunpack.c.l.b16 %v1743
    %v2113 = vunpack.c.h.b16 %v1743
    %v2114 = vunpack.c.l.b16 %v1744
    %v2115 = vunpack.c.h.b16 %v1744
    %v2116 = vunpack.c.l.b16 %v1745
    %v2117 = vunpack.c.h.b16 %v1745
    %v2118 = vunpack.c.l.b16 %v1746
    %v2119 = vunpack.c.h.b16 %v1746
    %v2120 = vunpack.c.l.b16 %v1747
    %v2121 = vunpack.c.h.b16 %v1747
    %v2122 = vunpack.c.l.b16 %v1748
    %v2123 = vunpack.c.h.b16 %v1748
    %v2124 = vunpack.c.l.b16 %v1749
    %v2125 = vunpack.c.h.b16 %v1749
    %v2126 = vunpack.c.l.b16 %v1750
    %v2127 = vunpack.c.h.b16 %v1750
    %v2128 = vunpack.c.l.b16 %v1751
    %v2129 = vunpack.c.h.b16 %v1751
    %v2130 = vunpack.c.l.b16 %v1752
    %v2131 = vunpack.c.h.b16 %v1752
    %v2132 = vunpack.c.l.b16 %v1753
    %v2133 = vunpack.c.h.b16 %v1753
    %v2134 = vunpack.c.l.b16 %v1754
    %v2135 = vunpack.c.h.b16 %v1754
    %v2136 = vunpack.c.l.b16 %v1755
    %v2137 = vunpack.c.h.b16 %v1755
    %v2138 = vunpack.c.l.b16 %v1756
    %v2139 = vunpack.c.h.b16 %v1756
    %v2140 = vunpack.c.l.b16 %v1757
    %v2141 = vunpack.c.h.b16 %v1757
    %v2142 = vunpack.c.l.b16 %v1758
    %v2143 = vunpack.c.h.b16 %v1758
    %v2144 = vunpack.c.l.b16 %v1759
    %v2145 = vunpack.c.h.b16 %v1759
    %v2146 = vunpack.c.l.b16 %v1760
    %v2147 = vunpack.c.h.b16 %v1760
    %v2148 = vunpack.c.l.b16 %v1761
    %v2149 = vunpack.c.h.b16 %v1761
    %v2150 = vunpack.c.l.b16 %v1762
    %v2151 = vunpack.c.h.b16 %v1762
    %v2152 = vunpack.c.l.b16 %v1763
    %v2153 = vunpack.c.h.b16 %v1763
    %v2154 = vunpack.c.l.b16 %v1764
    %v2155 = vunpack.c.h.b16 %v1764
    %v2156 = vunpack.c.l.b16 %v1765
    %v2157 = vunpack.c.h.b16 %v1765
    %v2158 = vunpack.c.l.b16 %v1766
    %v2159 = vunpack.c.h.b16 %v1766
    %v2160 = vunpack.c.l.b16 %v1767
    %v2161 = vunpack.c.h.b16 %v1767
    %v2162 = vunpack.c.l.b16 %v1768
    %v2163 = vunpack.c.h.b16 %v1768
    %v2164 = vunpack.c.l.b16 %v1769
    %v2165 = vunpack.c.h.b16 %v1769
    %v2166 = vunpack.c.l.b16 %v1770
    %v2167 = vunpack.c.h.b16 %v1770
    %v2168 = vunpack.c.l.b16 %v1771
    %v2169 = vunpack.c.h.b16 %v1771
    %v2170 = vunpack.c.l.b16 %v1772
    %v2171 = vunpack.c.h.b16 %v1772
    %v2172 = vunpack.c.l.b16 %v1773
    %v2173 = vunpack.c.h.b16 %v1773
    %v2174 = vunpack.c.l.b16 %v1774
    %v2175 = vunpack.c.h.b16 %v1774
    %v2176 = vunpack.c.l.b16 %v1775
    %v2177 = vunpack.c.h.b16 %v1775
    %v2178 = vunpack.c.l.b16 %v1776
    %v2179 = vunpack.c.h.b16 %v1776
    %v2180 = vunpack.c.l.b16 %v1777
    %v2181 = vunpack.c.h.b16 %v1777
    %v2182 = vunpack.c.l.b16 %v1778
    %v2183 = vunpack.c.h.b16 %v1778
    %v2184 = vpack.c.b16 %v1932, %v1928
    %v2185 = vpack.c.b16 %v1933, %v1929
    %v2186 = vpack.c.b16 %v1934, %v1930
    %v2187 = vpack.c.b16 %v1935, %v1931
    %v2188 = vpack.c.b16 %v1940, %v1936
    %v2189 = vpack.c.b16 %v1941, %v1937
    %v2190 = vpack.c.b16 %v1942, %v1938
    %v2191 = vpack.c.b16 %v1943, %v1939
    %v2192 = vpack.c.b16 %v1948, %v1944
    %v2193 = vpack.c.b16 %v1949, %v1945
    %v2194 = vpack.c.b16 %v1950, %v1946
    %v2195 = vpack.c.b16 %v1951, %v1947
    %v2196 = vpack.c.b16 %v1956, %v1952
    %v2197 = vpack.c.b16 %v1957, %v1953
    %v2198 = vpack.c.b16 %v1958, %v1954
    %v2199 = vpack.c.b16 %v1959, %v1955
    %v2200 = vpack.c.b16 %v1964, %v1960
    %v2201 = vpack.c.b16 %v1965, %v1961
    %v2202 = vpack.c.b16 %v1966, %v1962
    %v2203 = vpack.c.b16 %v1967, %v1963
    %v2204 = vpack.c.b16 %v1972, %v1968
    %v2205 = vpack.c.b16 %v1973, %v1969
    %v2206 = vpack.c.b16 %v1974, %v1970
    %v2207 = vpack.c.b16 %v1975, %v1971
    %v2208 = vpack.c.b16 %v1980, %v1976
    %v2209 = vpack.c.b16 %v1981, %v1977
    %v2210 = vpack.c.b16 %v1982, %v1978
    %v2211 = vpack.c.b16 %v1983, %v1979
    %v2212 = vpack.c.b16 %v1988, %v1984
    %v2213 = vpack.c.b16 %v1989, %v1985
    %v2214 = vpack.c.b16 %v1990, %v1986
    %v2215 = vpack.c.b16 %v1991, %v1987
    %v2216 = vpack.c.b16 %v1996, %v1992
    %v2217 = vpack.c.b16 %v1997, %v1993
    %v2218 = vpack.c.b16 %v1998, %v1994
    %v2219 = vpack.c.b16 %v1999, %v1995
    %v2220 = vpack.c.b16 %v2004, %v2000
    %v2221 = vpack.c.b16 %v2005, %v2001
    %v2222 = vpack.c.b16 %v2006, %v2002
    %v2223 = vpack.c.b16 %v2007, %v2003
    %v2224 = vpack.c.b16 %v2012, %v2008
    %v2225 = vpack.c.b16 %v2013, %v2009
    %v2226 = vpack.c.b16 %v2014, %v2010
    %v2227 = vpack.c.b16 %v2015, %v2011
    %v2228 = vpack.c.b16 %v2020, %v2016
    %v2229 = vpack.c.b16 %v2021, %v2017
    %v2230 = vpack.c.b16 %v2022, %v2018
    %v2231 = vpack.c.b16 %v2023, %v2019
    %v2232 = vpack.c.b16 %v2028, %v2024
    %v2233 = vpack.c.b16 %v2029, %v2025
    %v2234 = vpack.c.b16 %v2030, %v2026
    %v2235 = vpack.c.b16 %v2031, %v2027
    %v2236 = vpack.c.b16 %v2036, %v2032
    %v2237 = vpack.c.b16 %v2037, %v2033
    %v2238 = vpack.c.b16 %v2038, %v2034
    %v2239 = vpack.c.b16 %v2039, %v2035
    %v2240 = vpack.c.b16 %v2044, %v2040
    %v2241 = vpack.c.b16 %v2045, %v2041
    %v2242 = vpack.c.b16 %v2046, %v2042
    %v2243 = vpack.c.b16 %v2047, %v2043
    %v2244 = vpack.c.b16 %v2052, %v2048
    %v2245 = vpack.c.b16 %v2053, %v2049
    %v2246 = vpack.c.b16 %v2054, %v2050
    %v2247 = vpack.c.b16 %v2055, %v2051
    %v2248 = vpack.c.b16 %v2060, %v2056
    %v2249 = vpack.c.b16 %v2061, %v2057
    %v2250 = vpack.c.b16 %v2062, %v2058
    %v2251 = vpack.c.b16 %v2063, %v2059
    %v2252 = vpack.c.b16 %v2068, %v2064
    %v2253 = vpack.c.b16 %v2069, %v2065
    %v2254 = vpack.c.b16 %v2070, %v2066
    %v2255 = vpack.c.b16 %v2071, %v2067
    %v2256 = vpack.c.b16 %v2076, %v2072
    %v2257 = vpack.c.b16 %v2077, %v2073
    %v2258 = vpack.c.b16 %v2078, %v2074
    %v2259 = vpack.c.b16 %v2079, %v2075
    %v2260 = vpack.c.b16 %v2084, %v2080
    %v2261 = vpack.c.b16 %v2085, %v2081
    %v2262 = vpack.c.b16 %v2086, %v2082
    %v2263 = vpack.c.b16 %v2087, %v2083
    %v2264 = vpack.c.b16 %v2092, %v2088
    %v2265 = vpack.c.b16 %v2093, %v2089
    %v2266 = vpack.c.b16 %v2094, %v2090
    %v2267 = vpack.c.b16 %v2095, %v2091
    %v2268 = vpack.c.b16 %v2100, %v2096
    %v2269 = vpack.c.b16 %v2101, %v2097
    %v2270 = vpack.c.b16 %v2102, %v2098
    %v2271 = vpack.c.b16 %v2103, %v2099
    %v2272 = vpack.c.b16 %v2108, %v2104
    %v2273 = vpack.c.b16 %v2109, %v2105
    %v2274 = vpack.c.b16 %v2110, %v2106
    %v2275 = vpack.c.b16 %v2111, %v2107
    %v2276 = vpack.c.b16 %v2116, %v2112
    %v2277 = vpack.c.b16 %v2117, %v2113
    %v2278 = vpack.c.b16 %v2118, %v2114
    %v2279 = vpack.c.b16 %v2119, %v2115
    %v2280 = vpack.c.b16 %v2124, %v2120
    %v2281 = vpack.c.b16 %v2125, %v2121
    %v2282 = vpack.c.b16 %v2126, %v2122
    %v2283 = vpack.c.b16 %v2127, %v2123
    %v2284 = vpack.c.b16 %v2132, %v2128
    %v2285 = vpack.c.b16 %v2133, %v2129
    %v2286 = vpack.c.b16 %v2134, %v2130
    %v2287 = vpack.c.b16 %v2135, %v2131
    %v2288 = vpack.c.b16 %v2140, %v2136
    %v2289 = vpack.c.b16 %v2141, %v2137
    %v2290 = vpack.c.b16 %v2142, %v2138
    %v2291 = vpack.c.b16 %v2143, %v2139
    %v2292 = vpack.c.b16 %v2148, %v2144
    %v2293 = vpack.c.b16 %v2149, %v2145
    %v2294 = vpack.c.b16 %v2150, %v2146
    %v2295 = vpack.c.b16 %v2151, %v2147
    %v2296 = vpack.c.b16 %v2156, %v2152
    %v2297 = vpack.c.b16 %v2157, %v2153
    %v2298 = vpack.c.b16 %v2158, %v2154
    %v2299 = vpack.c.b16 %v2159, %v2155
    %v2300 = vpack.c.b16 %v2164, %v2160
    %v2301 = vpack.c.b16 %v2165, %v2161
    %v2302 = vpack.c.b16 %v2166, %v2162
    %v2303 = vpack.c.b16 %v2167, %v2163
    %v2304 = vpack.c.b16 %v2172, %v2168
    %v2305 = vpack.c.b16 %v2173, %v2169
    %v2306 = vpack.c.b16 %v2174, %v2170
    %v2307 = vpack.c.b16 %v2175, %v2171
    %v2308 = vpack.c.b16 %v2180, %v2176
    %v2309 = vpack.c.b16 %v2181, %v2177
    %v2310 = vpack.c.b16 %v2182, %v2178
    %v2311 = vpack.c.b16 %v2183, %v2179
    %2440 = vmatprep.subr.bf16.mxu0 %v2213
    %2441 = vmatpush1.bf16.msra.mxu0 %v2212
    %2442 = vmatprep.subr.bf16.mxu0 %v2209
    %2443 = vmatpush1.bf16.msra.mxu0 %v2208
    %2444 = vmatprep.subr.bf16.mxu0 %v2205
    %2445 = vmatpush1.bf16.msra.mxu0 %v2204
    %2446 = vmatprep.subr.bf16.mxu0 %v2201
    %2447 = vmatpush1.bf16.msra.mxu0 %v2200
    %2448 = vmatprep.subr.bf16.mxu0 %v2197
    %2449 = vmatpush1.bf16.msra.mxu0 %v2196
    %2450 = vmatprep.subr.bf16.mxu0 %v2193
    %2451 = vmatpush1.bf16.msra.mxu0 %v2192
    %2452 = vmatprep.subr.bf16.mxu0 %v2189
    %2453 = vmatpush1.bf16.msra.mxu0 %v2188
    %2454 = vmatprep.subr.bf16.mxu0 %v2185
    %2455 = vmatpush1.bf16.msra.mxu0 %v2184
    %2456 = vmatprep.subr.bf16.mxu0 %v2245
    %2457 = vmatpush2.bf16.msra.mxu0 %v2244
    %2458 = vmatprep.subr.bf16.mxu0 %v2241
    %2459 = vmatpush2.bf16.msra.mxu0 %v2240
    %2460 = vmatprep.subr.bf16.mxu0 %v2237
    %2461 = vmatpush2.bf16.msra.mxu0 %v2236
    %2462 = vmatprep.subr.bf16.mxu0 %v2233
    %2463 = vmatpush2.bf16.msra.mxu0 %v2232
    %2464 = vmatprep.subr.bf16.mxu0 %v2229
    %2465 = vmatpush2.bf16.msra.mxu0 %v2228
    %2466 = vmatprep.subr.bf16.mxu0 %v2225
    %2467 = vmatpush2.bf16.msra.mxu0 %v2224
    %2468 = vmatprep.subr.bf16.mxu0 %v2221
    %2469 = vmatpush2.bf16.msra.mxu0 %v2220
    %2470 = vmatprep.subr.bf16.mxu0 %v2217
    %2471 = vmatpush2.bf16.msra.mxu0 %v2216
    %2472 = vmatprep.mubr.bf16.mxu0 %v1648
    %2473 = vmatmul.mubr.bf16.gmra.mxu0 %v1647
    %v2474 = vpop.f32.mrf.mxu0
    %v2475 = vadd.f32 %v1783, %v2474
    %v2476 = vpop.f32.mrf.mxu0
    %v2477 = vadd.f32 %v1787, %v2476
    %v2478 = vpop.f32.mrf.mxu0
    %v2479 = vpop.f32.mrf.mxu0
    %2480 = vdwg.mxu0
    %2481 = vmatprep.subr.bf16.mxu0 %v2277
    %2482 = vmatpush1.bf16.msra.mxu0 %v2276
    %2483 = vmatprep.subr.bf16.mxu0 %v2273
    %2484 = vmatpush1.bf16.msra.mxu0 %v2272
    %2485 = vmatprep.subr.bf16.mxu0 %v2269
    %2486 = vmatpush1.bf16.msra.mxu0 %v2268
    %2487 = vmatprep.subr.bf16.mxu0 %v2265
    %2488 = vmatpush1.bf16.msra.mxu0 %v2264
    %2489 = vmatprep.subr.bf16.mxu0 %v2261
    %2490 = vmatpush1.bf16.msra.mxu0 %v2260
    %2491 = vmatprep.subr.bf16.mxu0 %v2257
    %2492 = vmatpush1.bf16.msra.mxu0 %v2256
    %2493 = vmatprep.subr.bf16.mxu0 %v2253
    %2494 = vmatpush1.bf16.msra.mxu0 %v2252
    %2495 = vmatprep.subr.bf16.mxu0 %v2249
    %2496 = vmatpush1.bf16.msra.mxu0 %v2248
    %2497 = vmatprep.subr.bf16.mxu0 %v2309
    %2498 = vmatpush2.bf16.msra.mxu0 %v2308
    %2499 = vmatprep.subr.bf16.mxu0 %v2305
    %2500 = vmatpush2.bf16.msra.mxu0 %v2304
    %2501 = vmatprep.subr.bf16.mxu0 %v2301
    %2502 = vmatpush2.bf16.msra.mxu0 %v2300
    %2503 = vmatprep.subr.bf16.mxu0 %v2297
    %2504 = vmatpush2.bf16.msra.mxu0 %v2296
    %2505 = vmatprep.subr.bf16.mxu0 %v2293
    %2506 = vmatpush2.bf16.msra.mxu0 %v2292
    %2507 = vmatprep.subr.bf16.mxu0 %v2289
    %2508 = vmatpush2.bf16.msra.mxu0 %v2288
    %2509 = vmatprep.subr.bf16.mxu0 %v2285
    %2510 = vmatpush2.bf16.msra.mxu0 %v2284
    %2511 = vmatprep.subr.bf16.mxu0 %v2281
    %2512 = vmatpush2.bf16.msra.mxu0 %v2280
    %2513 = vmatprep.mubr.bf16.mxu0 %v1650
    %2514 = vmatmul.mubr.bf16.gmra.mxu0 %v1649
    %v2515 = vpop.f32.mrf.mxu0
    %v2516 = vadd.f32 %v2475, %v2515
    %v2517 = vpop.f32.mrf.mxu0
    %v2518 = vadd.f32 %v2477, %v2517
    %v2519 = vpop.f32.mrf.mxu0
    %v2520 = vpop.f32.mrf.mxu0
    %2521 = vdwg.mxu0
    %2522 = vmatprep.subr.bf16.mxu0 %v2215
    %2523 = vmatpush1.bf16.msra.mxu0 %v2214
    %2524 = vmatprep.subr.bf16.mxu0 %v2211
    %2525 = vmatpush1.bf16.msra.mxu0 %v2210
    %2526 = vmatprep.subr.bf16.mxu0 %v2207
    %2527 = vmatpush1.bf16.msra.mxu0 %v2206
    %2528 = vmatprep.subr.bf16.mxu0 %v2203
    %2529 = vmatpush1.bf16.msra.mxu0 %v2202
    %2530 = vmatprep.subr.bf16.mxu0 %v2199
    %2531 = vmatpush1.bf16.msra.mxu0 %v2198
    %2532 = vmatprep.subr.bf16.mxu0 %v2195
    %2533 = vmatpush1.bf16.msra.mxu0 %v2194
    %2534 = vmatprep.subr.bf16.mxu0 %v2191
    %2535 = vmatpush1.bf16.msra.mxu0 %v2190
    %2536 = vmatprep.subr.bf16.mxu0 %v2187
    %2537 = vmatpush1.bf16.msra.mxu0 %v2186
    %2538 = vmatprep.subr.bf16.mxu0 %v2247
    %2539 = vmatpush2.bf16.msra.mxu0 %v2246
    %2540 = vmatprep.subr.bf16.mxu0 %v2243
    %2541 = vmatpush2.bf16.msra.mxu0 %v2242
    %2542 = vmatprep.subr.bf16.mxu0 %v2239
    %2543 = vmatpush2.bf16.msra.mxu0 %v2238
    %2544 = vmatprep.subr.bf16.mxu0 %v2235
    %2545 = vmatpush2.bf16.msra.mxu0 %v2234
    %2546 = vmatprep.subr.bf16.mxu0 %v2231
    %2547 = vmatpush2.bf16.msra.mxu0 %v2230
    %2548 = vmatprep.subr.bf16.mxu0 %v2227
    %2549 = vmatpush2.bf16.msra.mxu0 %v2226
    %2550 = vmatprep.subr.bf16.mxu0 %v2223
    %2551 = vmatpush2.bf16.msra.mxu0 %v2222
    %2552 = vmatprep.subr.bf16.mxu0 %v2219
    %2553 = vmatpush2.bf16.msra.mxu0 %v2218
    %2554 = vmatprep.mubr.bf16.mxu0 %v1648
    %2555 = vmatmul.mubr.bf16.gmra.mxu0 %v1647
    %v2556 = vpop.f32.mrf.mxu0
    %v2557 = vadd.f32 %v1791, %v2556
    %v2558 = vpop.f32.mrf.mxu0
    %v2559 = vadd.f32 %v1795, %v2558
    %v2560 = vpop.f32.mrf.mxu0
    %v2561 = vpop.f32.mrf.mxu0
    %2562 = vdwg.mxu0
    %2563 = vmatprep.subr.bf16.mxu0 %v2279
    %2564 = vmatpush1.bf16.msra.mxu0 %v2278
    %2565 = vmatprep.subr.bf16.mxu0 %v2275
    %2566 = vmatpush1.bf16.msra.mxu0 %v2274
    %2567 = vmatprep.subr.bf16.mxu0 %v2271
    %2568 = vmatpush1.bf16.msra.mxu0 %v2270
    %2569 = vmatprep.subr.bf16.mxu0 %v2267
    %2570 = vmatpush1.bf16.msra.mxu0 %v2266
    %2571 = vmatprep.subr.bf16.mxu0 %v2263
    %2572 = vmatpush1.bf16.msra.mxu0 %v2262
    %2573 = vmatprep.subr.bf16.mxu0 %v2259
    %2574 = vmatpush1.bf16.msra.mxu0 %v2258
    %2575 = vmatprep.subr.bf16.mxu0 %v2255
    %2576 = vmatpush1.bf16.msra.mxu0 %v2254
    %2577 = vmatprep.subr.bf16.mxu0 %v2251
    %2578 = vmatpush1.bf16.msra.mxu0 %v2250
    %2579 = vmatprep.subr.bf16.mxu0 %v2311
    %2580 = vmatpush2.bf16.msra.mxu0 %v2310
    %2581 = vmatprep.subr.bf16.mxu0 %v2307
    %2582 = vmatpush2.bf16.msra.mxu0 %v2306
    %2583 = vmatprep.subr.bf16.mxu0 %v2303
    %2584 = vmatpush2.bf16.msra.mxu0 %v2302
    %2585 = vmatprep.subr.bf16.mxu0 %v2299
    %2586 = vmatpush2.bf16.msra.mxu0 %v2298
    %2587 = vmatprep.subr.bf16.mxu0 %v2295
    %2588 = vmatpush2.bf16.msra.mxu0 %v2294
    %2589 = vmatprep.subr.bf16.mxu0 %v2291
    %2590 = vmatpush2.bf16.msra.mxu0 %v2290
    %2591 = vmatprep.subr.bf16.mxu0 %v2287
    %2592 = vmatpush2.bf16.msra.mxu0 %v2286
    %2593 = vmatprep.subr.bf16.mxu0 %v2283
    %2594 = vmatpush2.bf16.msra.mxu0 %v2282
    %2595 = vmatprep.mubr.bf16.mxu0 %v1650
    %2596 = vmatmul.mubr.bf16.gmra.mxu0 %v1649
    %v2597 = vpop.f32.mrf.mxu0
    %v2598 = vadd.f32 %v2557, %v2597
    %v2599 = vpop.f32.mrf.mxu0
    %v2600 = vadd.f32 %v2559, %v2599
    %v2601 = vpop.f32.mrf.mxu0
    %v2602 = vpop.f32.mrf.mxu0
    %2603 = vdwg.mxu0
    %v2604 = vmax.f32 %v2516, 0.0
    %v2605 = vmax.f32 %v2518, 0.0
    %v2606 = vmax.f32 %v2598, 0.0
    %v2607 = vmax.f32 %v2600, 0.0
    %s2608 = scalar_lea.vmem [#allocation19], 3
    %v2609 = vld [vmem:[%s2608] ss:$8 sm:$0x3]
    %v2610 = vpack.c.bf16 %v2604, %v2604
    %v2611 = vpack.c.bf16 %v2605, %v2605
    %v2612 = vpack.c.bf16 %v2606, %v2606
    %v2613 = vpack.c.bf16 %v2607, %v2607
    %v2614 = vld [vmem:[#allocation11] sm:$0xff]
    %v2615 = vld [vmem:[#allocation11 + $0x8] sm:$0xff]
    %v2616 = vld [vmem:[#allocation11 + $0x10] sm:$0xff]
    %v2617 = vld [vmem:[#allocation11 + $0x18] sm:$0xff]
    %v2618 = vld [vmem:[#allocation11 + $0x20] sm:$0xff]
    %v2619 = vld [vmem:[#allocation11 + $0x28] sm:$0xff]
    %v2620 = vld [vmem:[#allocation11 + $0x30] sm:$0xff]
    %v2621 = vld [vmem:[#allocation11 + $0x38] sm:$0xff]
    %v2622 = vld [vmem:[#allocation11 + $0x40] sm:$0xff]
    %v2623 = vld [vmem:[#allocation11 + $0x48] sm:$0xff]
    %v2624 = vld [vmem:[#allocation11 + $0x50] sm:$0xff]
    %v2625 = vld [vmem:[#allocation11 + $0x58] sm:$0xff]
    %v2626 = vld [vmem:[#allocation11 + $0x60] sm:$0xff]
    %v2627 = vld [vmem:[#allocation11 + $0x68] sm:$0xff]
    %v2628 = vld [vmem:[#allocation11 + $0x70] sm:$0xff]
    %v2629 = vld [vmem:[#allocation11 + $0x78] sm:$0xff]
    %v2630 = vld [vmem:[#allocation11 + $0x80] sm:$0xff]
    %v2631 = vld [vmem:[#allocation11 + $0x88] sm:$0xff]
    %v2632 = vld [vmem:[#allocation11 + $0x90] sm:$0xff]
    %v2633 = vld [vmem:[#allocation11 + $0x98] sm:$0xff]
    %v2634 = vld [vmem:[#allocation11 + $0xa0] sm:$0xff]
    %v2635 = vld [vmem:[#allocation11 + $0xa8] sm:$0xff]
    %v2636 = vld [vmem:[#allocation11 + $0xb0] sm:$0xff]
    %v2637 = vld [vmem:[#allocation11 + $0xb8] sm:$0xff]
    %v2638 = vld [vmem:[#allocation11 + $0xc0] sm:$0xff]
    %v2639 = vld [vmem:[#allocation11 + $0xc8] sm:$0xff]
    %v2640 = vld [vmem:[#allocation11 + $0xd0] sm:$0xff]
    %v2641 = vld [vmem:[#allocation11 + $0xd8] sm:$0xff]
    %v2642 = vld [vmem:[#allocation11 + $0xe0] sm:$0xff]
    %v2643 = vld [vmem:[#allocation11 + $0xe8] sm:$0xff]
    %v2644 = vld [vmem:[#allocation11 + $0xf0] sm:$0xff]
    %v2645 = vld [vmem:[#allocation11 + $0xf8] sm:$0xff]
    %v2646 = vld [vmem:[#allocation11 + $0x100] sm:$0xff]
    %v2647 = vld [vmem:[#allocation11 + $0x108] sm:$0xff]
    %v2648 = vld [vmem:[#allocation11 + $0x110] sm:$0xff]
    %v2649 = vld [vmem:[#allocation11 + $0x118] sm:$0xff]
    %v2650 = vld [vmem:[#allocation11 + $0x120] sm:$0xff]
    %v2651 = vld [vmem:[#allocation11 + $0x128] sm:$0xff]
    %v2652 = vld [vmem:[#allocation11 + $0x130] sm:$0xff]
    %v2653 = vld [vmem:[#allocation11 + $0x138] sm:$0xff]
    %v2654 = vld [vmem:[#allocation11 + $0x140] sm:$0xff]
    %v2655 = vld [vmem:[#allocation11 + $0x148] sm:$0xff]
    %v2656 = vld [vmem:[#allocation11 + $0x150] sm:$0xff]
    %v2657 = vld [vmem:[#allocation11 + $0x158] sm:$0xff]
    %v2658 = vld [vmem:[#allocation11 + $0x160] sm:$0xff]
    %v2659 = vld [vmem:[#allocation11 + $0x168] sm:$0xff]
    %v2660 = vld [vmem:[#allocation11 + $0x170] sm:$0xff]
    %v2661 = vld [vmem:[#allocation11 + $0x178] sm:$0xff]
    %v2662 = vld [vmem:[#allocation11 + $0x180] sm:$0xff]
    %v2663 = vld [vmem:[#allocation11 + $0x188] sm:$0xff]
    %v2664 = vld [vmem:[#allocation11 + $0x190] sm:$0xff]
    %v2665 = vld [vmem:[#allocation11 + $0x198] sm:$0xff]
    %v2666 = vld [vmem:[#allocation11 + $0x1a0] sm:$0xff]
    %v2667 = vld [vmem:[#allocation11 + $0x1a8] sm:$0xff]
    %v2668 = vld [vmem:[#allocation11 + $0x1b0] sm:$0xff]
    %v2669 = vld [vmem:[#allocation11 + $0x1b8] sm:$0xff]
    %v2670 = vld [vmem:[#allocation11 + $0x1c0] sm:$0xff]
    %v2671 = vld [vmem:[#allocation11 + $0x1c8] sm:$0xff]
    %v2672 = vld [vmem:[#allocation11 + $0x1d0] sm:$0xff]
    %v2673 = vld [vmem:[#allocation11 + $0x1d8] sm:$0xff]
    %v2674 = vld [vmem:[#allocation11 + $0x1e0] sm:$0xff]
    %v2675 = vld [vmem:[#allocation11 + $0x1e8] sm:$0xff]
    %v2676 = vld [vmem:[#allocation11 + $0x1f0] sm:$0xff]
    %v2677 = vld [vmem:[#allocation11 + $0x1f8] sm:$0xff]
    %v2679 = vlaneseq
    %v2680 = vshrl.u32 %v2679, 7
    %v2681 = vsub.s32 0, %v2680
    %v2682 = vrot.slane %v2609, %v2681
    %v2683 = vlaneseq
    %v2684 = vshrl.u32 %v2683, 7
    %v2685 = vsub.s32 1, %v2684
    %v2686 = vrot.slane %v2609, %v2685
    %v2753 = vunpack.c.l.b16 %v2614
    %v2754 = vunpack.c.h.b16 %v2614
    %v2755 = vunpack.c.l.b16 %v2615
    %v2756 = vunpack.c.h.b16 %v2615
    %v2757 = vunpack.c.l.b16 %v2616
    %v2758 = vunpack.c.h.b16 %v2616
    %v2759 = vunpack.c.l.b16 %v2617
    %v2760 = vunpack.c.h.b16 %v2617
    %v2761 = vunpack.c.l.b16 %v2618
    %v2762 = vunpack.c.h.b16 %v2618
    %v2763 = vunpack.c.l.b16 %v2619
    %v2764 = vunpack.c.h.b16 %v2619
    %v2765 = vunpack.c.l.b16 %v2620
    %v2766 = vunpack.c.h.b16 %v2620
    %v2767 = vunpack.c.l.b16 %v2621
    %v2768 = vunpack.c.h.b16 %v2621
    %v2769 = vunpack.c.l.b16 %v2622
    %v2770 = vunpack.c.h.b16 %v2622
    %v2771 = vunpack.c.l.b16 %v2623
    %v2772 = vunpack.c.h.b16 %v2623
    %v2773 = vunpack.c.l.b16 %v2624
    %v2774 = vunpack.c.h.b16 %v2624
    %v2775 = vunpack.c.l.b16 %v2625
    %v2776 = vunpack.c.h.b16 %v2625
    %v2777 = vunpack.c.l.b16 %v2626
    %v2778 = vunpack.c.h.b16 %v2626
    %v2779 = vunpack.c.l.b16 %v2627
    %v2780 = vunpack.c.h.b16 %v2627
    %v2781 = vunpack.c.l.b16 %v2628
    %v2782 = vunpack.c.h.b16 %v2628
    %v2783 = vunpack.c.l.b16 %v2629
    %v2784 = vunpack.c.h.b16 %v2629
    %v2785 = vunpack.c.l.b16 %v2630
    %v2786 = vunpack.c.h.b16 %v2630
    %v2787 = vunpack.c.l.b16 %v2631
    %v2788 = vunpack.c.h.b16 %v2631
    %v2789 = vunpack.c.l.b16 %v2632
    %v2790 = vunpack.c.h.b16 %v2632
    %v2791 = vunpack.c.l.b16 %v2633
    %v2792 = vunpack.c.h.b16 %v2633
    %v2793 = vunpack.c.l.b16 %v2634
    %v2794 = vunpack.c.h.b16 %v2634
    %v2795 = vunpack.c.l.b16 %v2635
    %v2796 = vunpack.c.h.b16 %v2635
    %v2797 = vunpack.c.l.b16 %v2636
    %v2798 = vunpack.c.h.b16 %v2636
    %v2799 = vunpack.c.l.b16 %v2637
    %v2800 = vunpack.c.h.b16 %v2637
    %v2801 = vunpack.c.l.b16 %v2638
    %v2802 = vunpack.c.h.b16 %v2638
    %v2803 = vunpack.c.l.b16 %v2639
    %v2804 = vunpack.c.h.b16 %v2639
    %v2805 = vunpack.c.l.b16 %v2640
    %v2806 = vunpack.c.h.b16 %v2640
    %v2807 = vunpack.c.l.b16 %v2641
    %v2808 = vunpack.c.h.b16 %v2641
    %v2809 = vunpack.c.l.b16 %v2642
    %v2810 = vunpack.c.h.b16 %v2642
    %v2811 = vunpack.c.l.b16 %v2643
    %v2812 = vunpack.c.h.b16 %v2643
    %v2813 = vunpack.c.l.b16 %v2644
    %v2814 = vunpack.c.h.b16 %v2644
    %v2815 = vunpack.c.l.b16 %v2645
    %v2816 = vunpack.c.h.b16 %v2645
    %v2817 = vunpack.c.l.b16 %v2646
    %v2818 = vunpack.c.h.b16 %v2646
    %v2819 = vunpack.c.l.b16 %v2647
    %v2820 = vunpack.c.h.b16 %v2647
    %v2821 = vunpack.c.l.b16 %v2648
    %v2822 = vunpack.c.h.b16 %v2648
    %v2823 = vunpack.c.l.b16 %v2649
    %v2824 = vunpack.c.h.b16 %v2649
    %v2825 = vunpack.c.l.b16 %v2650
    %v2826 = vunpack.c.h.b16 %v2650
    %v2827 = vunpack.c.l.b16 %v2651
    %v2828 = vunpack.c.h.b16 %v2651
    %v2829 = vunpack.c.l.b16 %v2652
    %v2830 = vunpack.c.h.b16 %v2652
    %v2831 = vunpack.c.l.b16 %v2653
    %v2832 = vunpack.c.h.b16 %v2653
    %v2833 = vunpack.c.l.b16 %v2654
    %v2834 = vunpack.c.h.b16 %v2654
    %v2835 = vunpack.c.l.b16 %v2655
    %v2836 = vunpack.c.h.b16 %v2655
    %v2837 = vunpack.c.l.b16 %v2656
    %v2838 = vunpack.c.h.b16 %v2656
    %v2839 = vunpack.c.l.b16 %v2657
    %v2840 = vunpack.c.h.b16 %v2657
    %v2841 = vunpack.c.l.b16 %v2658
    %v2842 = vunpack.c.h.b16 %v2658
    %v2843 = vunpack.c.l.b16 %v2659
    %v2844 = vunpack.c.h.b16 %v2659
    %v2845 = vunpack.c.l.b16 %v2660
    %v2846 = vunpack.c.h.b16 %v2660
    %v2847 = vunpack.c.l.b16 %v2661
    %v2848 = vunpack.c.h.b16 %v2661
    %v2849 = vunpack.c.l.b16 %v2662
    %v2850 = vunpack.c.h.b16 %v2662
    %v2851 = vunpack.c.l.b16 %v2663
    %v2852 = vunpack.c.h.b16 %v2663
    %v2853 = vunpack.c.l.b16 %v2664
    %v2854 = vunpack.c.h.b16 %v2664
    %v2855 = vunpack.c.l.b16 %v2665
    %v2856 = vunpack.c.h.b16 %v2665
    %v2857 = vunpack.c.l.b16 %v2666
    %v2858 = vunpack.c.h.b16 %v2666
    %v2859 = vunpack.c.l.b16 %v2667
    %v2860 = vunpack.c.h.b16 %v2667
    %v2861 = vunpack.c.l.b16 %v2668
    %v2862 = vunpack.c.h.b16 %v2668
    %v2863 = vunpack.c.l.b16 %v2669
    %v2864 = vunpack.c.h.b16 %v2669
    %v2865 = vunpack.c.l.b16 %v2670
    %v2866 = vunpack.c.h.b16 %v2670
    %v2867 = vunpack.c.l.b16 %v2671
    %v2868 = vunpack.c.h.b16 %v2671
    %v2869 = vunpack.c.l.b16 %v2672
    %v2870 = vunpack.c.h.b16 %v2672
    %v2871 = vunpack.c.l.b16 %v2673
    %v2872 = vunpack.c.h.b16 %v2673
    %v2873 = vunpack.c.l.b16 %v2674
    %v2874 = vunpack.c.h.b16 %v2674
    %v2875 = vunpack.c.l.b16 %v2675
    %v2876 = vunpack.c.h.b16 %v2675
    %v2877 = vunpack.c.l.b16 %v2676
    %v2878 = vunpack.c.h.b16 %v2676
    %v2879 = vunpack.c.l.b16 %v2677
    %v2880 = vunpack.c.h.b16 %v2677
    %v2881 = vpack.c.b16 %v2755, %v2753
    %v2882 = vpack.c.b16 %v2756, %v2754
    %v2883 = vpack.c.b16 %v2759, %v2757
    %v2884 = vpack.c.b16 %v2760, %v2758
    %v2885 = vpack.c.b16 %v2763, %v2761
    %v2886 = vpack.c.b16 %v2764, %v2762
    %v2887 = vpack.c.b16 %v2767, %v2765
    %v2888 = vpack.c.b16 %v2768, %v2766
    %v2889 = vpack.c.b16 %v2771, %v2769
    %v2890 = vpack.c.b16 %v2772, %v2770
    %v2891 = vpack.c.b16 %v2775, %v2773
    %v2892 = vpack.c.b16 %v2776, %v2774
    %v2893 = vpack.c.b16 %v2779, %v2777
    %v2894 = vpack.c.b16 %v2780, %v2778
    %v2895 = vpack.c.b16 %v2783, %v2781
    %v2896 = vpack.c.b16 %v2784, %v2782
    %v2897 = vpack.c.b16 %v2787, %v2785
    %v2898 = vpack.c.b16 %v2788, %v2786
    %v2899 = vpack.c.b16 %v2791, %v2789
    %v2900 = vpack.c.b16 %v2792, %v2790
    %v2901 = vpack.c.b16 %v2795, %v2793
    %v2902 = vpack.c.b16 %v2796, %v2794
    %v2903 = vpack.c.b16 %v2799, %v2797
    %v2904 = vpack.c.b16 %v2800, %v2798
    %v2905 = vpack.c.b16 %v2803, %v2801
    %v2906 = vpack.c.b16 %v2804, %v2802
    %v2907 = vpack.c.b16 %v2807, %v2805
    %v2908 = vpack.c.b16 %v2808, %v2806
    %v2909 = vpack.c.b16 %v2811, %v2809
    %v2910 = vpack.c.b16 %v2812, %v2810
    %v2911 = vpack.c.b16 %v2815, %v2813
    %v2912 = vpack.c.b16 %v2816, %v2814
    %v2913 = vpack.c.b16 %v2819, %v2817
    %v2914 = vpack.c.b16 %v2820, %v2818
    %v2915 = vpack.c.b16 %v2823, %v2821
    %v2916 = vpack.c.b16 %v2824, %v2822
    %v2917 = vpack.c.b16 %v2827, %v2825
    %v2918 = vpack.c.b16 %v2828, %v2826
    %v2919 = vpack.c.b16 %v2831, %v2829
    %v2920 = vpack.c.b16 %v2832, %v2830
    %v2921 = vpack.c.b16 %v2835, %v2833
    %v2922 = vpack.c.b16 %v2836, %v2834
    %v2923 = vpack.c.b16 %v2839, %v2837
    %v2924 = vpack.c.b16 %v2840, %v2838
    %v2925 = vpack.c.b16 %v2843, %v2841
    %v2926 = vpack.c.b16 %v2844, %v2842
    %v2927 = vpack.c.b16 %v2847, %v2845
    %v2928 = vpack.c.b16 %v2848, %v2846
    %v2929 = vpack.c.b16 %v2851, %v2849
    %v2930 = vpack.c.b16 %v2852, %v2850
    %v2931 = vpack.c.b16 %v2855, %v2853
    %v2932 = vpack.c.b16 %v2856, %v2854
    %v2933 = vpack.c.b16 %v2859, %v2857
    %v2934 = vpack.c.b16 %v2860, %v2858
    %v2935 = vpack.c.b16 %v2863, %v2861
    %v2936 = vpack.c.b16 %v2864, %v2862
    %v2937 = vpack.c.b16 %v2867, %v2865
    %v2938 = vpack.c.b16 %v2868, %v2866
    %v2939 = vpack.c.b16 %v2871, %v2869
    %v2940 = vpack.c.b16 %v2872, %v2870
    %v2941 = vpack.c.b16 %v2875, %v2873
    %v2942 = vpack.c.b16 %v2876, %v2874
    %v2943 = vpack.c.b16 %v2879, %v2877
    %v2944 = vpack.c.b16 %v2880, %v2878
    %3009 = vmatprep.subr.bf16.mxu0 %v2896
    %3010 = vmatpush1.bf16.msra.mxu0 %v2895
    %3011 = vmatprep.subr.bf16.mxu0 %v2894
    %3012 = vmatpush1.bf16.msra.mxu0 %v2893
    %3013 = vmatprep.subr.bf16.mxu0 %v2892
    %3014 = vmatpush1.bf16.msra.mxu0 %v2891
    %3015 = vmatprep.subr.bf16.mxu0 %v2890
    %3016 = vmatpush1.bf16.msra.mxu0 %v2889
    %3017 = vmatprep.subr.bf16.mxu0 %v2888
    %3018 = vmatpush1.bf16.msra.mxu0 %v2887
    %3019 = vmatprep.subr.bf16.mxu0 %v2886
    %3020 = vmatpush1.bf16.msra.mxu0 %v2885
    %3021 = vmatprep.subr.bf16.mxu0 %v2884
    %3022 = vmatpush1.bf16.msra.mxu0 %v2883
    %3023 = vmatprep.subr.bf16.mxu0 %v2882
    %3024 = vmatpush1.bf16.msra.mxu0 %v2881
    %3025 = vmatprep.subr.bf16.mxu0 %v2912
    %3026 = vmatpush2.bf16.msra.mxu0 %v2911
    %3027 = vmatprep.subr.bf16.mxu0 %v2910
    %3028 = vmatpush2.bf16.msra.mxu0 %v2909
    %3029 = vmatprep.subr.bf16.mxu0 %v2908
    %3030 = vmatpush2.bf16.msra.mxu0 %v2907
    %3031 = vmatprep.subr.bf16.mxu0 %v2906
    %3032 = vmatpush2.bf16.msra.mxu0 %v2905
    %3033 = vmatprep.subr.bf16.mxu0 %v2904
    %3034 = vmatpush2.bf16.msra.mxu0 %v2903
    %3035 = vmatprep.subr.bf16.mxu0 %v2902
    %3036 = vmatpush2.bf16.msra.mxu0 %v2901
    %3037 = vmatprep.subr.bf16.mxu0 %v2900
    %3038 = vmatpush2.bf16.msra.mxu0 %v2899
    %3039 = vmatprep.subr.bf16.mxu0 %v2898
    %3040 = vmatpush2.bf16.msra.mxu0 %v2897
    %3041 = vmatprep.mubr.bf16.mxu0 %v2611
    %3042 = vmatmul.mubr.bf16.gmra.mxu0 %v2610
    %v3043 = vpop.f32.mrf.mxu0
    %v3044 = vadd.f32 %v2682, %v3043
    %v3045 = vpop.f32.mrf.mxu0
    %v3046 = vadd.f32 %v2686, %v3045
    %v3047 = vpop.f32.mrf.mxu0
    %v3048 = vpop.f32.mrf.mxu0
    %3049 = vdwg.mxu0
    %3050 = vmatprep.subr.bf16.mxu0 %v2928
    %3051 = vmatpush1.bf16.msra.mxu0 %v2927
    %3052 = vmatprep.subr.bf16.mxu0 %v2926
    %3053 = vmatpush1.bf16.msra.mxu0 %v2925
    %3054 = vmatprep.subr.bf16.mxu0 %v2924
    %3055 = vmatpush1.bf16.msra.mxu0 %v2923
    %3056 = vmatprep.subr.bf16.mxu0 %v2922
    %3057 = vmatpush1.bf16.msra.mxu0 %v2921
    %3058 = vmatprep.subr.bf16.mxu0 %v2920
    %3059 = vmatpush1.bf16.msra.mxu0 %v2919
    %3060 = vmatprep.subr.bf16.mxu0 %v2918
    %3061 = vmatpush1.bf16.msra.mxu0 %v2917
    %3062 = vmatprep.subr.bf16.mxu0 %v2916
    %3063 = vmatpush1.bf16.msra.mxu0 %v2915
    %3064 = vmatprep.subr.bf16.mxu0 %v2914
    %3065 = vmatpush1.bf16.msra.mxu0 %v2913
    %3066 = vmatprep.subr.bf16.mxu0 %v2944
    %3067 = vmatpush2.bf16.msra.mxu0 %v2943
    %3068 = vmatprep.subr.bf16.mxu0 %v2942
    %3069 = vmatpush2.bf16.msra.mxu0 %v2941
    %3070 = vmatprep.subr.bf16.mxu0 %v2940
    %3071 = vmatpush2.bf16.msra.mxu0 %v2939
    %3072 = vmatprep.subr.bf16.mxu0 %v2938
    %3073 = vmatpush2.bf16.msra.mxu0 %v2937
    %3074 = vmatprep.subr.bf16.mxu0 %v2936
    %3075 = vmatpush2.bf16.msra.mxu0 %v2935
    %3076 = vmatprep.subr.bf16.mxu0 %v2934
    %3077 = vmatpush2.bf16.msra.mxu0 %v2933
    %3078 = vmatprep.subr.bf16.mxu0 %v2932
    %3079 = vmatpush2.bf16.msra.mxu0 %v2931
    %3080 = vmatprep.subr.bf16.mxu0 %v2930
    %3081 = vmatpush2.bf16.msra.mxu0 %v2929
    %3082 = vmatprep.mubr.bf16.mxu0 %v2613
    %3083 = vmatmul.mubr.bf16.gmra.mxu0 %v2612
    %v3084 = vpop.f32.mrf.mxu0
    %v3085 = vadd.f32 %v3044, %v3084
    %v3086 = vpop.f32.mrf.mxu0
    %v3087 = vadd.f32 %v3046, %v3086
    %v3088 = vpop.f32.mrf.mxu0
    %v3089 = vpop.f32.mrf.mxu0
    %3090 = vdwg.mxu0
    %v3091 = vld [vmem:[#allocation5] sm:$0xff]
    %v3092 = vmul.f32 %v3087, 0.5
    %v3093 = vmul.f32 %v3092, 1.442695
    %v3094 = vpow.pop %v3093
    %v3095 = vmul.f32 %v3091, %v3094
    %v3096 = vadd.f32 %v3085, %v3095
    %s3097 = scalar_lea.vmem [#allocation19], 4
    %v3098 = vld [vmem:[%s3097] ss:$8 sm:$0xf]
    %v3099 = vpack.c.bf16 %v3096, %v3096
    %v3100 = vld [vmem:[#allocation13] sm:$0xff]
    %v3101 = vld [vmem:[#allocation13 + $0x8] sm:$0xff]
    %v3102 = vld [vmem:[#allocation13 + $0x10] sm:$0xff]
    %v3103 = vld [vmem:[#allocation13 + $0x18] sm:$0xff]
    %v3104 = vld [vmem:[#allocation13 + $0x20] sm:$0xff]
    %v3105 = vld [vmem:[#allocation13 + $0x28] sm:$0xff]
    %v3106 = vld [vmem:[#allocation13 + $0x30] sm:$0xff]
    %v3107 = vld [vmem:[#allocation13 + $0x38] sm:$0xff]
    %v3108 = vld [vmem:[#allocation13 + $0x40] sm:$0xff]
    %v3109 = vld [vmem:[#allocation13 + $0x48] sm:$0xff]
    %v3110 = vld [vmem:[#allocation13 + $0x50] sm:$0xff]
    %v3111 = vld [vmem:[#allocation13 + $0x58] sm:$0xff]
    %v3112 = vld [vmem:[#allocation13 + $0x60] sm:$0xff]
    %v3113 = vld [vmem:[#allocation13 + $0x68] sm:$0xff]
    %v3114 = vld [vmem:[#allocation13 + $0x70] sm:$0xff]
    %v3115 = vld [vmem:[#allocation13 + $0x78] sm:$0xff]
    %v3116 = vld [vmem:[#allocation13 + $0x80] sm:$0xff]
    %v3117 = vld [vmem:[#allocation13 + $0x88] sm:$0xff]
    %v3118 = vld [vmem:[#allocation13 + $0x90] sm:$0xff]
    %v3119 = vld [vmem:[#allocation13 + $0x98] sm:$0xff]
    %v3120 = vld [vmem:[#allocation13 + $0xa0] sm:$0xff]
    %v3121 = vld [vmem:[#allocation13 + $0xa8] sm:$0xff]
    %v3122 = vld [vmem:[#allocation13 + $0xb0] sm:$0xff]
    %v3123 = vld [vmem:[#allocation13 + $0xb8] sm:$0xff]
    %v3124 = vld [vmem:[#allocation13 + $0xc0] sm:$0xff]
    %v3125 = vld [vmem:[#allocation13 + $0xc8] sm:$0xff]
    %v3126 = vld [vmem:[#allocation13 + $0xd0] sm:$0xff]
    %v3127 = vld [vmem:[#allocation13 + $0xd8] sm:$0xff]
    %v3128 = vld [vmem:[#allocation13 + $0xe0] sm:$0xff]
    %v3129 = vld [vmem:[#allocation13 + $0xe8] sm:$0xff]
    %v3130 = vld [vmem:[#allocation13 + $0xf0] sm:$0xff]
    %v3131 = vld [vmem:[#allocation13 + $0xf8] sm:$0xff]
    %v3133 = vlaneseq
    %v3134 = vshrl.u32 %v3133, 7
    %v3135 = vsub.s32 0, %v3134
    %v3136 = vrot.slane %v3098, %v3135
    %v3137 = vlaneseq
    %v3138 = vshrl.u32 %v3137, 7
    %v3139 = vsub.s32 1, %v3138
    %v3140 = vrot.slane %v3098, %v3139
    %v3141 = vlaneseq
    %v3142 = vshrl.u32 %v3141, 7
    %v3143 = vsub.s32 2, %v3142
    %v3144 = vrot.slane %v3098, %v3143
    %v3145 = vlaneseq
    %v3146 = vshrl.u32 %v3145, 7
    %v3147 = vsub.s32 3, %v3146
    %v3148 = vrot.slane %v3098, %v3147
    %v3185 = vunpack.c.l.b16 %v3100
    %v3186 = vunpack.c.h.b16 %v3100
    %v3187 = vunpack.c.l.b16 %v3101
    %v3188 = vunpack.c.h.b16 %v3101
    %v3189 = vunpack.c.l.b16 %v3102
    %v3190 = vunpack.c.h.b16 %v3102
    %v3191 = vunpack.c.l.b16 %v3103
    %v3192 = vunpack.c.h.b16 %v3103
    %v3193 = vunpack.c.l.b16 %v3104
    %v3194 = vunpack.c.h.b16 %v3104
    %v3195 = vunpack.c.l.b16 %v3105
    %v3196 = vunpack.c.h.b16 %v3105
    %v3197 = vunpack.c.l.b16 %v3106
    %v3198 = vunpack.c.h.b16 %v3106
    %v3199 = vunpack.c.l.b16 %v3107
    %v3200 = vunpack.c.h.b16 %v3107
    %v3201 = vunpack.c.l.b16 %v3108
    %v3202 = vunpack.c.h.b16 %v3108
    %v3203 = vunpack.c.l.b16 %v3109
    %v3204 = vunpack.c.h.b16 %v3109
    %v3205 = vunpack.c.l.b16 %v3110
    %v3206 = vunpack.c.h.b16 %v3110
    %v3207 = vunpack.c.l.b16 %v3111
    %v3208 = vunpack.c.h.b16 %v3111
    %v3209 = vunpack.c.l.b16 %v3112
    %v3210 = vunpack.c.h.b16 %v3112
    %v3211 = vunpack.c.l.b16 %v3113
    %v3212 = vunpack.c.h.b16 %v3113
    %v3213 = vunpack.c.l.b16 %v3114
    %v3214 = vunpack.c.h.b16 %v3114
    %v3215 = vunpack.c.l.b16 %v3115
    %v3216 = vunpack.c.h.b16 %v3115
    %v3217 = vunpack.c.l.b16 %v3116
    %v3218 = vunpack.c.h.b16 %v3116
    %v3219 = vunpack.c.l.b16 %v3117
    %v3220 = vunpack.c.h.b16 %v3117
    %v3221 = vunpack.c.l.b16 %v3118
    %v3222 = vunpack.c.h.b16 %v3118
    %v3223 = vunpack.c.l.b16 %v3119
    %v3224 = vunpack.c.h.b16 %v3119
    %v3225 = vunpack.c.l.b16 %v3120
    %v3226 = vunpack.c.h.b16 %v3120
    %v3227 = vunpack.c.l.b16 %v3121
    %v3228 = vunpack.c.h.b16 %v3121
    %v3229 = vunpack.c.l.b16 %v3122
    %v3230 = vunpack.c.h.b16 %v3122
    %v3231 = vunpack.c.l.b16 %v3123
    %v3232 = vunpack.c.h.b16 %v3123
    %v3233 = vunpack.c.l.b16 %v3124
    %v3234 = vunpack.c.h.b16 %v3124
    %v3235 = vunpack.c.l.b16 %v3125
    %v3236 = vunpack.c.h.b16 %v3125
    %v3237 = vunpack.c.l.b16 %v3126
    %v3238 = vunpack.c.h.b16 %v3126
    %v3239 = vunpack.c.l.b16 %v3127
    %v3240 = vunpack.c.h.b16 %v3127
    %v3241 = vunpack.c.l.b16 %v3128
    %v3242 = vunpack.c.h.b16 %v3128
    %v3243 = vunpack.c.l.b16 %v3129
    %v3244 = vunpack.c.h.b16 %v3129
    %v3245 = vunpack.c.l.b16 %v3130
    %v3246 = vunpack.c.h.b16 %v3130
    %v3247 = vunpack.c.l.b16 %v3131
    %v3248 = vunpack.c.h.b16 %v3131
    %v3249 = vpack.c.b16 %v3189, %v3185
    %v3250 = vpack.c.b16 %v3190, %v3186
    %v3251 = vpack.c.b16 %v3191, %v3187
    %v3252 = vpack.c.b16 %v3192, %v3188
    %v3253 = vpack.c.b16 %v3197, %v3193
    %v3254 = vpack.c.b16 %v3198, %v3194
    %v3255 = vpack.c.b16 %v3199, %v3195
    %v3256 = vpack.c.b16 %v3200, %v3196
    %v3257 = vpack.c.b16 %v3205, %v3201
    %v3258 = vpack.c.b16 %v3206, %v3202
    %v3259 = vpack.c.b16 %v3207, %v3203
    %v3260 = vpack.c.b16 %v3208, %v3204
    %v3261 = vpack.c.b16 %v3213, %v3209
    %v3262 = vpack.c.b16 %v3214, %v3210
    %v3263 = vpack.c.b16 %v3215, %v3211
    %v3264 = vpack.c.b16 %v3216, %v3212
    %v3265 = vpack.c.b16 %v3221, %v3217
    %v3266 = vpack.c.b16 %v3222, %v3218
    %v3267 = vpack.c.b16 %v3223, %v3219
    %v3268 = vpack.c.b16 %v3224, %v3220
    %v3269 = vpack.c.b16 %v3229, %v3225
    %v3270 = vpack.c.b16 %v3230, %v3226
    %v3271 = vpack.c.b16 %v3231, %v3227
    %v3272 = vpack.c.b16 %v3232, %v3228
    %v3273 = vpack.c.b16 %v3237, %v3233
    %v3274 = vpack.c.b16 %v3238, %v3234
    %v3275 = vpack.c.b16 %v3239, %v3235
    %v3276 = vpack.c.b16 %v3240, %v3236
    %v3277 = vpack.c.b16 %v3245, %v3241
    %v3278 = vpack.c.b16 %v3246, %v3242
    %v3279 = vpack.c.b16 %v3247, %v3243
    %v3280 = vpack.c.b16 %v3248, %v3244
    %3313 = vmatprep.subr.bf16.mxu0 %v3278
    %3314 = vmatpush1.bf16.msra.mxu0 %v3277
    %3315 = vmatprep.subr.bf16.mxu0 %v3274
    %3316 = vmatpush1.bf16.msra.mxu0 %v3273
    %3317 = vmatprep.subr.bf16.mxu0 %v3270
    %3318 = vmatpush1.bf16.msra.mxu0 %v3269
    %3319 = vmatprep.subr.bf16.mxu0 %v3266
    %3320 = vmatpush1.bf16.msra.mxu0 %v3265
    %3321 = vmatprep.subr.bf16.mxu0 %v3262
    %3322 = vmatpush1.bf16.msra.mxu0 %v3261
    %3323 = vmatprep.subr.bf16.mxu0 %v3258
    %3324 = vmatpush1.bf16.msra.mxu0 %v3257
    %3325 = vmatprep.subr.bf16.mxu0 %v3254
    %3326 = vmatpush1.bf16.msra.mxu0 %v3253
    %3327 = vmatprep.subr.bf16.mxu0 %v3250
    %3328 = vmatpush1.bf16.msra.mxu0 %v3249
    %3329 = vmatprep.subr.bf16.mxu0 0
    %3330 = vmatpush2.bf16.msra.mxu0 0
    %3331 = vmatprep.subr.bf16.mxu0 0
    %3332 = vmatpush2.bf16.msra.mxu0 0
    %3333 = vmatprep.subr.bf16.mxu0 0
    %3334 = vmatpush2.bf16.msra.mxu0 0
    %3335 = vmatprep.subr.bf16.mxu0 0
    %3336 = vmatpush2.bf16.msra.mxu0 0
    %3337 = vmatprep.subr.bf16.mxu0 0
    %3338 = vmatpush2.bf16.msra.mxu0 0
    %3339 = vmatprep.subr.bf16.mxu0 0
    %3340 = vmatpush2.bf16.msra.mxu0 0
    %3341 = vmatprep.subr.bf16.mxu0 0
    %3342 = vmatpush2.bf16.msra.mxu0 0
    %3343 = vmatprep.subr.bf16.mxu0 0
    %3344 = vmatpush2.bf16.msra.mxu0 0
    %3345 = vmatprep.mubr.bf16.mxu0 0
    %3346 = vmatmul.mubr.bf16.gmra.mxu0 %v3099
    %v3347 = vpop.f32.mrf.mxu0
    %v3348 = vadd.f32 %v3136, %v3347
    %v3349 = vpop.f32.mrf.mxu0
    %v3350 = vadd.f32 %v3140, %v3349
    %v3351 = vpop.f32.mrf.mxu0
    %v3352 = vpop.f32.mrf.mxu0
    %3353 = vdwg.mxu0
    %3354 = vmatprep.subr.bf16.mxu0 %v3280
    %3355 = vmatpush1.bf16.msra.mxu0 %v3279
    %3356 = vmatprep.subr.bf16.mxu0 %v3276
    %3357 = vmatpush1.bf16.msra.mxu0 %v3275
    %3358 = vmatprep.subr.bf16.mxu0 %v3272
    %3359 = vmatpush1.bf16.msra.mxu0 %v3271
    %3360 = vmatprep.subr.bf16.mxu0 %v3268
    %3361 = vmatpush1.bf16.msra.mxu0 %v3267
    %3362 = vmatprep.subr.bf16.mxu0 %v3264
    %3363 = vmatpush1.bf16.msra.mxu0 %v3263
    %3364 = vmatprep.subr.bf16.mxu0 %v3260
    %3365 = vmatpush1.bf16.msra.mxu0 %v3259
    %3366 = vmatprep.subr.bf16.mxu0 %v3256
    %3367 = vmatpush1.bf16.msra.mxu0 %v3255
    %3368 = vmatprep.subr.bf16.mxu0 %v3252
    %3369 = vmatpush1.bf16.msra.mxu0 %v3251
    %3370 = vmatprep.subr.bf16.mxu0 0
    %3371 = vmatpush2.bf16.msra.mxu0 0
    %3372 = vmatprep.subr.bf16.mxu0 0
    %3373 = vmatpush2.bf16.msra.mxu0 0
    %3374 = vmatprep.subr.bf16.mxu0 0
    %3375 = vmatpush2.bf16.msra.mxu0 0
    %3376 = vmatprep.subr.bf16.mxu0 0
    %3377 = vmatpush2.bf16.msra.mxu0 0
    %3378 = vmatprep.subr.bf16.mxu0 0
    %3379 = vmatpush2.bf16.msra.mxu0 0
    %3380 = vmatprep.subr.bf16.mxu0 0
    %3381 = vmatpush2.bf16.msra.mxu0 0
    %3382 = vmatprep.subr.bf16.mxu0 0
    %3383 = vmatpush2.bf16.msra.mxu0 0
    %3384 = vmatprep.subr.bf16.mxu0 0
    %3385 = vmatpush2.bf16.msra.mxu0 0
    %3386 = vmatprep.mubr.bf16.mxu0 0
    %3387 = vmatmul.mubr.bf16.gmra.mxu0 %v3099
    %v3388 = vpop.f32.mrf.mxu0
    %v3389 = vadd.f32 %v3144, %v3388
    %v3390 = vpop.f32.mrf.mxu0
    %v3391 = vadd.f32 %v3148, %v3390
    %v3392 = vpop.f32.mrf.mxu0
    %v3393 = vpop.f32.mrf.mxu0
    %3394 = vdwg.mxu0
    %v3395 = vmax.f32 %v3348, 0.0
    %v3396 = vmax.f32 %v3350, 0.0
    %v3397 = vmax.f32 %v3389, 0.0
    %v3398 = vmax.f32 %v3391, 0.0
    %s3399 = scalar_lea.vmem [#allocation19], 5
    %v3400 = vld [vmem:[%s3399] ss:$8 sm:$0xf]
    %v3401 = vpack.c.bf16 %v3395, %v3395
    %v3402 = vpack.c.bf16 %v3396, %v3396
    %v3403 = vpack.c.bf16 %v3397, %v3397
    %v3404 = vpack.c.bf16 %v3398, %v3398
    %v3405 = vld [vmem:[#allocation14] sm:$0xff]
    %v3406 = vld [vmem:[#allocation14 + $0x8] sm:$0xff]
    %v3407 = vld [vmem:[#allocation14 + $0x10] sm:$0xff]
    %v3408 = vld [vmem:[#allocation14 + $0x18] sm:$0xff]
    %v3409 = vld [vmem:[#allocation14 + $0x20] sm:$0xff]
    %v3410 = vld [vmem:[#allocation14 + $0x28] sm:$0xff]
    %v3411 = vld [vmem:[#allocation14 + $0x30] sm:$0xff]
    %v3412 = vld [vmem:[#allocation14 + $0x38] sm:$0xff]
    %v3413 = vld [vmem:[#allocation14 + $0x40] sm:$0xff]
    %v3414 = vld [vmem:[#allocation14 + $0x48] sm:$0xff]
    %v3415 = vld [vmem:[#allocation14 + $0x50] sm:$0xff]
    %v3416 = vld [vmem:[#allocation14 + $0x58] sm:$0xff]
    %v3417 = vld [vmem:[#allocation14 + $0x60] sm:$0xff]
    %v3418 = vld [vmem:[#allocation14 + $0x68] sm:$0xff]
    %v3419 = vld [vmem:[#allocation14 + $0x70] sm:$0xff]
    %v3420 = vld [vmem:[#allocation14 + $0x78] sm:$0xff]
    %v3421 = vld [vmem:[#allocation14 + $0x80] sm:$0xff]
    %v3422 = vld [vmem:[#allocation14 + $0x88] sm:$0xff]
    %v3423 = vld [vmem:[#allocation14 + $0x90] sm:$0xff]
    %v3424 = vld [vmem:[#allocation14 + $0x98] sm:$0xff]
    %v3425 = vld [vmem:[#allocation14 + $0xa0] sm:$0xff]
    %v3426 = vld [vmem:[#allocation14 + $0xa8] sm:$0xff]
    %v3427 = vld [vmem:[#allocation14 + $0xb0] sm:$0xff]
    %v3428 = vld [vmem:[#allocation14 + $0xb8] sm:$0xff]
    %v3429 = vld [vmem:[#allocation14 + $0xc0] sm:$0xff]
    %v3430 = vld [vmem:[#allocation14 + $0xc8] sm:$0xff]
    %v3431 = vld [vmem:[#allocation14 + $0xd0] sm:$0xff]
    %v3432 = vld [vmem:[#allocation14 + $0xd8] sm:$0xff]
    %v3433 = vld [vmem:[#allocation14 + $0xe0] sm:$0xff]
    %v3434 = vld [vmem:[#allocation14 + $0xe8] sm:$0xff]
    %v3435 = vld [vmem:[#allocation14 + $0xf0] sm:$0xff]
    %v3436 = vld [vmem:[#allocation14 + $0xf8] sm:$0xff]
    %v3437 = vld [vmem:[#allocation14 + $0x100] sm:$0xff]
    %v3438 = vld [vmem:[#allocation14 + $0x108] sm:$0xff]
    %v3439 = vld [vmem:[#allocation14 + $0x110] sm:$0xff]
    %v3440 = vld [vmem:[#allocation14 + $0x118] sm:$0xff]
    %v3441 = vld [vmem:[#allocation14 + $0x120] sm:$0xff]
    %v3442 = vld [vmem:[#allocation14 + $0x128] sm:$0xff]
    %v3443 = vld [vmem:[#allocation14 + $0x130] sm:$0xff]
    %v3444 = vld [vmem:[#allocation14 + $0x138] sm:$0xff]
    %v3445 = vld [vmem:[#allocation14 + $0x140] sm:$0xff]
    %v3446 = vld [vmem:[#allocation14 + $0x148] sm:$0xff]
    %v3447 = vld [vmem:[#allocation14 + $0x150] sm:$0xff]
    %v3448 = vld [vmem:[#allocation14 + $0x158] sm:$0xff]
    %v3449 = vld [vmem:[#allocation14 + $0x160] sm:$0xff]
    %v3450 = vld [vmem:[#allocation14 + $0x168] sm:$0xff]
    %v3451 = vld [vmem:[#allocation14 + $0x170] sm:$0xff]
    %v3452 = vld [vmem:[#allocation14 + $0x178] sm:$0xff]
    %v3453 = vld [vmem:[#allocation14 + $0x180] sm:$0xff]
    %v3454 = vld [vmem:[#allocation14 + $0x188] sm:$0xff]
    %v3455 = vld [vmem:[#allocation14 + $0x190] sm:$0xff]
    %v3456 = vld [vmem:[#allocation14 + $0x198] sm:$0xff]
    %v3457 = vld [vmem:[#allocation14 + $0x1a0] sm:$0xff]
    %v3458 = vld [vmem:[#allocation14 + $0x1a8] sm:$0xff]
    %v3459 = vld [vmem:[#allocation14 + $0x1b0] sm:$0xff]
    %v3460 = vld [vmem:[#allocation14 + $0x1b8] sm:$0xff]
    %v3461 = vld [vmem:[#allocation14 + $0x1c0] sm:$0xff]
    %v3462 = vld [vmem:[#allocation14 + $0x1c8] sm:$0xff]
    %v3463 = vld [vmem:[#allocation14 + $0x1d0] sm:$0xff]
    %v3464 = vld [vmem:[#allocation14 + $0x1d8] sm:$0xff]
    %v3465 = vld [vmem:[#allocation14 + $0x1e0] sm:$0xff]
    %v3466 = vld [vmem:[#allocation14 + $0x1e8] sm:$0xff]
    %v3467 = vld [vmem:[#allocation14 + $0x1f0] sm:$0xff]
    %v3468 = vld [vmem:[#allocation14 + $0x1f8] sm:$0xff]
    %v3469 = vld [vmem:[#allocation14 + $0x200] sm:$0xff]
    %v3470 = vld [vmem:[#allocation14 + $0x208] sm:$0xff]
    %v3471 = vld [vmem:[#allocation14 + $0x210] sm:$0xff]
    %v3472 = vld [vmem:[#allocation14 + $0x218] sm:$0xff]
    %v3473 = vld [vmem:[#allocation14 + $0x220] sm:$0xff]
    %v3474 = vld [vmem:[#allocation14 + $0x228] sm:$0xff]
    %v3475 = vld [vmem:[#allocation14 + $0x230] sm:$0xff]
    %v3476 = vld [vmem:[#allocation14 + $0x238] sm:$0xff]
    %v3477 = vld [vmem:[#allocation14 + $0x240] sm:$0xff]
    %v3478 = vld [vmem:[#allocation14 + $0x248] sm:$0xff]
    %v3479 = vld [vmem:[#allocation14 + $0x250] sm:$0xff]
    %v3480 = vld [vmem:[#allocation14 + $0x258] sm:$0xff]
    %v3481 = vld [vmem:[#allocation14 + $0x260] sm:$0xff]
    %v3482 = vld [vmem:[#allocation14 + $0x268] sm:$0xff]
    %v3483 = vld [vmem:[#allocation14 + $0x270] sm:$0xff]
    %v3484 = vld [vmem:[#allocation14 + $0x278] sm:$0xff]
    %v3485 = vld [vmem:[#allocation14 + $0x280] sm:$0xff]
    %v3486 = vld [vmem:[#allocation14 + $0x288] sm:$0xff]
    %v3487 = vld [vmem:[#allocation14 + $0x290] sm:$0xff]
    %v3488 = vld [vmem:[#allocation14 + $0x298] sm:$0xff]
    %v3489 = vld [vmem:[#allocation14 + $0x2a0] sm:$0xff]
    %v3490 = vld [vmem:[#allocation14 + $0x2a8] sm:$0xff]
    %v3491 = vld [vmem:[#allocation14 + $0x2b0] sm:$0xff]
    %v3492 = vld [vmem:[#allocation14 + $0x2b8] sm:$0xff]
    %v3493 = vld [vmem:[#allocation14 + $0x2c0] sm:$0xff]
    %v3494 = vld [vmem:[#allocation14 + $0x2c8] sm:$0xff]
    %v3495 = vld [vmem:[#allocation14 + $0x2d0] sm:$0xff]
    %v3496 = vld [vmem:[#allocation14 + $0x2d8] sm:$0xff]
    %v3497 = vld [vmem:[#allocation14 + $0x2e0] sm:$0xff]
    %v3498 = vld [vmem:[#allocation14 + $0x2e8] sm:$0xff]
    %v3499 = vld [vmem:[#allocation14 + $0x2f0] sm:$0xff]
    %v3500 = vld [vmem:[#allocation14 + $0x2f8] sm:$0xff]
    %v3501 = vld [vmem:[#allocation14 + $0x300] sm:$0xff]
    %v3502 = vld [vmem:[#allocation14 + $0x308] sm:$0xff]
    %v3503 = vld [vmem:[#allocation14 + $0x310] sm:$0xff]
    %v3504 = vld [vmem:[#allocation14 + $0x318] sm:$0xff]
    %v3505 = vld [vmem:[#allocation14 + $0x320] sm:$0xff]
    %v3506 = vld [vmem:[#allocation14 + $0x328] sm:$0xff]
    %v3507 = vld [vmem:[#allocation14 + $0x330] sm:$0xff]
    %v3508 = vld [vmem:[#allocation14 + $0x338] sm:$0xff]
    %v3509 = vld [vmem:[#allocation14 + $0x340] sm:$0xff]
    %v3510 = vld [vmem:[#allocation14 + $0x348] sm:$0xff]
    %v3511 = vld [vmem:[#allocation14 + $0x350] sm:$0xff]
    %v3512 = vld [vmem:[#allocation14 + $0x358] sm:$0xff]
    %v3513 = vld [vmem:[#allocation14 + $0x360] sm:$0xff]
    %v3514 = vld [vmem:[#allocation14 + $0x368] sm:$0xff]
    %v3515 = vld [vmem:[#allocation14 + $0x370] sm:$0xff]
    %v3516 = vld [vmem:[#allocation14 + $0x378] sm:$0xff]
    %v3517 = vld [vmem:[#allocation14 + $0x380] sm:$0xff]
    %v3518 = vld [vmem:[#allocation14 + $0x388] sm:$0xff]
    %v3519 = vld [vmem:[#allocation14 + $0x390] sm:$0xff]
    %v3520 = vld [vmem:[#allocation14 + $0x398] sm:$0xff]
    %v3521 = vld [vmem:[#allocation14 + $0x3a0] sm:$0xff]
    %v3522 = vld [vmem:[#allocation14 + $0x3a8] sm:$0xff]
    %v3523 = vld [vmem:[#allocation14 + $0x3b0] sm:$0xff]
    %v3524 = vld [vmem:[#allocation14 + $0x3b8] sm:$0xff]
    %v3525 = vld [vmem:[#allocation14 + $0x3c0] sm:$0xff]
    %v3526 = vld [vmem:[#allocation14 + $0x3c8] sm:$0xff]
    %v3527 = vld [vmem:[#allocation14 + $0x3d0] sm:$0xff]
    %v3528 = vld [vmem:[#allocation14 + $0x3d8] sm:$0xff]
    %v3529 = vld [vmem:[#allocation14 + $0x3e0] sm:$0xff]
    %v3530 = vld [vmem:[#allocation14 + $0x3e8] sm:$0xff]
    %v3531 = vld [vmem:[#allocation14 + $0x3f0] sm:$0xff]
    %v3532 = vld [vmem:[#allocation14 + $0x3f8] sm:$0xff]
    %v3534 = vlaneseq
    %v3535 = vshrl.u32 %v3534, 7
    %v3536 = vsub.s32 0, %v3535
    %v3537 = vrot.slane %v3400, %v3536
    %v3538 = vlaneseq
    %v3539 = vshrl.u32 %v3538, 7
    %v3540 = vsub.s32 1, %v3539
    %v3541 = vrot.slane %v3400, %v3540
    %v3542 = vlaneseq
    %v3543 = vshrl.u32 %v3542, 7
    %v3544 = vsub.s32 2, %v3543
    %v3545 = vrot.slane %v3400, %v3544
    %v3546 = vlaneseq
    %v3547 = vshrl.u32 %v3546, 7
    %v3548 = vsub.s32 3, %v3547
    %v3549 = vrot.slane %v3400, %v3548
    %v3682 = vunpack.c.l.b16 %v3405
    %v3683 = vunpack.c.h.b16 %v3405
    %v3684 = vunpack.c.l.b16 %v3406
    %v3685 = vunpack.c.h.b16 %v3406
    %v3686 = vunpack.c.l.b16 %v3407
    %v3687 = vunpack.c.h.b16 %v3407
    %v3688 = vunpack.c.l.b16 %v3408
    %v3689 = vunpack.c.h.b16 %v3408
    %v3690 = vunpack.c.l.b16 %v3409
    %v3691 = vunpack.c.h.b16 %v3409
    %v3692 = vunpack.c.l.b16 %v3410
    %v3693 = vunpack.c.h.b16 %v3410
    %v3694 = vunpack.c.l.b16 %v3411
    %v3695 = vunpack.c.h.b16 %v3411
    %v3696 = vunpack.c.l.b16 %v3412
    %v3697 = vunpack.c.h.b16 %v3412
    %v3698 = vunpack.c.l.b16 %v3413
    %v3699 = vunpack.c.h.b16 %v3413
    %v3700 = vunpack.c.l.b16 %v3414
    %v3701 = vunpack.c.h.b16 %v3414
    %v3702 = vunpack.c.l.b16 %v3415
    %v3703 = vunpack.c.h.b16 %v3415
    %v3704 = vunpack.c.l.b16 %v3416
    %v3705 = vunpack.c.h.b16 %v3416
    %v3706 = vunpack.c.l.b16 %v3417
    %v3707 = vunpack.c.h.b16 %v3417
    %v3708 = vunpack.c.l.b16 %v3418
    %v3709 = vunpack.c.h.b16 %v3418
    %v3710 = vunpack.c.l.b16 %v3419
    %v3711 = vunpack.c.h.b16 %v3419
    %v3712 = vunpack.c.l.b16 %v3420
    %v3713 = vunpack.c.h.b16 %v3420
    %v3714 = vunpack.c.l.b16 %v3421
    %v3715 = vunpack.c.h.b16 %v3421
    %v3716 = vunpack.c.l.b16 %v3422
    %v3717 = vunpack.c.h.b16 %v3422
    %v3718 = vunpack.c.l.b16 %v3423
    %v3719 = vunpack.c.h.b16 %v3423
    %v3720 = vunpack.c.l.b16 %v3424
    %v3721 = vunpack.c.h.b16 %v3424
    %v3722 = vunpack.c.l.b16 %v3425
    %v3723 = vunpack.c.h.b16 %v3425
    %v3724 = vunpack.c.l.b16 %v3426
    %v3725 = vunpack.c.h.b16 %v3426
    %v3726 = vunpack.c.l.b16 %v3427
    %v3727 = vunpack.c.h.b16 %v3427
    %v3728 = vunpack.c.l.b16 %v3428
    %v3729 = vunpack.c.h.b16 %v3428
    %v3730 = vunpack.c.l.b16 %v3429
    %v3731 = vunpack.c.h.b16 %v3429
    %v3732 = vunpack.c.l.b16 %v3430
    %v3733 = vunpack.c.h.b16 %v3430
    %v3734 = vunpack.c.l.b16 %v3431
    %v3735 = vunpack.c.h.b16 %v3431
    %v3736 = vunpack.c.l.b16 %v3432
    %v3737 = vunpack.c.h.b16 %v3432
    %v3738 = vunpack.c.l.b16 %v3433
    %v3739 = vunpack.c.h.b16 %v3433
    %v3740 = vunpack.c.l.b16 %v3434
    %v3741 = vunpack.c.h.b16 %v3434
    %v3742 = vunpack.c.l.b16 %v3435
    %v3743 = vunpack.c.h.b16 %v3435
    %v3744 = vunpack.c.l.b16 %v3436
    %v3745 = vunpack.c.h.b16 %v3436
    %v3746 = vunpack.c.l.b16 %v3437
    %v3747 = vunpack.c.h.b16 %v3437
    %v3748 = vunpack.c.l.b16 %v3438
    %v3749 = vunpack.c.h.b16 %v3438
    %v3750 = vunpack.c.l.b16 %v3439
    %v3751 = vunpack.c.h.b16 %v3439
    %v3752 = vunpack.c.l.b16 %v3440
    %v3753 = vunpack.c.h.b16 %v3440
    %v3754 = vunpack.c.l.b16 %v3441
    %v3755 = vunpack.c.h.b16 %v3441
    %v3756 = vunpack.c.l.b16 %v3442
    %v3757 = vunpack.c.h.b16 %v3442
    %v3758 = vunpack.c.l.b16 %v3443
    %v3759 = vunpack.c.h.b16 %v3443
    %v3760 = vunpack.c.l.b16 %v3444
    %v3761 = vunpack.c.h.b16 %v3444
    %v3762 = vunpack.c.l.b16 %v3445
    %v3763 = vunpack.c.h.b16 %v3445
    %v3764 = vunpack.c.l.b16 %v3446
    %v3765 = vunpack.c.h.b16 %v3446
    %v3766 = vunpack.c.l.b16 %v3447
    %v3767 = vunpack.c.h.b16 %v3447
    %v3768 = vunpack.c.l.b16 %v3448
    %v3769 = vunpack.c.h.b16 %v3448
    %v3770 = vunpack.c.l.b16 %v3449
    %v3771 = vunpack.c.h.b16 %v3449
    %v3772 = vunpack.c.l.b16 %v3450
    %v3773 = vunpack.c.h.b16 %v3450
    %v3774 = vunpack.c.l.b16 %v3451
    %v3775 = vunpack.c.h.b16 %v3451
    %v3776 = vunpack.c.l.b16 %v3452
    %v3777 = vunpack.c.h.b16 %v3452
    %v3778 = vunpack.c.l.b16 %v3453
    %v3779 = vunpack.c.h.b16 %v3453
    %v3780 = vunpack.c.l.b16 %v3454
    %v3781 = vunpack.c.h.b16 %v3454
    %v3782 = vunpack.c.l.b16 %v3455
    %v3783 = vunpack.c.h.b16 %v3455
    %v3784 = vunpack.c.l.b16 %v3456
    %v3785 = vunpack.c.h.b16 %v3456
    %v3786 = vunpack.c.l.b16 %v3457
    %v3787 = vunpack.c.h.b16 %v3457
    %v3788 = vunpack.c.l.b16 %v3458
    %v3789 = vunpack.c.h.b16 %v3458
    %v3790 = vunpack.c.l.b16 %v3459
    %v3791 = vunpack.c.h.b16 %v3459
    %v3792 = vunpack.c.l.b16 %v3460
    %v3793 = vunpack.c.h.b16 %v3460
    %v3794 = vunpack.c.l.b16 %v3461
    %v3795 = vunpack.c.h.b16 %v3461
    %v3796 = vunpack.c.l.b16 %v3462
    %v3797 = vunpack.c.h.b16 %v3462
    %v3798 = vunpack.c.l.b16 %v3463
    %v3799 = vunpack.c.h.b16 %v3463
    %v3800 = vunpack.c.l.b16 %v3464
    %v3801 = vunpack.c.h.b16 %v3464
    %v3802 = vunpack.c.l.b16 %v3465
    %v3803 = vunpack.c.h.b16 %v3465
    %v3804 = vunpack.c.l.b16 %v3466
    %v3805 = vunpack.c.h.b16 %v3466
    %v3806 = vunpack.c.l.b16 %v3467
    %v3807 = vunpack.c.h.b16 %v3467
    %v3808 = vunpack.c.l.b16 %v3468
    %v3809 = vunpack.c.h.b16 %v3468
    %v3810 = vunpack.c.l.b16 %v3469
    %v3811 = vunpack.c.h.b16 %v3469
    %v3812 = vunpack.c.l.b16 %v3470
    %v3813 = vunpack.c.h.b16 %v3470
    %v3814 = vunpack.c.l.b16 %v3471
    %v3815 = vunpack.c.h.b16 %v3471
    %v3816 = vunpack.c.l.b16 %v3472
    %v3817 = vunpack.c.h.b16 %v3472
    %v3818 = vunpack.c.l.b16 %v3473
    %v3819 = vunpack.c.h.b16 %v3473
    %v3820 = vunpack.c.l.b16 %v3474
    %v3821 = vunpack.c.h.b16 %v3474
    %v3822 = vunpack.c.l.b16 %v3475
    %v3823 = vunpack.c.h.b16 %v3475
    %v3824 = vunpack.c.l.b16 %v3476
    %v3825 = vunpack.c.h.b16 %v3476
    %v3826 = vunpack.c.l.b16 %v3477
    %v3827 = vunpack.c.h.b16 %v3477
    %v3828 = vunpack.c.l.b16 %v3478
    %v3829 = vunpack.c.h.b16 %v3478
    %v3830 = vunpack.c.l.b16 %v3479
    %v3831 = vunpack.c.h.b16 %v3479
    %v3832 = vunpack.c.l.b16 %v3480
    %v3833 = vunpack.c.h.b16 %v3480
    %v3834 = vunpack.c.l.b16 %v3481
    %v3835 = vunpack.c.h.b16 %v3481
    %v3836 = vunpack.c.l.b16 %v3482
    %v3837 = vunpack.c.h.b16 %v3482
    %v3838 = vunpack.c.l.b16 %v3483
    %v3839 = vunpack.c.h.b16 %v3483
    %v3840 = vunpack.c.l.b16 %v3484
    %v3841 = vunpack.c.h.b16 %v3484
    %v3842 = vunpack.c.l.b16 %v3485
    %v3843 = vunpack.c.h.b16 %v3485
    %v3844 = vunpack.c.l.b16 %v3486
    %v3845 = vunpack.c.h.b16 %v3486
    %v3846 = vunpack.c.l.b16 %v3487
    %v3847 = vunpack.c.h.b16 %v3487
    %v3848 = vunpack.c.l.b16 %v3488
    %v3849 = vunpack.c.h.b16 %v3488
    %v3850 = vunpack.c.l.b16 %v3489
    %v3851 = vunpack.c.h.b16 %v3489
    %v3852 = vunpack.c.l.b16 %v3490
    %v3853 = vunpack.c.h.b16 %v3490
    %v3854 = vunpack.c.l.b16 %v3491
    %v3855 = vunpack.c.h.b16 %v3491
    %v3856 = vunpack.c.l.b16 %v3492
    %v3857 = vunpack.c.h.b16 %v3492
    %v3858 = vunpack.c.l.b16 %v3493
    %v3859 = vunpack.c.h.b16 %v3493
    %v3860 = vunpack.c.l.b16 %v3494
    %v3861 = vunpack.c.h.b16 %v3494
    %v3862 = vunpack.c.l.b16 %v3495
    %v3863 = vunpack.c.h.b16 %v3495
    %v3864 = vunpack.c.l.b16 %v3496
    %v3865 = vunpack.c.h.b16 %v3496
    %v3866 = vunpack.c.l.b16 %v3497
    %v3867 = vunpack.c.h.b16 %v3497
    %v3868 = vunpack.c.l.b16 %v3498
    %v3869 = vunpack.c.h.b16 %v3498
    %v3870 = vunpack.c.l.b16 %v3499
    %v3871 = vunpack.c.h.b16 %v3499
    %v3872 = vunpack.c.l.b16 %v3500
    %v3873 = vunpack.c.h.b16 %v3500
    %v3874 = vunpack.c.l.b16 %v3501
    %v3875 = vunpack.c.h.b16 %v3501
    %v3876 = vunpack.c.l.b16 %v3502
    %v3877 = vunpack.c.h.b16 %v3502
    %v3878 = vunpack.c.l.b16 %v3503
    %v3879 = vunpack.c.h.b16 %v3503
    %v3880 = vunpack.c.l.b16 %v3504
    %v3881 = vunpack.c.h.b16 %v3504
    %v3882 = vunpack.c.l.b16 %v3505
    %v3883 = vunpack.c.h.b16 %v3505
    %v3884 = vunpack.c.l.b16 %v3506
    %v3885 = vunpack.c.h.b16 %v3506
    %v3886 = vunpack.c.l.b16 %v3507
    %v3887 = vunpack.c.h.b16 %v3507
    %v3888 = vunpack.c.l.b16 %v3508
    %v3889 = vunpack.c.h.b16 %v3508
    %v3890 = vunpack.c.l.b16 %v3509
    %v3891 = vunpack.c.h.b16 %v3509
    %v3892 = vunpack.c.l.b16 %v3510
    %v3893 = vunpack.c.h.b16 %v3510
    %v3894 = vunpack.c.l.b16 %v3511
    %v3895 = vunpack.c.h.b16 %v3511
    %v3896 = vunpack.c.l.b16 %v3512
    %v3897 = vunpack.c.h.b16 %v3512
    %v3898 = vunpack.c.l.b16 %v3513
    %v3899 = vunpack.c.h.b16 %v3513
    %v3900 = vunpack.c.l.b16 %v3514
    %v3901 = vunpack.c.h.b16 %v3514
    %v3902 = vunpack.c.l.b16 %v3515
    %v3903 = vunpack.c.h.b16 %v3515
    %v3904 = vunpack.c.l.b16 %v3516
    %v3905 = vunpack.c.h.b16 %v3516
    %v3906 = vunpack.c.l.b16 %v3517
    %v3907 = vunpack.c.h.b16 %v3517
    %v3908 = vunpack.c.l.b16 %v3518
    %v3909 = vunpack.c.h.b16 %v3518
    %v3910 = vunpack.c.l.b16 %v3519
    %v3911 = vunpack.c.h.b16 %v3519
    %v3912 = vunpack.c.l.b16 %v3520
    %v3913 = vunpack.c.h.b16 %v3520
    %v3914 = vunpack.c.l.b16 %v3521
    %v3915 = vunpack.c.h.b16 %v3521
    %v3916 = vunpack.c.l.b16 %v3522
    %v3917 = vunpack.c.h.b16 %v3522
    %v3918 = vunpack.c.l.b16 %v3523
    %v3919 = vunpack.c.h.b16 %v3523
    %v3920 = vunpack.c.l.b16 %v3524
    %v3921 = vunpack.c.h.b16 %v3524
    %v3922 = vunpack.c.l.b16 %v3525
    %v3923 = vunpack.c.h.b16 %v3525
    %v3924 = vunpack.c.l.b16 %v3526
    %v3925 = vunpack.c.h.b16 %v3526
    %v3926 = vunpack.c.l.b16 %v3527
    %v3927 = vunpack.c.h.b16 %v3527
    %v3928 = vunpack.c.l.b16 %v3528
    %v3929 = vunpack.c.h.b16 %v3528
    %v3930 = vunpack.c.l.b16 %v3529
    %v3931 = vunpack.c.h.b16 %v3529
    %v3932 = vunpack.c.l.b16 %v3530
    %v3933 = vunpack.c.h.b16 %v3530
    %v3934 = vunpack.c.l.b16 %v3531
    %v3935 = vunpack.c.h.b16 %v3531
    %v3936 = vunpack.c.l.b16 %v3532
    %v3937 = vunpack.c.h.b16 %v3532
    %v3938 = vpack.c.b16 %v3686, %v3682
    %v3939 = vpack.c.b16 %v3687, %v3683
    %v3940 = vpack.c.b16 %v3688, %v3684
    %v3941 = vpack.c.b16 %v3689, %v3685
    %v3942 = vpack.c.b16 %v3694, %v3690
    %v3943 = vpack.c.b16 %v3695, %v3691
    %v3944 = vpack.c.b16 %v3696, %v3692
    %v3945 = vpack.c.b16 %v3697, %v3693
    %v3946 = vpack.c.b16 %v3702, %v3698
    %v3947 = vpack.c.b16 %v3703, %v3699
    %v3948 = vpack.c.b16 %v3704, %v3700
    %v3949 = vpack.c.b16 %v3705, %v3701
    %v3950 = vpack.c.b16 %v3710, %v3706
    %v3951 = vpack.c.b16 %v3711, %v3707
    %v3952 = vpack.c.b16 %v3712, %v3708
    %v3953 = vpack.c.b16 %v3713, %v3709
    %v3954 = vpack.c.b16 %v3718, %v3714
    %v3955 = vpack.c.b16 %v3719, %v3715
    %v3956 = vpack.c.b16 %v3720, %v3716
    %v3957 = vpack.c.b16 %v3721, %v3717
    %v3958 = vpack.c.b16 %v3726, %v3722
    %v3959 = vpack.c.b16 %v3727, %v3723
    %v3960 = vpack.c.b16 %v3728, %v3724
    %v3961 = vpack.c.b16 %v3729, %v3725
    %v3962 = vpack.c.b16 %v3734, %v3730
    %v3963 = vpack.c.b16 %v3735, %v3731
    %v3964 = vpack.c.b16 %v3736, %v3732
    %v3965 = vpack.c.b16 %v3737, %v3733
    %v3966 = vpack.c.b16 %v3742, %v3738
    %v3967 = vpack.c.b16 %v3743, %v3739
    %v3968 = vpack.c.b16 %v3744, %v3740
    %v3969 = vpack.c.b16 %v3745, %v3741
    %v3970 = vpack.c.b16 %v3750, %v3746
    %v3971 = vpack.c.b16 %v3751, %v3747
    %v3972 = vpack.c.b16 %v3752, %v3748
    %v3973 = vpack.c.b16 %v3753, %v3749
    %v3974 = vpack.c.b16 %v3758, %v3754
    %v3975 = vpack.c.b16 %v3759, %v3755
    %v3976 = vpack.c.b16 %v3760, %v3756
    %v3977 = vpack.c.b16 %v3761, %v3757
    %v3978 = vpack.c.b16 %v3766, %v3762
    %v3979 = vpack.c.b16 %v3767, %v3763
    %v3980 = vpack.c.b16 %v3768, %v3764
    %v3981 = vpack.c.b16 %v3769, %v3765
    %v3982 = vpack.c.b16 %v3774, %v3770
    %v3983 = vpack.c.b16 %v3775, %v3771
    %v3984 = vpack.c.b16 %v3776, %v3772
    %v3985 = vpack.c.b16 %v3777, %v3773
    %v3986 = vpack.c.b16 %v3782, %v3778
    %v3987 = vpack.c.b16 %v3783, %v3779
    %v3988 = vpack.c.b16 %v3784, %v3780
    %v3989 = vpack.c.b16 %v3785, %v3781
    %v3990 = vpack.c.b16 %v3790, %v3786
    %v3991 = vpack.c.b16 %v3791, %v3787
    %v3992 = vpack.c.b16 %v3792, %v3788
    %v3993 = vpack.c.b16 %v3793, %v3789
    %v3994 = vpack.c.b16 %v3798, %v3794
    %v3995 = vpack.c.b16 %v3799, %v3795
    %v3996 = vpack.c.b16 %v3800, %v3796
    %v3997 = vpack.c.b16 %v3801, %v3797
    %v3998 = vpack.c.b16 %v3806, %v3802
    %v3999 = vpack.c.b16 %v3807, %v3803
    %v4000 = vpack.c.b16 %v3808, %v3804
    %v4001 = vpack.c.b16 %v3809, %v3805
    %v4002 = vpack.c.b16 %v3814, %v3810
    %v4003 = vpack.c.b16 %v3815, %v3811
    %v4004 = vpack.c.b16 %v3816, %v3812
    %v4005 = vpack.c.b16 %v3817, %v3813
    %v4006 = vpack.c.b16 %v3822, %v3818
    %v4007 = vpack.c.b16 %v3823, %v3819
    %v4008 = vpack.c.b16 %v3824, %v3820
    %v4009 = vpack.c.b16 %v3825, %v3821
    %v4010 = vpack.c.b16 %v3830, %v3826
    %v4011 = vpack.c.b16 %v3831, %v3827
    %v4012 = vpack.c.b16 %v3832, %v3828
    %v4013 = vpack.c.b16 %v3833, %v3829
    %v4014 = vpack.c.b16 %v3838, %v3834
    %v4015 = vpack.c.b16 %v3839, %v3835
    %v4016 = vpack.c.b16 %v3840, %v3836
    %v4017 = vpack.c.b16 %v3841, %v3837
    %v4018 = vpack.c.b16 %v3846, %v3842
    %v4019 = vpack.c.b16 %v3847, %v3843
    %v4020 = vpack.c.b16 %v3848, %v3844
    %v4021 = vpack.c.b16 %v3849, %v3845
    %v4022 = vpack.c.b16 %v3854, %v3850
    %v4023 = vpack.c.b16 %v3855, %v3851
    %v4024 = vpack.c.b16 %v3856, %v3852
    %v4025 = vpack.c.b16 %v3857, %v3853
    %v4026 = vpack.c.b16 %v3862, %v3858
    %v4027 = vpack.c.b16 %v3863, %v3859
    %v4028 = vpack.c.b16 %v3864, %v3860
    %v4029 = vpack.c.b16 %v3865, %v3861
    %v4030 = vpack.c.b16 %v3870, %v3866
    %v4031 = vpack.c.b16 %v3871, %v3867
    %v4032 = vpack.c.b16 %v3872, %v3868
    %v4033 = vpack.c.b16 %v3873, %v3869
    %v4034 = vpack.c.b16 %v3878, %v3874
    %v4035 = vpack.c.b16 %v3879, %v3875
    %v4036 = vpack.c.b16 %v3880, %v3876
    %v4037 = vpack.c.b16 %v3881, %v3877
    %v4038 = vpack.c.b16 %v3886, %v3882
    %v4039 = vpack.c.b16 %v3887, %v3883
    %v4040 = vpack.c.b16 %v3888, %v3884
    %v4041 = vpack.c.b16 %v3889, %v3885
    %v4042 = vpack.c.b16 %v3894, %v3890
    %v4043 = vpack.c.b16 %v3895, %v3891
    %v4044 = vpack.c.b16 %v3896, %v3892
    %v4045 = vpack.c.b16 %v3897, %v3893
    %v4046 = vpack.c.b16 %v3902, %v3898
    %v4047 = vpack.c.b16 %v3903, %v3899
    %v4048 = vpack.c.b16 %v3904, %v3900
    %v4049 = vpack.c.b16 %v3905, %v3901
    %v4050 = vpack.c.b16 %v3910, %v3906
    %v4051 = vpack.c.b16 %v3911, %v3907
    %v4052 = vpack.c.b16 %v3912, %v3908
    %v4053 = vpack.c.b16 %v3913, %v3909
    %v4054 = vpack.c.b16 %v3918, %v3914
    %v4055 = vpack.c.b16 %v3919, %v3915
    %v4056 = vpack.c.b16 %v3920, %v3916
    %v4057 = vpack.c.b16 %v3921, %v3917
    %v4058 = vpack.c.b16 %v3926, %v3922
    %v4059 = vpack.c.b16 %v3927, %v3923
    %v4060 = vpack.c.b16 %v3928, %v3924
    %v4061 = vpack.c.b16 %v3929, %v3925
    %v4062 = vpack.c.b16 %v3934, %v3930
    %v4063 = vpack.c.b16 %v3935, %v3931
    %v4064 = vpack.c.b16 %v3936, %v3932
    %v4065 = vpack.c.b16 %v3937, %v3933
    %4194 = vmatprep.subr.bf16.mxu0 %v3967
    %4195 = vmatpush1.bf16.msra.mxu0 %v3966
    %4196 = vmatprep.subr.bf16.mxu0 %v3963
    %4197 = vmatpush1.bf16.msra.mxu0 %v3962
    %4198 = vmatprep.subr.bf16.mxu0 %v3959
    %4199 = vmatpush1.bf16.msra.mxu0 %v3958
    %4200 = vmatprep.subr.bf16.mxu0 %v3955
    %4201 = vmatpush1.bf16.msra.mxu0 %v3954
    %4202 = vmatprep.subr.bf16.mxu0 %v3951
    %4203 = vmatpush1.bf16.msra.mxu0 %v3950
    %4204 = vmatprep.subr.bf16.mxu0 %v3947
    %4205 = vmatpush1.bf16.msra.mxu0 %v3946
    %4206 = vmatprep.subr.bf16.mxu0 %v3943
    %4207 = vmatpush1.bf16.msra.mxu0 %v3942
    %4208 = vmatprep.subr.bf16.mxu0 %v3939
    %4209 = vmatpush1.bf16.msra.mxu0 %v3938
    %4210 = vmatprep.subr.bf16.mxu0 %v3999
    %4211 = vmatpush2.bf16.msra.mxu0 %v3998
    %4212 = vmatprep.subr.bf16.mxu0 %v3995
    %4213 = vmatpush2.bf16.msra.mxu0 %v3994
    %4214 = vmatprep.subr.bf16.mxu0 %v3991
    %4215 = vmatpush2.bf16.msra.mxu0 %v3990
    %4216 = vmatprep.subr.bf16.mxu0 %v3987
    %4217 = vmatpush2.bf16.msra.mxu0 %v3986
    %4218 = vmatprep.subr.bf16.mxu0 %v3983
    %4219 = vmatpush2.bf16.msra.mxu0 %v3982
    %4220 = vmatprep.subr.bf16.mxu0 %v3979
    %4221 = vmatpush2.bf16.msra.mxu0 %v3978
    %4222 = vmatprep.subr.bf16.mxu0 %v3975
    %4223 = vmatpush2.bf16.msra.mxu0 %v3974
    %4224 = vmatprep.subr.bf16.mxu0 %v3971
    %4225 = vmatpush2.bf16.msra.mxu0 %v3970
    %4226 = vmatprep.mubr.bf16.mxu0 %v3402
    %4227 = vmatmul.mubr.bf16.gmra.mxu0 %v3401
    %v4228 = vpop.f32.mrf.mxu0
    %v4229 = vadd.f32 %v3537, %v4228
    %v4230 = vpop.f32.mrf.mxu0
    %v4231 = vadd.f32 %v3541, %v4230
    %v4232 = vpop.f32.mrf.mxu0
    %v4233 = vpop.f32.mrf.mxu0
    %4234 = vdwg.mxu0
    %4235 = vmatprep.subr.bf16.mxu0 %v4031
    %4236 = vmatpush1.bf16.msra.mxu0 %v4030
    %4237 = vmatprep.subr.bf16.mxu0 %v4027
    %4238 = vmatpush1.bf16.msra.mxu0 %v4026
    %4239 = vmatprep.subr.bf16.mxu0 %v4023
    %4240 = vmatpush1.bf16.msra.mxu0 %v4022
    %4241 = vmatprep.subr.bf16.mxu0 %v4019
    %4242 = vmatpush1.bf16.msra.mxu0 %v4018
    %4243 = vmatprep.subr.bf16.mxu0 %v4015
    %4244 = vmatpush1.bf16.msra.mxu0 %v4014
    %4245 = vmatprep.subr.bf16.mxu0 %v4011
    %4246 = vmatpush1.bf16.msra.mxu0 %v4010
    %4247 = vmatprep.subr.bf16.mxu0 %v4007
    %4248 = vmatpush1.bf16.msra.mxu0 %v4006
    %4249 = vmatprep.subr.bf16.mxu0 %v4003
    %4250 = vmatpush1.bf16.msra.mxu0 %v4002
    %4251 = vmatprep.subr.bf16.mxu0 %v4063
    %4252 = vmatpush2.bf16.msra.mxu0 %v4062
    %4253 = vmatprep.subr.bf16.mxu0 %v4059
    %4254 = vmatpush2.bf16.msra.mxu0 %v4058
    %4255 = vmatprep.subr.bf16.mxu0 %v4055
    %4256 = vmatpush2.bf16.msra.mxu0 %v4054
    %4257 = vmatprep.subr.bf16.mxu0 %v4051
    %4258 = vmatpush2.bf16.msra.mxu0 %v4050
    %4259 = vmatprep.subr.bf16.mxu0 %v4047
    %4260 = vmatpush2.bf16.msra.mxu0 %v4046
    %4261 = vmatprep.subr.bf16.mxu0 %v4043
    %4262 = vmatpush2.bf16.msra.mxu0 %v4042
    %4263 = vmatprep.subr.bf16.mxu0 %v4039
    %4264 = vmatpush2.bf16.msra.mxu0 %v4038
    %4265 = vmatprep.subr.bf16.mxu0 %v4035
    %4266 = vmatpush2.bf16.msra.mxu0 %v4034
    %4267 = vmatprep.mubr.bf16.mxu0 %v3404
    %4268 = vmatmul.mubr.bf16.gmra.mxu0 %v3403
    %v4269 = vpop.f32.mrf.mxu0
    %v4270 = vadd.f32 %v4229, %v4269
    %v4271 = vpop.f32.mrf.mxu0
    %v4272 = vadd.f32 %v4231, %v4271
    %v4273 = vpop.f32.mrf.mxu0
    %v4274 = vpop.f32.mrf.mxu0
    %4275 = vdwg.mxu0
    %4276 = vmatprep.subr.bf16.mxu0 %v3969
    %4277 = vmatpush1.bf16.msra.mxu0 %v3968
    %4278 = vmatprep.subr.bf16.mxu0 %v3965
    %4279 = vmatpush1.bf16.msra.mxu0 %v3964
    %4280 = vmatprep.subr.bf16.mxu0 %v3961
    %4281 = vmatpush1.bf16.msra.mxu0 %v3960
    %4282 = vmatprep.subr.bf16.mxu0 %v3957
    %4283 = vmatpush1.bf16.msra.mxu0 %v3956
    %4284 = vmatprep.subr.bf16.mxu0 %v3953
    %4285 = vmatpush1.bf16.msra.mxu0 %v3952
    %4286 = vmatprep.subr.bf16.mxu0 %v3949
    %4287 = vmatpush1.bf16.msra.mxu0 %v3948
    %4288 = vmatprep.subr.bf16.mxu0 %v3945
    %4289 = vmatpush1.bf16.msra.mxu0 %v3944
    %4290 = vmatprep.subr.bf16.mxu0 %v3941
    %4291 = vmatpush1.bf16.msra.mxu0 %v3940
    %4292 = vmatprep.subr.bf16.mxu0 %v4001
    %4293 = vmatpush2.bf16.msra.mxu0 %v4000
    %4294 = vmatprep.subr.bf16.mxu0 %v3997
    %4295 = vmatpush2.bf16.msra.mxu0 %v3996
    %4296 = vmatprep.subr.bf16.mxu0 %v3993
    %4297 = vmatpush2.bf16.msra.mxu0 %v3992
    %4298 = vmatprep.subr.bf16.mxu0 %v3989
    %4299 = vmatpush2.bf16.msra.mxu0 %v3988
    %4300 = vmatprep.subr.bf16.mxu0 %v3985
    %4301 = vmatpush2.bf16.msra.mxu0 %v3984
    %4302 = vmatprep.subr.bf16.mxu0 %v3981
    %4303 = vmatpush2.bf16.msra.mxu0 %v3980
    %4304 = vmatprep.subr.bf16.mxu0 %v3977
    %4305 = vmatpush2.bf16.msra.mxu0 %v3976
    %4306 = vmatprep.subr.bf16.mxu0 %v3973
    %4307 = vmatpush2.bf16.msra.mxu0 %v3972
    %4308 = vmatprep.mubr.bf16.mxu0 %v3402
    %4309 = vmatmul.mubr.bf16.gmra.mxu0 %v3401
    %v4310 = vpop.f32.mrf.mxu0
    %v4311 = vadd.f32 %v3545, %v4310
    %v4312 = vpop.f32.mrf.mxu0
    %v4313 = vadd.f32 %v3549, %v4312
    %v4314 = vpop.f32.mrf.mxu0
    %v4315 = vpop.f32.mrf.mxu0
    %4316 = vdwg.mxu0
    %4317 = vmatprep.subr.bf16.mxu0 %v4033
    %4318 = vmatpush1.bf16.msra.mxu0 %v4032
    %4319 = vmatprep.subr.bf16.mxu0 %v4029
    %4320 = vmatpush1.bf16.msra.mxu0 %v4028
    %4321 = vmatprep.subr.bf16.mxu0 %v4025
    %4322 = vmatpush1.bf16.msra.mxu0 %v4024
    %4323 = vmatprep.subr.bf16.mxu0 %v4021
    %4324 = vmatpush1.bf16.msra.mxu0 %v4020
    %4325 = vmatprep.subr.bf16.mxu0 %v4017
    %4326 = vmatpush1.bf16.msra.mxu0 %v4016
    %4327 = vmatprep.subr.bf16.mxu0 %v4013
    %4328 = vmatpush1.bf16.msra.mxu0 %v4012
    %4329 = vmatprep.subr.bf16.mxu0 %v4009
    %4330 = vmatpush1.bf16.msra.mxu0 %v4008
    %4331 = vmatprep.subr.bf16.mxu0 %v4005
    %4332 = vmatpush1.bf16.msra.mxu0 %v4004
    %4333 = vmatprep.subr.bf16.mxu0 %v4065
    %4334 = vmatpush2.bf16.msra.mxu0 %v4064
    %4335 = vmatprep.subr.bf16.mxu0 %v4061
    %4336 = vmatpush2.bf16.msra.mxu0 %v4060
    %4337 = vmatprep.subr.bf16.mxu0 %v4057
    %4338 = vmatpush2.bf16.msra.mxu0 %v4056
    %4339 = vmatprep.subr.bf16.mxu0 %v4053
    %4340 = vmatpush2.bf16.msra.mxu0 %v4052
    %4341 = vmatprep.subr.bf16.mxu0 %v4049
    %4342 = vmatpush2.bf16.msra.mxu0 %v4048
    %4343 = vmatprep.subr.bf16.mxu0 %v4045
    %4344 = vmatpush2.bf16.msra.mxu0 %v4044
    %4345 = vmatprep.subr.bf16.mxu0 %v4041
    %4346 = vmatpush2.bf16.msra.mxu0 %v4040
    %4347 = vmatprep.subr.bf16.mxu0 %v4037
    %4348 = vmatpush2.bf16.msra.mxu0 %v4036
    %4349 = vmatprep.mubr.bf16.mxu0 %v3404
    %4350 = vmatmul.mubr.bf16.gmra.mxu0 %v3403
    %v4351 = vpop.f32.mrf.mxu0
    %v4352 = vadd.f32 %v4311, %v4351
    %v4353 = vpop.f32.mrf.mxu0
    %v4354 = vadd.f32 %v4313, %v4353
    %v4355 = vpop.f32.mrf.mxu0
    %v4356 = vpop.f32.mrf.mxu0
    %4357 = vdwg.mxu0
    %v4358 = vmax.f32 %v4270, 0.0
    %v4359 = vmax.f32 %v4272, 0.0
    %v4360 = vmax.f32 %v4352, 0.0
    %v4361 = vmax.f32 %v4354, 0.0
    %s4362 = scalar_lea.vmem [#allocation19], 6
    %v4363 = vld [vmem:[%s4362] ss:$8 sm:$0xf]
    %v4364 = vpack.c.bf16 %v4358, %v4358
    %v4365 = vpack.c.bf16 %v4359, %v4359
    %v4366 = vpack.c.bf16 %v4360, %v4360
    %v4367 = vpack.c.bf16 %v4361, %v4361
    %v4368 = vld [vmem:[#allocation16] sm:$0xff]
    %v4369 = vld [vmem:[#allocation16 + $0x8] sm:$0xff]
    %v4370 = vld [vmem:[#allocation16 + $0x10] sm:$0xff]
    %v4371 = vld [vmem:[#allocation16 + $0x18] sm:$0xff]
    %v4372 = vld [vmem:[#allocation16 + $0x20] sm:$0xff]
    %v4373 = vld [vmem:[#allocation16 + $0x28] sm:$0xff]
    %v4374 = vld [vmem:[#allocation16 + $0x30] sm:$0xff]
    %v4375 = vld [vmem:[#allocation16 + $0x38] sm:$0xff]
    %v4376 = vld [vmem:[#allocation16 + $0x40] sm:$0xff]
    %v4377 = vld [vmem:[#allocation16 + $0x48] sm:$0xff]
    %v4378 = vld [vmem:[#allocation16 + $0x50] sm:$0xff]
    %v4379 = vld [vmem:[#allocation16 + $0x58] sm:$0xff]
    %v4380 = vld [vmem:[#allocation16 + $0x60] sm:$0xff]
    %v4381 = vld [vmem:[#allocation16 + $0x68] sm:$0xff]
    %v4382 = vld [vmem:[#allocation16 + $0x70] sm:$0xff]
    %v4383 = vld [vmem:[#allocation16 + $0x78] sm:$0xff]
    %v4384 = vld [vmem:[#allocation16 + $0x80] sm:$0xff]
    %v4385 = vld [vmem:[#allocation16 + $0x88] sm:$0xff]
    %v4386 = vld [vmem:[#allocation16 + $0x90] sm:$0xff]
    %v4387 = vld [vmem:[#allocation16 + $0x98] sm:$0xff]
    %v4388 = vld [vmem:[#allocation16 + $0xa0] sm:$0xff]
    %v4389 = vld [vmem:[#allocation16 + $0xa8] sm:$0xff]
    %v4390 = vld [vmem:[#allocation16 + $0xb0] sm:$0xff]
    %v4391 = vld [vmem:[#allocation16 + $0xb8] sm:$0xff]
    %v4392 = vld [vmem:[#allocation16 + $0xc0] sm:$0xff]
    %v4393 = vld [vmem:[#allocation16 + $0xc8] sm:$0xff]
    %v4394 = vld [vmem:[#allocation16 + $0xd0] sm:$0xff]
    %v4395 = vld [vmem:[#allocation16 + $0xd8] sm:$0xff]
    %v4396 = vld [vmem:[#allocation16 + $0xe0] sm:$0xff]
    %v4397 = vld [vmem:[#allocation16 + $0xe8] sm:$0xff]
    %v4398 = vld [vmem:[#allocation16 + $0xf0] sm:$0xff]
    %v4399 = vld [vmem:[#allocation16 + $0xf8] sm:$0xff]
    %v4400 = vld [vmem:[#allocation16 + $0x100] sm:$0xff]
    %v4401 = vld [vmem:[#allocation16 + $0x108] sm:$0xff]
    %v4402 = vld [vmem:[#allocation16 + $0x110] sm:$0xff]
    %v4403 = vld [vmem:[#allocation16 + $0x118] sm:$0xff]
    %v4404 = vld [vmem:[#allocation16 + $0x120] sm:$0xff]
    %v4405 = vld [vmem:[#allocation16 + $0x128] sm:$0xff]
    %v4406 = vld [vmem:[#allocation16 + $0x130] sm:$0xff]
    %v4407 = vld [vmem:[#allocation16 + $0x138] sm:$0xff]
    %v4408 = vld [vmem:[#allocation16 + $0x140] sm:$0xff]
    %v4409 = vld [vmem:[#allocation16 + $0x148] sm:$0xff]
    %v4410 = vld [vmem:[#allocation16 + $0x150] sm:$0xff]
    %v4411 = vld [vmem:[#allocation16 + $0x158] sm:$0xff]
    %v4412 = vld [vmem:[#allocation16 + $0x160] sm:$0xff]
    %v4413 = vld [vmem:[#allocation16 + $0x168] sm:$0xff]
    %v4414 = vld [vmem:[#allocation16 + $0x170] sm:$0xff]
    %v4415 = vld [vmem:[#allocation16 + $0x178] sm:$0xff]
    %v4416 = vld [vmem:[#allocation16 + $0x180] sm:$0xff]
    %v4417 = vld [vmem:[#allocation16 + $0x188] sm:$0xff]
    %v4418 = vld [vmem:[#allocation16 + $0x190] sm:$0xff]
    %v4419 = vld [vmem:[#allocation16 + $0x198] sm:$0xff]
    %v4420 = vld [vmem:[#allocation16 + $0x1a0] sm:$0xff]
    %v4421 = vld [vmem:[#allocation16 + $0x1a8] sm:$0xff]
    %v4422 = vld [vmem:[#allocation16 + $0x1b0] sm:$0xff]
    %v4423 = vld [vmem:[#allocation16 + $0x1b8] sm:$0xff]
    %v4424 = vld [vmem:[#allocation16 + $0x1c0] sm:$0xff]
    %v4425 = vld [vmem:[#allocation16 + $0x1c8] sm:$0xff]
    %v4426 = vld [vmem:[#allocation16 + $0x1d0] sm:$0xff]
    %v4427 = vld [vmem:[#allocation16 + $0x1d8] sm:$0xff]
    %v4428 = vld [vmem:[#allocation16 + $0x1e0] sm:$0xff]
    %v4429 = vld [vmem:[#allocation16 + $0x1e8] sm:$0xff]
    %v4430 = vld [vmem:[#allocation16 + $0x1f0] sm:$0xff]
    %v4431 = vld [vmem:[#allocation16 + $0x1f8] sm:$0xff]
    %v4432 = vld [vmem:[#allocation16 + $0x200] sm:$0xff]
    %v4433 = vld [vmem:[#allocation16 + $0x208] sm:$0xff]
    %v4434 = vld [vmem:[#allocation16 + $0x210] sm:$0xff]
    %v4435 = vld [vmem:[#allocation16 + $0x218] sm:$0xff]
    %v4436 = vld [vmem:[#allocation16 + $0x220] sm:$0xff]
    %v4437 = vld [vmem:[#allocation16 + $0x228] sm:$0xff]
    %v4438 = vld [vmem:[#allocation16 + $0x230] sm:$0xff]
    %v4439 = vld [vmem:[#allocation16 + $0x238] sm:$0xff]
    %v4440 = vld [vmem:[#allocation16 + $0x240] sm:$0xff]
    %v4441 = vld [vmem:[#allocation16 + $0x248] sm:$0xff]
    %v4442 = vld [vmem:[#allocation16 + $0x250] sm:$0xff]
    %v4443 = vld [vmem:[#allocation16 + $0x258] sm:$0xff]
    %v4444 = vld [vmem:[#allocation16 + $0x260] sm:$0xff]
    %v4445 = vld [vmem:[#allocation16 + $0x268] sm:$0xff]
    %v4446 = vld [vmem:[#allocation16 + $0x270] sm:$0xff]
    %v4447 = vld [vmem:[#allocation16 + $0x278] sm:$0xff]
    %v4448 = vld [vmem:[#allocation16 + $0x280] sm:$0xff]
    %v4449 = vld [vmem:[#allocation16 + $0x288] sm:$0xff]
    %v4450 = vld [vmem:[#allocation16 + $0x290] sm:$0xff]
    %v4451 = vld [vmem:[#allocation16 + $0x298] sm:$0xff]
    %v4452 = vld [vmem:[#allocation16 + $0x2a0] sm:$0xff]
    %v4453 = vld [vmem:[#allocation16 + $0x2a8] sm:$0xff]
    %v4454 = vld [vmem:[#allocation16 + $0x2b0] sm:$0xff]
    %v4455 = vld [vmem:[#allocation16 + $0x2b8] sm:$0xff]
    %v4456 = vld [vmem:[#allocation16 + $0x2c0] sm:$0xff]
    %v4457 = vld [vmem:[#allocation16 + $0x2c8] sm:$0xff]
    %v4458 = vld [vmem:[#allocation16 + $0x2d0] sm:$0xff]
    %v4459 = vld [vmem:[#allocation16 + $0x2d8] sm:$0xff]
    %v4460 = vld [vmem:[#allocation16 + $0x2e0] sm:$0xff]
    %v4461 = vld [vmem:[#allocation16 + $0x2e8] sm:$0xff]
    %v4462 = vld [vmem:[#allocation16 + $0x2f0] sm:$0xff]
    %v4463 = vld [vmem:[#allocation16 + $0x2f8] sm:$0xff]
    %v4464 = vld [vmem:[#allocation16 + $0x300] sm:$0xff]
    %v4465 = vld [vmem:[#allocation16 + $0x308] sm:$0xff]
    %v4466 = vld [vmem:[#allocation16 + $0x310] sm:$0xff]
    %v4467 = vld [vmem:[#allocation16 + $0x318] sm:$0xff]
    %v4468 = vld [vmem:[#allocation16 + $0x320] sm:$0xff]
    %v4469 = vld [vmem:[#allocation16 + $0x328] sm:$0xff]
    %v4470 = vld [vmem:[#allocation16 + $0x330] sm:$0xff]
    %v4471 = vld [vmem:[#allocation16 + $0x338] sm:$0xff]
    %v4472 = vld [vmem:[#allocation16 + $0x340] sm:$0xff]
    %v4473 = vld [vmem:[#allocation16 + $0x348] sm:$0xff]
    %v4474 = vld [vmem:[#allocation16 + $0x350] sm:$0xff]
    %v4475 = vld [vmem:[#allocation16 + $0x358] sm:$0xff]
    %v4476 = vld [vmem:[#allocation16 + $0x360] sm:$0xff]
    %v4477 = vld [vmem:[#allocation16 + $0x368] sm:$0xff]
    %v4478 = vld [vmem:[#allocation16 + $0x370] sm:$0xff]
    %v4479 = vld [vmem:[#allocation16 + $0x378] sm:$0xff]
    %v4480 = vld [vmem:[#allocation16 + $0x380] sm:$0xff]
    %v4481 = vld [vmem:[#allocation16 + $0x388] sm:$0xff]
    %v4482 = vld [vmem:[#allocation16 + $0x390] sm:$0xff]
    %v4483 = vld [vmem:[#allocation16 + $0x398] sm:$0xff]
    %v4484 = vld [vmem:[#allocation16 + $0x3a0] sm:$0xff]
    %v4485 = vld [vmem:[#allocation16 + $0x3a8] sm:$0xff]
    %v4486 = vld [vmem:[#allocation16 + $0x3b0] sm:$0xff]
    %v4487 = vld [vmem:[#allocation16 + $0x3b8] sm:$0xff]
    %v4488 = vld [vmem:[#allocation16 + $0x3c0] sm:$0xff]
    %v4489 = vld [vmem:[#allocation16 + $0x3c8] sm:$0xff]
    %v4490 = vld [vmem:[#allocation16 + $0x3d0] sm:$0xff]
    %v4491 = vld [vmem:[#allocation16 + $0x3d8] sm:$0xff]
    %v4492 = vld [vmem:[#allocation16 + $0x3e0] sm:$0xff]
    %v4493 = vld [vmem:[#allocation16 + $0x3e8] sm:$0xff]
    %v4494 = vld [vmem:[#allocation16 + $0x3f0] sm:$0xff]
    %v4495 = vld [vmem:[#allocation16 + $0x3f8] sm:$0xff]
    %v4497 = vlaneseq
    %v4498 = vshrl.u32 %v4497, 7
    %v4499 = vsub.s32 0, %v4498
    %v4500 = vrot.slane %v4363, %v4499
    %v4501 = vlaneseq
    %v4502 = vshrl.u32 %v4501, 7
    %v4503 = vsub.s32 1, %v4502
    %v4504 = vrot.slane %v4363, %v4503
    %v4505 = vlaneseq
    %v4506 = vshrl.u32 %v4505, 7
    %v4507 = vsub.s32 2, %v4506
    %v4508 = vrot.slane %v4363, %v4507
    %v4509 = vlaneseq
    %v4510 = vshrl.u32 %v4509, 7
    %v4511 = vsub.s32 3, %v4510
    %v4512 = vrot.slane %v4363, %v4511
    %v4645 = vunpack.c.l.b16 %v4368
    %v4646 = vunpack.c.h.b16 %v4368
    %v4647 = vunpack.c.l.b16 %v4369
    %v4648 = vunpack.c.h.b16 %v4369
    %v4649 = vunpack.c.l.b16 %v4370
    %v4650 = vunpack.c.h.b16 %v4370
    %v4651 = vunpack.c.l.b16 %v4371
    %v4652 = vunpack.c.h.b16 %v4371
    %v4653 = vunpack.c.l.b16 %v4372
    %v4654 = vunpack.c.h.b16 %v4372
    %v4655 = vunpack.c.l.b16 %v4373
    %v4656 = vunpack.c.h.b16 %v4373
    %v4657 = vunpack.c.l.b16 %v4374
    %v4658 = vunpack.c.h.b16 %v4374
    %v4659 = vunpack.c.l.b16 %v4375
    %v4660 = vunpack.c.h.b16 %v4375
    %v4661 = vunpack.c.l.b16 %v4376
    %v4662 = vunpack.c.h.b16 %v4376
    %v4663 = vunpack.c.l.b16 %v4377
    %v4664 = vunpack.c.h.b16 %v4377
    %v4665 = vunpack.c.l.b16 %v4378
    %v4666 = vunpack.c.h.b16 %v4378
    %v4667 = vunpack.c.l.b16 %v4379
    %v4668 = vunpack.c.h.b16 %v4379
    %v4669 = vunpack.c.l.b16 %v4380
    %v4670 = vunpack.c.h.b16 %v4380
    %v4671 = vunpack.c.l.b16 %v4381
    %v4672 = vunpack.c.h.b16 %v4381
    %v4673 = vunpack.c.l.b16 %v4382
    %v4674 = vunpack.c.h.b16 %v4382
    %v4675 = vunpack.c.l.b16 %v4383
    %v4676 = vunpack.c.h.b16 %v4383
    %v4677 = vunpack.c.l.b16 %v4384
    %v4678 = vunpack.c.h.b16 %v4384
    %v4679 = vunpack.c.l.b16 %v4385
    %v4680 = vunpack.c.h.b16 %v4385
    %v4681 = vunpack.c.l.b16 %v4386
    %v4682 = vunpack.c.h.b16 %v4386
    %v4683 = vunpack.c.l.b16 %v4387
    %v4684 = vunpack.c.h.b16 %v4387
    %v4685 = vunpack.c.l.b16 %v4388
    %v4686 = vunpack.c.h.b16 %v4388
    %v4687 = vunpack.c.l.b16 %v4389
    %v4688 = vunpack.c.h.b16 %v4389
    %v4689 = vunpack.c.l.b16 %v4390
    %v4690 = vunpack.c.h.b16 %v4390
    %v4691 = vunpack.c.l.b16 %v4391
    %v4692 = vunpack.c.h.b16 %v4391
    %v4693 = vunpack.c.l.b16 %v4392
    %v4694 = vunpack.c.h.b16 %v4392
    %v4695 = vunpack.c.l.b16 %v4393
    %v4696 = vunpack.c.h.b16 %v4393
    %v4697 = vunpack.c.l.b16 %v4394
    %v4698 = vunpack.c.h.b16 %v4394
    %v4699 = vunpack.c.l.b16 %v4395
    %v4700 = vunpack.c.h.b16 %v4395
    %v4701 = vunpack.c.l.b16 %v4396
    %v4702 = vunpack.c.h.b16 %v4396
    %v4703 = vunpack.c.l.b16 %v4397
    %v4704 = vunpack.c.h.b16 %v4397
    %v4705 = vunpack.c.l.b16 %v4398
    %v4706 = vunpack.c.h.b16 %v4398
    %v4707 = vunpack.c.l.b16 %v4399
    %v4708 = vunpack.c.h.b16 %v4399
    %v4709 = vunpack.c.l.b16 %v4400
    %v4710 = vunpack.c.h.b16 %v4400
    %v4711 = vunpack.c.l.b16 %v4401
    %v4712 = vunpack.c.h.b16 %v4401
    %v4713 = vunpack.c.l.b16 %v4402
    %v4714 = vunpack.c.h.b16 %v4402
    %v4715 = vunpack.c.l.b16 %v4403
    %v4716 = vunpack.c.h.b16 %v4403
    %v4717 = vunpack.c.l.b16 %v4404
    %v4718 = vunpack.c.h.b16 %v4404
    %v4719 = vunpack.c.l.b16 %v4405
    %v4720 = vunpack.c.h.b16 %v4405
    %v4721 = vunpack.c.l.b16 %v4406
    %v4722 = vunpack.c.h.b16 %v4406
    %v4723 = vunpack.c.l.b16 %v4407
    %v4724 = vunpack.c.h.b16 %v4407
    %v4725 = vunpack.c.l.b16 %v4408
    %v4726 = vunpack.c.h.b16 %v4408
    %v4727 = vunpack.c.l.b16 %v4409
    %v4728 = vunpack.c.h.b16 %v4409
    %v4729 = vunpack.c.l.b16 %v4410
    %v4730 = vunpack.c.h.b16 %v4410
    %v4731 = vunpack.c.l.b16 %v4411
    %v4732 = vunpack.c.h.b16 %v4411
    %v4733 = vunpack.c.l.b16 %v4412
    %v4734 = vunpack.c.h.b16 %v4412
    %v4735 = vunpack.c.l.b16 %v4413
    %v4736 = vunpack.c.h.b16 %v4413
    %v4737 = vunpack.c.l.b16 %v4414
    %v4738 = vunpack.c.h.b16 %v4414
    %v4739 = vunpack.c.l.b16 %v4415
    %v4740 = vunpack.c.h.b16 %v4415
    %v4741 = vunpack.c.l.b16 %v4416
    %v4742 = vunpack.c.h.b16 %v4416
    %v4743 = vunpack.c.l.b16 %v4417
    %v4744 = vunpack.c.h.b16 %v4417
    %v4745 = vunpack.c.l.b16 %v4418
    %v4746 = vunpack.c.h.b16 %v4418
    %v4747 = vunpack.c.l.b16 %v4419
    %v4748 = vunpack.c.h.b16 %v4419
    %v4749 = vunpack.c.l.b16 %v4420
    %v4750 = vunpack.c.h.b16 %v4420
    %v4751 = vunpack.c.l.b16 %v4421
    %v4752 = vunpack.c.h.b16 %v4421
    %v4753 = vunpack.c.l.b16 %v4422
    %v4754 = vunpack.c.h.b16 %v4422
    %v4755 = vunpack.c.l.b16 %v4423
    %v4756 = vunpack.c.h.b16 %v4423
    %v4757 = vunpack.c.l.b16 %v4424
    %v4758 = vunpack.c.h.b16 %v4424
    %v4759 = vunpack.c.l.b16 %v4425
    %v4760 = vunpack.c.h.b16 %v4425
    %v4761 = vunpack.c.l.b16 %v4426
    %v4762 = vunpack.c.h.b16 %v4426
    %v4763 = vunpack.c.l.b16 %v4427
    %v4764 = vunpack.c.h.b16 %v4427
    %v4765 = vunpack.c.l.b16 %v4428
    %v4766 = vunpack.c.h.b16 %v4428
    %v4767 = vunpack.c.l.b16 %v4429
    %v4768 = vunpack.c.h.b16 %v4429
    %v4769 = vunpack.c.l.b16 %v4430
    %v4770 = vunpack.c.h.b16 %v4430
    %v4771 = vunpack.c.l.b16 %v4431
    %v4772 = vunpack.c.h.b16 %v4431
    %v4773 = vunpack.c.l.b16 %v4432
    %v4774 = vunpack.c.h.b16 %v4432
    %v4775 = vunpack.c.l.b16 %v4433
    %v4776 = vunpack.c.h.b16 %v4433
    %v4777 = vunpack.c.l.b16 %v4434
    %v4778 = vunpack.c.h.b16 %v4434
    %v4779 = vunpack.c.l.b16 %v4435
    %v4780 = vunpack.c.h.b16 %v4435
    %v4781 = vunpack.c.l.b16 %v4436
    %v4782 = vunpack.c.h.b16 %v4436
    %v4783 = vunpack.c.l.b16 %v4437
    %v4784 = vunpack.c.h.b16 %v4437
    %v4785 = vunpack.c.l.b16 %v4438
    %v4786 = vunpack.c.h.b16 %v4438
    %v4787 = vunpack.c.l.b16 %v4439
    %v4788 = vunpack.c.h.b16 %v4439
    %v4789 = vunpack.c.l.b16 %v4440
    %v4790 = vunpack.c.h.b16 %v4440
    %v4791 = vunpack.c.l.b16 %v4441
    %v4792 = vunpack.c.h.b16 %v4441
    %v4793 = vunpack.c.l.b16 %v4442
    %v4794 = vunpack.c.h.b16 %v4442
    %v4795 = vunpack.c.l.b16 %v4443
    %v4796 = vunpack.c.h.b16 %v4443
    %v4797 = vunpack.c.l.b16 %v4444
    %v4798 = vunpack.c.h.b16 %v4444
    %v4799 = vunpack.c.l.b16 %v4445
    %v4800 = vunpack.c.h.b16 %v4445
    %v4801 = vunpack.c.l.b16 %v4446
    %v4802 = vunpack.c.h.b16 %v4446
    %v4803 = vunpack.c.l.b16 %v4447
    %v4804 = vunpack.c.h.b16 %v4447
    %v4805 = vunpack.c.l.b16 %v4448
    %v4806 = vunpack.c.h.b16 %v4448
    %v4807 = vunpack.c.l.b16 %v4449
    %v4808 = vunpack.c.h.b16 %v4449
    %v4809 = vunpack.c.l.b16 %v4450
    %v4810 = vunpack.c.h.b16 %v4450
    %v4811 = vunpack.c.l.b16 %v4451
    %v4812 = vunpack.c.h.b16 %v4451
    %v4813 = vunpack.c.l.b16 %v4452
    %v4814 = vunpack.c.h.b16 %v4452
    %v4815 = vunpack.c.l.b16 %v4453
    %v4816 = vunpack.c.h.b16 %v4453
    %v4817 = vunpack.c.l.b16 %v4454
    %v4818 = vunpack.c.h.b16 %v4454
    %v4819 = vunpack.c.l.b16 %v4455
    %v4820 = vunpack.c.h.b16 %v4455
    %v4821 = vunpack.c.l.b16 %v4456
    %v4822 = vunpack.c.h.b16 %v4456
    %v4823 = vunpack.c.l.b16 %v4457
    %v4824 = vunpack.c.h.b16 %v4457
    %v4825 = vunpack.c.l.b16 %v4458
    %v4826 = vunpack.c.h.b16 %v4458
    %v4827 = vunpack.c.l.b16 %v4459
    %v4828 = vunpack.c.h.b16 %v4459
    %v4829 = vunpack.c.l.b16 %v4460
    %v4830 = vunpack.c.h.b16 %v4460
    %v4831 = vunpack.c.l.b16 %v4461
    %v4832 = vunpack.c.h.b16 %v4461
    %v4833 = vunpack.c.l.b16 %v4462
    %v4834 = vunpack.c.h.b16 %v4462
    %v4835 = vunpack.c.l.b16 %v4463
    %v4836 = vunpack.c.h.b16 %v4463
    %v4837 = vunpack.c.l.b16 %v4464
    %v4838 = vunpack.c.h.b16 %v4464
    %v4839 = vunpack.c.l.b16 %v4465
    %v4840 = vunpack.c.h.b16 %v4465
    %v4841 = vunpack.c.l.b16 %v4466
    %v4842 = vunpack.c.h.b16 %v4466
    %v4843 = vunpack.c.l.b16 %v4467
    %v4844 = vunpack.c.h.b16 %v4467
    %v4845 = vunpack.c.l.b16 %v4468
    %v4846 = vunpack.c.h.b16 %v4468
    %v4847 = vunpack.c.l.b16 %v4469
    %v4848 = vunpack.c.h.b16 %v4469
    %v4849 = vunpack.c.l.b16 %v4470
    %v4850 = vunpack.c.h.b16 %v4470
    %v4851 = vunpack.c.l.b16 %v4471
    %v4852 = vunpack.c.h.b16 %v4471
    %v4853 = vunpack.c.l.b16 %v4472
    %v4854 = vunpack.c.h.b16 %v4472
    %v4855 = vunpack.c.l.b16 %v4473
    %v4856 = vunpack.c.h.b16 %v4473
    %v4857 = vunpack.c.l.b16 %v4474
    %v4858 = vunpack.c.h.b16 %v4474
    %v4859 = vunpack.c.l.b16 %v4475
    %v4860 = vunpack.c.h.b16 %v4475
    %v4861 = vunpack.c.l.b16 %v4476
    %v4862 = vunpack.c.h.b16 %v4476
    %v4863 = vunpack.c.l.b16 %v4477
    %v4864 = vunpack.c.h.b16 %v4477
    %v4865 = vunpack.c.l.b16 %v4478
    %v4866 = vunpack.c.h.b16 %v4478
    %v4867 = vunpack.c.l.b16 %v4479
    %v4868 = vunpack.c.h.b16 %v4479
    %v4869 = vunpack.c.l.b16 %v4480
    %v4870 = vunpack.c.h.b16 %v4480
    %v4871 = vunpack.c.l.b16 %v4481
    %v4872 = vunpack.c.h.b16 %v4481
    %v4873 = vunpack.c.l.b16 %v4482
    %v4874 = vunpack.c.h.b16 %v4482
    %v4875 = vunpack.c.l.b16 %v4483
    %v4876 = vunpack.c.h.b16 %v4483
    %v4877 = vunpack.c.l.b16 %v4484
    %v4878 = vunpack.c.h.b16 %v4484
    %v4879 = vunpack.c.l.b16 %v4485
    %v4880 = vunpack.c.h.b16 %v4485
    %v4881 = vunpack.c.l.b16 %v4486
    %v4882 = vunpack.c.h.b16 %v4486
    %v4883 = vunpack.c.l.b16 %v4487
    %v4884 = vunpack.c.h.b16 %v4487
    %v4885 = vunpack.c.l.b16 %v4488
    %v4886 = vunpack.c.h.b16 %v4488
    %v4887 = vunpack.c.l.b16 %v4489
    %v4888 = vunpack.c.h.b16 %v4489
    %v4889 = vunpack.c.l.b16 %v4490
    %v4890 = vunpack.c.h.b16 %v4490
    %v4891 = vunpack.c.l.b16 %v4491
    %v4892 = vunpack.c.h.b16 %v4491
    %v4893 = vunpack.c.l.b16 %v4492
    %v4894 = vunpack.c.h.b16 %v4492
    %v4895 = vunpack.c.l.b16 %v4493
    %v4896 = vunpack.c.h.b16 %v4493
    %v4897 = vunpack.c.l.b16 %v4494
    %v4898 = vunpack.c.h.b16 %v4494
    %v4899 = vunpack.c.l.b16 %v4495
    %v4900 = vunpack.c.h.b16 %v4495
    %v4901 = vpack.c.b16 %v4649, %v4645
    %v4902 = vpack.c.b16 %v4650, %v4646
    %v4903 = vpack.c.b16 %v4651, %v4647
    %v4904 = vpack.c.b16 %v4652, %v4648
    %v4905 = vpack.c.b16 %v4657, %v4653
    %v4906 = vpack.c.b16 %v4658, %v4654
    %v4907 = vpack.c.b16 %v4659, %v4655
    %v4908 = vpack.c.b16 %v4660, %v4656
    %v4909 = vpack.c.b16 %v4665, %v4661
    %v4910 = vpack.c.b16 %v4666, %v4662
    %v4911 = vpack.c.b16 %v4667, %v4663
    %v4912 = vpack.c.b16 %v4668, %v4664
    %v4913 = vpack.c.b16 %v4673, %v4669
    %v4914 = vpack.c.b16 %v4674, %v4670
    %v4915 = vpack.c.b16 %v4675, %v4671
    %v4916 = vpack.c.b16 %v4676, %v4672
    %v4917 = vpack.c.b16 %v4681, %v4677
    %v4918 = vpack.c.b16 %v4682, %v4678
    %v4919 = vpack.c.b16 %v4683, %v4679
    %v4920 = vpack.c.b16 %v4684, %v4680
    %v4921 = vpack.c.b16 %v4689, %v4685
    %v4922 = vpack.c.b16 %v4690, %v4686
    %v4923 = vpack.c.b16 %v4691, %v4687
    %v4924 = vpack.c.b16 %v4692, %v4688
    %v4925 = vpack.c.b16 %v4697, %v4693
    %v4926 = vpack.c.b16 %v4698, %v4694
    %v4927 = vpack.c.b16 %v4699, %v4695
    %v4928 = vpack.c.b16 %v4700, %v4696
    %v4929 = vpack.c.b16 %v4705, %v4701
    %v4930 = vpack.c.b16 %v4706, %v4702
    %v4931 = vpack.c.b16 %v4707, %v4703
    %v4932 = vpack.c.b16 %v4708, %v4704
    %v4933 = vpack.c.b16 %v4713, %v4709
    %v4934 = vpack.c.b16 %v4714, %v4710
    %v4935 = vpack.c.b16 %v4715, %v4711
    %v4936 = vpack.c.b16 %v4716, %v4712
    %v4937 = vpack.c.b16 %v4721, %v4717
    %v4938 = vpack.c.b16 %v4722, %v4718
    %v4939 = vpack.c.b16 %v4723, %v4719
    %v4940 = vpack.c.b16 %v4724, %v4720
    %v4941 = vpack.c.b16 %v4729, %v4725
    %v4942 = vpack.c.b16 %v4730, %v4726
    %v4943 = vpack.c.b16 %v4731, %v4727
    %v4944 = vpack.c.b16 %v4732, %v4728
    %v4945 = vpack.c.b16 %v4737, %v4733
    %v4946 = vpack.c.b16 %v4738, %v4734
    %v4947 = vpack.c.b16 %v4739, %v4735
    %v4948 = vpack.c.b16 %v4740, %v4736
    %v4949 = vpack.c.b16 %v4745, %v4741
    %v4950 = vpack.c.b16 %v4746, %v4742
    %v4951 = vpack.c.b16 %v4747, %v4743
    %v4952 = vpack.c.b16 %v4748, %v4744
    %v4953 = vpack.c.b16 %v4753, %v4749
    %v4954 = vpack.c.b16 %v4754, %v4750
    %v4955 = vpack.c.b16 %v4755, %v4751
    %v4956 = vpack.c.b16 %v4756, %v4752
    %v4957 = vpack.c.b16 %v4761, %v4757
    %v4958 = vpack.c.b16 %v4762, %v4758
    %v4959 = vpack.c.b16 %v4763, %v4759
    %v4960 = vpack.c.b16 %v4764, %v4760
    %v4961 = vpack.c.b16 %v4769, %v4765
    %v4962 = vpack.c.b16 %v4770, %v4766
    %v4963 = vpack.c.b16 %v4771, %v4767
    %v4964 = vpack.c.b16 %v4772, %v4768
    %v4965 = vpack.c.b16 %v4777, %v4773
    %v4966 = vpack.c.b16 %v4778, %v4774
    %v4967 = vpack.c.b16 %v4779, %v4775
    %v4968 = vpack.c.b16 %v4780, %v4776
    %v4969 = vpack.c.b16 %v4785, %v4781
    %v4970 = vpack.c.b16 %v4786, %v4782
    %v4971 = vpack.c.b16 %v4787, %v4783
    %v4972 = vpack.c.b16 %v4788, %v4784
    %v4973 = vpack.c.b16 %v4793, %v4789
    %v4974 = vpack.c.b16 %v4794, %v4790
    %v4975 = vpack.c.b16 %v4795, %v4791
    %v4976 = vpack.c.b16 %v4796, %v4792
    %v4977 = vpack.c.b16 %v4801, %v4797
    %v4978 = vpack.c.b16 %v4802, %v4798
    %v4979 = vpack.c.b16 %v4803, %v4799
    %v4980 = vpack.c.b16 %v4804, %v4800
    %v4981 = vpack.c.b16 %v4809, %v4805
    %v4982 = vpack.c.b16 %v4810, %v4806
    %v4983 = vpack.c.b16 %v4811, %v4807
    %v4984 = vpack.c.b16 %v4812, %v4808
    %v4985 = vpack.c.b16 %v4817, %v4813
    %v4986 = vpack.c.b16 %v4818, %v4814
    %v4987 = vpack.c.b16 %v4819, %v4815
    %v4988 = vpack.c.b16 %v4820, %v4816
    %v4989 = vpack.c.b16 %v4825, %v4821
    %v4990 = vpack.c.b16 %v4826, %v4822
    %v4991 = vpack.c.b16 %v4827, %v4823
    %v4992 = vpack.c.b16 %v4828, %v4824
    %v4993 = vpack.c.b16 %v4833, %v4829
    %v4994 = vpack.c.b16 %v4834, %v4830
    %v4995 = vpack.c.b16 %v4835, %v4831
    %v4996 = vpack.c.b16 %v4836, %v4832
    %v4997 = vpack.c.b16 %v4841, %v4837
    %v4998 = vpack.c.b16 %v4842, %v4838
    %v4999 = vpack.c.b16 %v4843, %v4839
    %v5000 = vpack.c.b16 %v4844, %v4840
    %v5001 = vpack.c.b16 %v4849, %v4845
    %v5002 = vpack.c.b16 %v4850, %v4846
    %v5003 = vpack.c.b16 %v4851, %v4847
    %v5004 = vpack.c.b16 %v4852, %v4848
    %v5005 = vpack.c.b16 %v4857, %v4853
    %v5006 = vpack.c.b16 %v4858, %v4854
    %v5007 = vpack.c.b16 %v4859, %v4855
    %v5008 = vpack.c.b16 %v4860, %v4856
    %v5009 = vpack.c.b16 %v4865, %v4861
    %v5010 = vpack.c.b16 %v4866, %v4862
    %v5011 = vpack.c.b16 %v4867, %v4863
    %v5012 = vpack.c.b16 %v4868, %v4864
    %v5013 = vpack.c.b16 %v4873, %v4869
    %v5014 = vpack.c.b16 %v4874, %v4870
    %v5015 = vpack.c.b16 %v4875, %v4871
    %v5016 = vpack.c.b16 %v4876, %v4872
    %v5017 = vpack.c.b16 %v4881, %v4877
    %v5018 = vpack.c.b16 %v4882, %v4878
    %v5019 = vpack.c.b16 %v4883, %v4879
    %v5020 = vpack.c.b16 %v4884, %v4880
    %v5021 = vpack.c.b16 %v4889, %v4885
    %v5022 = vpack.c.b16 %v4890, %v4886
    %v5023 = vpack.c.b16 %v4891, %v4887
    %v5024 = vpack.c.b16 %v4892, %v4888
    %v5025 = vpack.c.b16 %v4897, %v4893
    %v5026 = vpack.c.b16 %v4898, %v4894
    %v5027 = vpack.c.b16 %v4899, %v4895
    %v5028 = vpack.c.b16 %v4900, %v4896
    %5157 = vmatprep.subr.bf16.mxu0 %v4930
    %5158 = vmatpush1.bf16.msra.mxu0 %v4929
    %5159 = vmatprep.subr.bf16.mxu0 %v4926
    %5160 = vmatpush1.bf16.msra.mxu0 %v4925
    %5161 = vmatprep.subr.bf16.mxu0 %v4922
    %5162 = vmatpush1.bf16.msra.mxu0 %v4921
    %5163 = vmatprep.subr.bf16.mxu0 %v4918
    %5164 = vmatpush1.bf16.msra.mxu0 %v4917
    %5165 = vmatprep.subr.bf16.mxu0 %v4914
    %5166 = vmatpush1.bf16.msra.mxu0 %v4913
    %5167 = vmatprep.subr.bf16.mxu0 %v4910
    %5168 = vmatpush1.bf16.msra.mxu0 %v4909
    %5169 = vmatprep.subr.bf16.mxu0 %v4906
    %5170 = vmatpush1.bf16.msra.mxu0 %v4905
    %5171 = vmatprep.subr.bf16.mxu0 %v4902
    %5172 = vmatpush1.bf16.msra.mxu0 %v4901
    %5173 = vmatprep.subr.bf16.mxu0 %v4962
    %5174 = vmatpush2.bf16.msra.mxu0 %v4961
    %5175 = vmatprep.subr.bf16.mxu0 %v4958
    %5176 = vmatpush2.bf16.msra.mxu0 %v4957
    %5177 = vmatprep.subr.bf16.mxu0 %v4954
    %5178 = vmatpush2.bf16.msra.mxu0 %v4953
    %5179 = vmatprep.subr.bf16.mxu0 %v4950
    %5180 = vmatpush2.bf16.msra.mxu0 %v4949
    %5181 = vmatprep.subr.bf16.mxu0 %v4946
    %5182 = vmatpush2.bf16.msra.mxu0 %v4945
    %5183 = vmatprep.subr.bf16.mxu0 %v4942
    %5184 = vmatpush2.bf16.msra.mxu0 %v4941
    %5185 = vmatprep.subr.bf16.mxu0 %v4938
    %5186 = vmatpush2.bf16.msra.mxu0 %v4937
    %5187 = vmatprep.subr.bf16.mxu0 %v4934
    %5188 = vmatpush2.bf16.msra.mxu0 %v4933
    %5189 = vmatprep.mubr.bf16.mxu0 %v4365
    %5190 = vmatmul.mubr.bf16.gmra.mxu0 %v4364
    %v5191 = vpop.f32.mrf.mxu0
    %v5192 = vadd.f32 %v4500, %v5191
    %v5193 = vpop.f32.mrf.mxu0
    %v5194 = vadd.f32 %v4504, %v5193
    %v5195 = vpop.f32.mrf.mxu0
    %v5196 = vpop.f32.mrf.mxu0
    %5197 = vdwg.mxu0
    %5198 = vmatprep.subr.bf16.mxu0 %v4994
    %5199 = vmatpush1.bf16.msra.mxu0 %v4993
    %5200 = vmatprep.subr.bf16.mxu0 %v4990
    %5201 = vmatpush1.bf16.msra.mxu0 %v4989
    %5202 = vmatprep.subr.bf16.mxu0 %v4986
    %5203 = vmatpush1.bf16.msra.mxu0 %v4985
    %5204 = vmatprep.subr.bf16.mxu0 %v4982
    %5205 = vmatpush1.bf16.msra.mxu0 %v4981
    %5206 = vmatprep.subr.bf16.mxu0 %v4978
    %5207 = vmatpush1.bf16.msra.mxu0 %v4977
    %5208 = vmatprep.subr.bf16.mxu0 %v4974
    %5209 = vmatpush1.bf16.msra.mxu0 %v4973
    %5210 = vmatprep.subr.bf16.mxu0 %v4970
    %5211 = vmatpush1.bf16.msra.mxu0 %v4969
    %5212 = vmatprep.subr.bf16.mxu0 %v4966
    %5213 = vmatpush1.bf16.msra.mxu0 %v4965
    %5214 = vmatprep.subr.bf16.mxu0 %v5026
    %5215 = vmatpush2.bf16.msra.mxu0 %v5025
    %5216 = vmatprep.subr.bf16.mxu0 %v5022
    %5217 = vmatpush2.bf16.msra.mxu0 %v5021
    %5218 = vmatprep.subr.bf16.mxu0 %v5018
    %5219 = vmatpush2.bf16.msra.mxu0 %v5017
    %5220 = vmatprep.subr.bf16.mxu0 %v5014
    %5221 = vmatpush2.bf16.msra.mxu0 %v5013
    %5222 = vmatprep.subr.bf16.mxu0 %v5010
    %5223 = vmatpush2.bf16.msra.mxu0 %v5009
    %5224 = vmatprep.subr.bf16.mxu0 %v5006
    %5225 = vmatpush2.bf16.msra.mxu0 %v5005
    %5226 = vmatprep.subr.bf16.mxu0 %v5002
    %5227 = vmatpush2.bf16.msra.mxu0 %v5001
    %5228 = vmatprep.subr.bf16.mxu0 %v4998
    %5229 = vmatpush2.bf16.msra.mxu0 %v4997
    %5230 = vmatprep.mubr.bf16.mxu0 %v4367
    %5231 = vmatmul.mubr.bf16.gmra.mxu0 %v4366
    %v5232 = vpop.f32.mrf.mxu0
    %v5233 = vadd.f32 %v5192, %v5232
    %v5234 = vpop.f32.mrf.mxu0
    %v5235 = vadd.f32 %v5194, %v5234
    %v5236 = vpop.f32.mrf.mxu0
    %v5237 = vpop.f32.mrf.mxu0
    %5238 = vdwg.mxu0
    %5239 = vmatprep.subr.bf16.mxu0 %v4932
    %5240 = vmatpush1.bf16.msra.mxu0 %v4931
    %5241 = vmatprep.subr.bf16.mxu0 %v4928
    %5242 = vmatpush1.bf16.msra.mxu0 %v4927
    %5243 = vmatprep.subr.bf16.mxu0 %v4924
    %5244 = vmatpush1.bf16.msra.mxu0 %v4923
    %5245 = vmatprep.subr.bf16.mxu0 %v4920
    %5246 = vmatpush1.bf16.msra.mxu0 %v4919
    %5247 = vmatprep.subr.bf16.mxu0 %v4916
    %5248 = vmatpush1.bf16.msra.mxu0 %v4915
    %5249 = vmatprep.subr.bf16.mxu0 %v4912
    %5250 = vmatpush1.bf16.msra.mxu0 %v4911
    %5251 = vmatprep.subr.bf16.mxu0 %v4908
    %5252 = vmatpush1.bf16.msra.mxu0 %v4907
    %5253 = vmatprep.subr.bf16.mxu0 %v4904
    %5254 = vmatpush1.bf16.msra.mxu0 %v4903
    %5255 = vmatprep.subr.bf16.mxu0 %v4964
    %5256 = vmatpush2.bf16.msra.mxu0 %v4963
    %5257 = vmatprep.subr.bf16.mxu0 %v4960
    %5258 = vmatpush2.bf16.msra.mxu0 %v4959
    %5259 = vmatprep.subr.bf16.mxu0 %v4956
    %5260 = vmatpush2.bf16.msra.mxu0 %v4955
    %5261 = vmatprep.subr.bf16.mxu0 %v4952
    %5262 = vmatpush2.bf16.msra.mxu0 %v4951
    %5263 = vmatprep.subr.bf16.mxu0 %v4948
    %5264 = vmatpush2.bf16.msra.mxu0 %v4947
    %5265 = vmatprep.subr.bf16.mxu0 %v4944
    %5266 = vmatpush2.bf16.msra.mxu0 %v4943
    %5267 = vmatprep.subr.bf16.mxu0 %v4940
    %5268 = vmatpush2.bf16.msra.mxu0 %v4939
    %5269 = vmatprep.subr.bf16.mxu0 %v4936
    %5270 = vmatpush2.bf16.msra.mxu0 %v4935
    %5271 = vmatprep.mubr.bf16.mxu0 %v4365
    %5272 = vmatmul.mubr.bf16.gmra.mxu0 %v4364
    %v5273 = vpop.f32.mrf.mxu0
    %v5274 = vadd.f32 %v4508, %v5273
    %v5275 = vpop.f32.mrf.mxu0
    %v5276 = vadd.f32 %v4512, %v5275
    %v5277 = vpop.f32.mrf.mxu0
    %v5278 = vpop.f32.mrf.mxu0
    %5279 = vdwg.mxu0
    %5280 = vmatprep.subr.bf16.mxu0 %v4996
    %5281 = vmatpush1.bf16.msra.mxu0 %v4995
    %5282 = vmatprep.subr.bf16.mxu0 %v4992
    %5283 = vmatpush1.bf16.msra.mxu0 %v4991
    %5284 = vmatprep.subr.bf16.mxu0 %v4988
    %5285 = vmatpush1.bf16.msra.mxu0 %v4987
    %5286 = vmatprep.subr.bf16.mxu0 %v4984
    %5287 = vmatpush1.bf16.msra.mxu0 %v4983
    %5288 = vmatprep.subr.bf16.mxu0 %v4980
    %5289 = vmatpush1.bf16.msra.mxu0 %v4979
    %5290 = vmatprep.subr.bf16.mxu0 %v4976
    %5291 = vmatpush1.bf16.msra.mxu0 %v4975
    %5292 = vmatprep.subr.bf16.mxu0 %v4972
    %5293 = vmatpush1.bf16.msra.mxu0 %v4971
    %5294 = vmatprep.subr.bf16.mxu0 %v4968
    %5295 = vmatpush1.bf16.msra.mxu0 %v4967
    %5296 = vmatprep.subr.bf16.mxu0 %v5028
    %5297 = vmatpush2.bf16.msra.mxu0 %v5027
    %5298 = vmatprep.subr.bf16.mxu0 %v5024
    %5299 = vmatpush2.bf16.msra.mxu0 %v5023
    %5300 = vmatprep.subr.bf16.mxu0 %v5020
    %5301 = vmatpush2.bf16.msra.mxu0 %v5019
    %5302 = vmatprep.subr.bf16.mxu0 %v5016
    %5303 = vmatpush2.bf16.msra.mxu0 %v5015
    %5304 = vmatprep.subr.bf16.mxu0 %v5012
    %5305 = vmatpush2.bf16.msra.mxu0 %v5011
    %5306 = vmatprep.subr.bf16.mxu0 %v5008
    %5307 = vmatpush2.bf16.msra.mxu0 %v5007
    %5308 = vmatprep.subr.bf16.mxu0 %v5004
    %5309 = vmatpush2.bf16.msra.mxu0 %v5003
    %5310 = vmatprep.subr.bf16.mxu0 %v5000
    %5311 = vmatpush2.bf16.msra.mxu0 %v4999
    %5312 = vmatprep.mubr.bf16.mxu0 %v4367
    %5313 = vmatmul.mubr.bf16.gmra.mxu0 %v4366
    %v5314 = vpop.f32.mrf.mxu0
    %v5315 = vadd.f32 %v5274, %v5314
    %v5316 = vpop.f32.mrf.mxu0
    %v5317 = vadd.f32 %v5276, %v5316
    %v5318 = vpop.f32.mrf.mxu0
    %v5319 = vpop.f32.mrf.mxu0
    %5320 = vdwg.mxu0
    %v5321 = vmax.f32 %v5233, 0.0
    %v5322 = vmax.f32 %v5235, 0.0
    %v5323 = vmax.f32 %v5315, 0.0
    %v5324 = vmax.f32 %v5317, 0.0
    %s5325 = scalar_lea.vmem [#allocation19], 7
    %v5326 = vld [vmem:[%s5325] ss:$8 sm:$0x3]
    %v5327 = vpack.c.bf16 %v5321, %v5321
    %v5328 = vpack.c.bf16 %v5322, %v5322
    %v5329 = vpack.c.bf16 %v5323, %v5323
    %v5330 = vpack.c.bf16 %v5324, %v5324
    %v5331 = vld [vmem:[#allocation17] sm:$0xff]
    %v5332 = vld [vmem:[#allocation17 + $0x8] sm:$0xff]
    %v5333 = vld [vmem:[#allocation17 + $0x10] sm:$0xff]
    %v5334 = vld [vmem:[#allocation17 + $0x18] sm:$0xff]
    %v5335 = vld [vmem:[#allocation17 + $0x20] sm:$0xff]
    %v5336 = vld [vmem:[#allocation17 + $0x28] sm:$0xff]
    %v5337 = vld [vmem:[#allocation17 + $0x30] sm:$0xff]
    %v5338 = vld [vmem:[#allocation17 + $0x38] sm:$0xff]
    %v5339 = vld [vmem:[#allocation17 + $0x40] sm:$0xff]
    %v5340 = vld [vmem:[#allocation17 + $0x48] sm:$0xff]
    %v5341 = vld [vmem:[#allocation17 + $0x50] sm:$0xff]
    %v5342 = vld [vmem:[#allocation17 + $0x58] sm:$0xff]
    %v5343 = vld [vmem:[#allocation17 + $0x60] sm:$0xff]
    %v5344 = vld [vmem:[#allocation17 + $0x68] sm:$0xff]
    %v5345 = vld [vmem:[#allocation17 + $0x70] sm:$0xff]
    %v5346 = vld [vmem:[#allocation17 + $0x78] sm:$0xff]
    %v5347 = vld [vmem:[#allocation17 + $0x80] sm:$0xff]
    %v5348 = vld [vmem:[#allocation17 + $0x88] sm:$0xff]
    %v5349 = vld [vmem:[#allocation17 + $0x90] sm:$0xff]
    %v5350 = vld [vmem:[#allocation17 + $0x98] sm:$0xff]
    %v5351 = vld [vmem:[#allocation17 + $0xa0] sm:$0xff]
    %v5352 = vld [vmem:[#allocation17 + $0xa8] sm:$0xff]
    %v5353 = vld [vmem:[#allocation17 + $0xb0] sm:$0xff]
    %v5354 = vld [vmem:[#allocation17 + $0xb8] sm:$0xff]
    %v5355 = vld [vmem:[#allocation17 + $0xc0] sm:$0xff]
    %v5356 = vld [vmem:[#allocation17 + $0xc8] sm:$0xff]
    %v5357 = vld [vmem:[#allocation17 + $0xd0] sm:$0xff]
    %v5358 = vld [vmem:[#allocation17 + $0xd8] sm:$0xff]
    %v5359 = vld [vmem:[#allocation17 + $0xe0] sm:$0xff]
    %v5360 = vld [vmem:[#allocation17 + $0xe8] sm:$0xff]
    %v5361 = vld [vmem:[#allocation17 + $0xf0] sm:$0xff]
    %v5362 = vld [vmem:[#allocation17 + $0xf8] sm:$0xff]
    %v5363 = vld [vmem:[#allocation17 + $0x100] sm:$0xff]
    %v5364 = vld [vmem:[#allocation17 + $0x108] sm:$0xff]
    %v5365 = vld [vmem:[#allocation17 + $0x110] sm:$0xff]
    %v5366 = vld [vmem:[#allocation17 + $0x118] sm:$0xff]
    %v5367 = vld [vmem:[#allocation17 + $0x120] sm:$0xff]
    %v5368 = vld [vmem:[#allocation17 + $0x128] sm:$0xff]
    %v5369 = vld [vmem:[#allocation17 + $0x130] sm:$0xff]
    %v5370 = vld [vmem:[#allocation17 + $0x138] sm:$0xff]
    %v5371 = vld [vmem:[#allocation17 + $0x140] sm:$0xff]
    %v5372 = vld [vmem:[#allocation17 + $0x148] sm:$0xff]
    %v5373 = vld [vmem:[#allocation17 + $0x150] sm:$0xff]
    %v5374 = vld [vmem:[#allocation17 + $0x158] sm:$0xff]
    %v5375 = vld [vmem:[#allocation17 + $0x160] sm:$0xff]
    %v5376 = vld [vmem:[#allocation17 + $0x168] sm:$0xff]
    %v5377 = vld [vmem:[#allocation17 + $0x170] sm:$0xff]
    %v5378 = vld [vmem:[#allocation17 + $0x178] sm:$0xff]
    %v5379 = vld [vmem:[#allocation17 + $0x180] sm:$0xff]
    %v5380 = vld [vmem:[#allocation17 + $0x188] sm:$0xff]
    %v5381 = vld [vmem:[#allocation17 + $0x190] sm:$0xff]
    %v5382 = vld [vmem:[#allocation17 + $0x198] sm:$0xff]
    %v5383 = vld [vmem:[#allocation17 + $0x1a0] sm:$0xff]
    %v5384 = vld [vmem:[#allocation17 + $0x1a8] sm:$0xff]
    %v5385 = vld [vmem:[#allocation17 + $0x1b0] sm:$0xff]
    %v5386 = vld [vmem:[#allocation17 + $0x1b8] sm:$0xff]
    %v5387 = vld [vmem:[#allocation17 + $0x1c0] sm:$0xff]
    %v5388 = vld [vmem:[#allocation17 + $0x1c8] sm:$0xff]
    %v5389 = vld [vmem:[#allocation17 + $0x1d0] sm:$0xff]
    %v5390 = vld [vmem:[#allocation17 + $0x1d8] sm:$0xff]
    %v5391 = vld [vmem:[#allocation17 + $0x1e0] sm:$0xff]
    %v5392 = vld [vmem:[#allocation17 + $0x1e8] sm:$0xff]
    %v5393 = vld [vmem:[#allocation17 + $0x1f0] sm:$0xff]
    %v5394 = vld [vmem:[#allocation17 + $0x1f8] sm:$0xff]
    %v5396 = vlaneseq
    %v5397 = vshrl.u32 %v5396, 7
    %v5398 = vsub.s32 0, %v5397
    %v5399 = vrot.slane %v5326, %v5398
    %v5400 = vlaneseq
    %v5401 = vshrl.u32 %v5400, 7
    %v5402 = vsub.s32 1, %v5401
    %v5403 = vrot.slane %v5326, %v5402
    %v5470 = vunpack.c.l.b16 %v5331
    %v5471 = vunpack.c.h.b16 %v5331
    %v5472 = vunpack.c.l.b16 %v5332
    %v5473 = vunpack.c.h.b16 %v5332
    %v5474 = vunpack.c.l.b16 %v5333
    %v5475 = vunpack.c.h.b16 %v5333
    %v5476 = vunpack.c.l.b16 %v5334
    %v5477 = vunpack.c.h.b16 %v5334
    %v5478 = vunpack.c.l.b16 %v5335
    %v5479 = vunpack.c.h.b16 %v5335
    %v5480 = vunpack.c.l.b16 %v5336
    %v5481 = vunpack.c.h.b16 %v5336
    %v5482 = vunpack.c.l.b16 %v5337
    %v5483 = vunpack.c.h.b16 %v5337
    %v5484 = vunpack.c.l.b16 %v5338
    %v5485 = vunpack.c.h.b16 %v5338
    %v5486 = vunpack.c.l.b16 %v5339
    %v5487 = vunpack.c.h.b16 %v5339
    %v5488 = vunpack.c.l.b16 %v5340
    %v5489 = vunpack.c.h.b16 %v5340
    %v5490 = vunpack.c.l.b16 %v5341
    %v5491 = vunpack.c.h.b16 %v5341
    %v5492 = vunpack.c.l.b16 %v5342
    %v5493 = vunpack.c.h.b16 %v5342
    %v5494 = vunpack.c.l.b16 %v5343
    %v5495 = vunpack.c.h.b16 %v5343
    %v5496 = vunpack.c.l.b16 %v5344
    %v5497 = vunpack.c.h.b16 %v5344
    %v5498 = vunpack.c.l.b16 %v5345
    %v5499 = vunpack.c.h.b16 %v5345
    %v5500 = vunpack.c.l.b16 %v5346
    %v5501 = vunpack.c.h.b16 %v5346
    %v5502 = vunpack.c.l.b16 %v5347
    %v5503 = vunpack.c.h.b16 %v5347
    %v5504 = vunpack.c.l.b16 %v5348
    %v5505 = vunpack.c.h.b16 %v5348
    %v5506 = vunpack.c.l.b16 %v5349
    %v5507 = vunpack.c.h.b16 %v5349
    %v5508 = vunpack.c.l.b16 %v5350
    %v5509 = vunpack.c.h.b16 %v5350
    %v5510 = vunpack.c.l.b16 %v5351
    %v5511 = vunpack.c.h.b16 %v5351
    %v5512 = vunpack.c.l.b16 %v5352
    %v5513 = vunpack.c.h.b16 %v5352
    %v5514 = vunpack.c.l.b16 %v5353
    %v5515 = vunpack.c.h.b16 %v5353
    %v5516 = vunpack.c.l.b16 %v5354
    %v5517 = vunpack.c.h.b16 %v5354
    %v5518 = vunpack.c.l.b16 %v5355
    %v5519 = vunpack.c.h.b16 %v5355
    %v5520 = vunpack.c.l.b16 %v5356
    %v5521 = vunpack.c.h.b16 %v5356
    %v5522 = vunpack.c.l.b16 %v5357
    %v5523 = vunpack.c.h.b16 %v5357
    %v5524 = vunpack.c.l.b16 %v5358
    %v5525 = vunpack.c.h.b16 %v5358
    %v5526 = vunpack.c.l.b16 %v5359
    %v5527 = vunpack.c.h.b16 %v5359
    %v5528 = vunpack.c.l.b16 %v5360
    %v5529 = vunpack.c.h.b16 %v5360
    %v5530 = vunpack.c.l.b16 %v5361
    %v5531 = vunpack.c.h.b16 %v5361
    %v5532 = vunpack.c.l.b16 %v5362
    %v5533 = vunpack.c.h.b16 %v5362
    %v5534 = vunpack.c.l.b16 %v5363
    %v5535 = vunpack.c.h.b16 %v5363
    %v5536 = vunpack.c.l.b16 %v5364
    %v5537 = vunpack.c.h.b16 %v5364
    %v5538 = vunpack.c.l.b16 %v5365
    %v5539 = vunpack.c.h.b16 %v5365
    %v5540 = vunpack.c.l.b16 %v5366
    %v5541 = vunpack.c.h.b16 %v5366
    %v5542 = vunpack.c.l.b16 %v5367
    %v5543 = vunpack.c.h.b16 %v5367
    %v5544 = vunpack.c.l.b16 %v5368
    %v5545 = vunpack.c.h.b16 %v5368
    %v5546 = vunpack.c.l.b16 %v5369
    %v5547 = vunpack.c.h.b16 %v5369
    %v5548 = vunpack.c.l.b16 %v5370
    %v5549 = vunpack.c.h.b16 %v5370
    %v5550 = vunpack.c.l.b16 %v5371
    %v5551 = vunpack.c.h.b16 %v5371
    %v5552 = vunpack.c.l.b16 %v5372
    %v5553 = vunpack.c.h.b16 %v5372
    %v5554 = vunpack.c.l.b16 %v5373
    %v5555 = vunpack.c.h.b16 %v5373
    %v5556 = vunpack.c.l.b16 %v5374
    %v5557 = vunpack.c.h.b16 %v5374
    %v5558 = vunpack.c.l.b16 %v5375
    %v5559 = vunpack.c.h.b16 %v5375
    %v5560 = vunpack.c.l.b16 %v5376
    %v5561 = vunpack.c.h.b16 %v5376
    %v5562 = vunpack.c.l.b16 %v5377
    %v5563 = vunpack.c.h.b16 %v5377
    %v5564 = vunpack.c.l.b16 %v5378
    %v5565 = vunpack.c.h.b16 %v5378
    %v5566 = vunpack.c.l.b16 %v5379
    %v5567 = vunpack.c.h.b16 %v5379
    %v5568 = vunpack.c.l.b16 %v5380
    %v5569 = vunpack.c.h.b16 %v5380
    %v5570 = vunpack.c.l.b16 %v5381
    %v5571 = vunpack.c.h.b16 %v5381
    %v5572 = vunpack.c.l.b16 %v5382
    %v5573 = vunpack.c.h.b16 %v5382
    %v5574 = vunpack.c.l.b16 %v5383
    %v5575 = vunpack.c.h.b16 %v5383
    %v5576 = vunpack.c.l.b16 %v5384
    %v5577 = vunpack.c.h.b16 %v5384
    %v5578 = vunpack.c.l.b16 %v5385
    %v5579 = vunpack.c.h.b16 %v5385
    %v5580 = vunpack.c.l.b16 %v5386
    %v5581 = vunpack.c.h.b16 %v5386
    %v5582 = vunpack.c.l.b16 %v5387
    %v5583 = vunpack.c.h.b16 %v5387
    %v5584 = vunpack.c.l.b16 %v5388
    %v5585 = vunpack.c.h.b16 %v5388
    %v5586 = vunpack.c.l.b16 %v5389
    %v5587 = vunpack.c.h.b16 %v5389
    %v5588 = vunpack.c.l.b16 %v5390
    %v5589 = vunpack.c.h.b16 %v5390
    %v5590 = vunpack.c.l.b16 %v5391
    %v5591 = vunpack.c.h.b16 %v5391
    %v5592 = vunpack.c.l.b16 %v5392
    %v5593 = vunpack.c.h.b16 %v5392
    %v5594 = vunpack.c.l.b16 %v5393
    %v5595 = vunpack.c.h.b16 %v5393
    %v5596 = vunpack.c.l.b16 %v5394
    %v5597 = vunpack.c.h.b16 %v5394
    %v5598 = vpack.c.b16 %v5472, %v5470
    %v5599 = vpack.c.b16 %v5473, %v5471
    %v5600 = vpack.c.b16 %v5476, %v5474
    %v5601 = vpack.c.b16 %v5477, %v5475
    %v5602 = vpack.c.b16 %v5480, %v5478
    %v5603 = vpack.c.b16 %v5481, %v5479
    %v5604 = vpack.c.b16 %v5484, %v5482
    %v5605 = vpack.c.b16 %v5485, %v5483
    %v5606 = vpack.c.b16 %v5488, %v5486
    %v5607 = vpack.c.b16 %v5489, %v5487
    %v5608 = vpack.c.b16 %v5492, %v5490
    %v5609 = vpack.c.b16 %v5493, %v5491
    %v5610 = vpack.c.b16 %v5496, %v5494
    %v5611 = vpack.c.b16 %v5497, %v5495
    %v5612 = vpack.c.b16 %v5500, %v5498
    %v5613 = vpack.c.b16 %v5501, %v5499
    %v5614 = vpack.c.b16 %v5504, %v5502
    %v5615 = vpack.c.b16 %v5505, %v5503
    %v5616 = vpack.c.b16 %v5508, %v5506
    %v5617 = vpack.c.b16 %v5509, %v5507
    %v5618 = vpack.c.b16 %v5512, %v5510
    %v5619 = vpack.c.b16 %v5513, %v5511
    %v5620 = vpack.c.b16 %v5516, %v5514
    %v5621 = vpack.c.b16 %v5517, %v5515
    %v5622 = vpack.c.b16 %v5520, %v5518
    %v5623 = vpack.c.b16 %v5521, %v5519
    %v5624 = vpack.c.b16 %v5524, %v5522
    %v5625 = vpack.c.b16 %v5525, %v5523
    %v5626 = vpack.c.b16 %v5528, %v5526
    %v5627 = vpack.c.b16 %v5529, %v5527
    %v5628 = vpack.c.b16 %v5532, %v5530
    %v5629 = vpack.c.b16 %v5533, %v5531
    %v5630 = vpack.c.b16 %v5536, %v5534
    %v5631 = vpack.c.b16 %v5537, %v5535
    %v5632 = vpack.c.b16 %v5540, %v5538
    %v5633 = vpack.c.b16 %v5541, %v5539
    %v5634 = vpack.c.b16 %v5544, %v5542
    %v5635 = vpack.c.b16 %v5545, %v5543
    %v5636 = vpack.c.b16 %v5548, %v5546
    %v5637 = vpack.c.b16 %v5549, %v5547
    %v5638 = vpack.c.b16 %v5552, %v5550
    %v5639 = vpack.c.b16 %v5553, %v5551
    %v5640 = vpack.c.b16 %v5556, %v5554
    %v5641 = vpack.c.b16 %v5557, %v5555
    %v5642 = vpack.c.b16 %v5560, %v5558
    %v5643 = vpack.c.b16 %v5561, %v5559
    %v5644 = vpack.c.b16 %v5564, %v5562
    %v5645 = vpack.c.b16 %v5565, %v5563
    %v5646 = vpack.c.b16 %v5568, %v5566
    %v5647 = vpack.c.b16 %v5569, %v5567
    %v5648 = vpack.c.b16 %v5572, %v5570
    %v5649 = vpack.c.b16 %v5573, %v5571
    %v5650 = vpack.c.b16 %v5576, %v5574
    %v5651 = vpack.c.b16 %v5577, %v5575
    %v5652 = vpack.c.b16 %v5580, %v5578
    %v5653 = vpack.c.b16 %v5581, %v5579
    %v5654 = vpack.c.b16 %v5584, %v5582
    %v5655 = vpack.c.b16 %v5585, %v5583
    %v5656 = vpack.c.b16 %v5588, %v5586
    %v5657 = vpack.c.b16 %v5589, %v5587
    %v5658 = vpack.c.b16 %v5592, %v5590
    %v5659 = vpack.c.b16 %v5593, %v5591
    %v5660 = vpack.c.b16 %v5596, %v5594
    %v5661 = vpack.c.b16 %v5597, %v5595
    %5726 = vmatprep.subr.bf16.mxu0 %v5613
    %5727 = vmatpush1.bf16.msra.mxu0 %v5612
    %5728 = vmatprep.subr.bf16.mxu0 %v5611
    %5729 = vmatpush1.bf16.msra.mxu0 %v5610
    %5730 = vmatprep.subr.bf16.mxu0 %v5609
    %5731 = vmatpush1.bf16.msra.mxu0 %v5608
    %5732 = vmatprep.subr.bf16.mxu0 %v5607
    %5733 = vmatpush1.bf16.msra.mxu0 %v5606
    %5734 = vmatprep.subr.bf16.mxu0 %v5605
    %5735 = vmatpush1.bf16.msra.mxu0 %v5604
    %5736 = vmatprep.subr.bf16.mxu0 %v5603
    %5737 = vmatpush1.bf16.msra.mxu0 %v5602
    %5738 = vmatprep.subr.bf16.mxu0 %v5601
    %5739 = vmatpush1.bf16.msra.mxu0 %v5600
    %5740 = vmatprep.subr.bf16.mxu0 %v5599
    %5741 = vmatpush1.bf16.msra.mxu0 %v5598
    %5742 = vmatprep.subr.bf16.mxu0 %v5629
    %5743 = vmatpush2.bf16.msra.mxu0 %v5628
    %5744 = vmatprep.subr.bf16.mxu0 %v5627
    %5745 = vmatpush2.bf16.msra.mxu0 %v5626
    %5746 = vmatprep.subr.bf16.mxu0 %v5625
    %5747 = vmatpush2.bf16.msra.mxu0 %v5624
    %5748 = vmatprep.subr.bf16.mxu0 %v5623
    %5749 = vmatpush2.bf16.msra.mxu0 %v5622
    %5750 = vmatprep.subr.bf16.mxu0 %v5621
    %5751 = vmatpush2.bf16.msra.mxu0 %v5620
    %5752 = vmatprep.subr.bf16.mxu0 %v5619
    %5753 = vmatpush2.bf16.msra.mxu0 %v5618
    %5754 = vmatprep.subr.bf16.mxu0 %v5617
    %5755 = vmatpush2.bf16.msra.mxu0 %v5616
    %5756 = vmatprep.subr.bf16.mxu0 %v5615
    %5757 = vmatpush2.bf16.msra.mxu0 %v5614
    %5758 = vmatprep.mubr.bf16.mxu0 %v5328
    %5759 = vmatmul.mubr.bf16.gmra.mxu0 %v5327
    %v5760 = vpop.f32.mrf.mxu0
    %v5761 = vadd.f32 %v5399, %v5760
    %v5762 = vpop.f32.mrf.mxu0
    %v5763 = vadd.f32 %v5403, %v5762
    %v5764 = vpop.f32.mrf.mxu0
    %v5765 = vpop.f32.mrf.mxu0
    %5766 = vdwg.mxu0
    %5767 = vmatprep.subr.bf16.mxu0 %v5645
    %5768 = vmatpush1.bf16.msra.mxu0 %v5644
    %5769 = vmatprep.subr.bf16.mxu0 %v5643
    %5770 = vmatpush1.bf16.msra.mxu0 %v5642
    %5771 = vmatprep.subr.bf16.mxu0 %v5641
    %5772 = vmatpush1.bf16.msra.mxu0 %v5640
    %5773 = vmatprep.subr.bf16.mxu0 %v5639
    %5774 = vmatpush1.bf16.msra.mxu0 %v5638
    %5775 = vmatprep.subr.bf16.mxu0 %v5637
    %5776 = vmatpush1.bf16.msra.mxu0 %v5636
    %5777 = vmatprep.subr.bf16.mxu0 %v5635
    %5778 = vmatpush1.bf16.msra.mxu0 %v5634
    %5779 = vmatprep.subr.bf16.mxu0 %v5633
    %5780 = vmatpush1.bf16.msra.mxu0 %v5632
    %5781 = vmatprep.subr.bf16.mxu0 %v5631
    %5782 = vmatpush1.bf16.msra.mxu0 %v5630
    %5783 = vmatprep.subr.bf16.mxu0 %v5661
    %5784 = vmatpush2.bf16.msra.mxu0 %v5660
    %5785 = vmatprep.subr.bf16.mxu0 %v5659
    %5786 = vmatpush2.bf16.msra.mxu0 %v5658
    %5787 = vmatprep.subr.bf16.mxu0 %v5657
    %5788 = vmatpush2.bf16.msra.mxu0 %v5656
    %5789 = vmatprep.subr.bf16.mxu0 %v5655
    %5790 = vmatpush2.bf16.msra.mxu0 %v5654
    %5791 = vmatprep.subr.bf16.mxu0 %v5653
    %5792 = vmatpush2.bf16.msra.mxu0 %v5652
    %5793 = vmatprep.subr.bf16.mxu0 %v5651
    %5794 = vmatpush2.bf16.msra.mxu0 %v5650
    %5795 = vmatprep.subr.bf16.mxu0 %v5649
    %5796 = vmatpush2.bf16.msra.mxu0 %v5648
    %5797 = vmatprep.subr.bf16.mxu0 %v5647
    %5798 = vmatpush2.bf16.msra.mxu0 %v5646
    %5799 = vmatprep.mubr.bf16.mxu0 %v5330
    %5800 = vmatmul.mubr.bf16.gmra.mxu0 %v5329
    %v5801 = vpop.f32.mrf.mxu0
    %v5802 = vadd.f32 %v5761, %v5801
    %v5803 = vpop.f32.mrf.mxu0
    %v5804 = vadd.f32 %v5763, %v5803
    %v5805 = vpop.f32.mrf.mxu0
    %v5806 = vpop.f32.mrf.mxu0
    %5807 = vdwg.mxu0
    %v5808 = vxor.u32 %v5802, 2147483648
    %v5809 = vxor.u32 %v5804, 2147483648
    %v5810 = vmul.f32 %v5808, 1.442695
    %v5811 = vpow.pop %v5810
    %v5812 = vmul.f32 %v5809, 1.442695
    %v5813 = vpow.pop %v5812
    %v5814 = vadd.f32 %v5811, 1.0
    %v5815 = vadd.f32 %v5813, 1.0
    %v5816 = vrcp.pop %v5814
    %v5817 = vmul.f32 1.0, %v5816
    %v5818 = vrcp.pop %v5815
    %v5819 = vmul.f32 1.0, %v5818
    %5820 = vst [vmem:[#allocation20] sm:$0xff] %v5817
    %5821 = vst [vmem:[#allocation20 + $0x8] sm:$0xff] %v5819
    %5822 = vst [vmem:[#allocation21] sm:$0xff] %v3085
    %5823 = vst [vmem:[#allocation21 + $0x8] sm:$0xff] %v3087
    // Predicated region
    $region90: #{tpu_custom_call.1} parent=1 // pred_check
      _
    $region91: #{tpu_custom_call.1} parent=1 // pred_check_branch
      %5825 = sbr.rel (0) target = $region93
    $region92: #{tpu_custom_call.1} parent=1 // pred_region
      %s5827 = ssub.s32 256, 256
      %5828 = vsyncadd [#allocation4], %s5827
      %s5830 = sshll.u32 [#allocation20], 4
      %s5831 = int_to_ptr.vmem [resolvable:$true] %s5830
      %5833 = dma.vmem_to_hbm [thread:$0]  %s5831, 256, %s11, [#allocation4]
    $region93: #{tpu_custom_call.1} parent=1 // pred_fallthru
      _
    // Predicated region
    $region94: #{tpu_custom_call.1} parent=1 // pred_check
      _
    $region95: #{tpu_custom_call.1} parent=1 // pred_check_branch
      %5835 = sbr.rel (0) target = $region97
    $region96: #{tpu_custom_call.1} parent=1 // pred_region
      %s5837 = ssub.s32 256, 256
      %5838 = vsyncadd [#allocation22], %s5837
      %s5840 = sshll.u32 [#allocation21], 4
      %s5841 = int_to_ptr.vmem [resolvable:$true] %s5840
      %5843 = dma.vmem_to_hbm [thread:$0]  %s5841, 256, %s12, [#allocation22]
    $region97: #{tpu_custom_call.1} parent=1 // pred_fallthru
      _
    // Predicated region
    $region98: #{tpu_custom_call.1} parent=1 // pred_check
      _
    $region99: #{tpu_custom_call.1} parent=1 // pred_check_branch
      %5845 = sbr.rel (0) target = $region101
    $region100: #{tpu_custom_call.1} parent=1 // pred_region
      %5846 = dma.done [#allocation4], 256
    $region101: #{tpu_custom_call.1} parent=1 // pred_fallthru
      _
    // Predicated region
    $region102: #{tpu_custom_call.1} parent=1 // pred_check
      _
    $region103: #{tpu_custom_call.1} parent=1 // pred_check_branch
      %5848 = sbr.rel (0) target = $region105
    $region104: #{tpu_custom_call.1} parent=1 // pred_region
      %5849 = dma.done [#allocation22], 256
    $region105: #{tpu_custom_call.1} parent=1 // pred_fallthru
      _
    %5850 = vsyncpa [#allocation3], 1
    %5851 = vsyncpa [#allocation6], 1
    %5852 = vsyncpa [#allocation9], 1
    %5853 = vsyncpa [#allocation12], 1
    %5854 = vsyncpa [#allocation15], 1
    %5855 = vsyncpa [#allocation18], 1
    %5856 = vsyncpa [#allocation4], 1
    %5857 = vsyncpa [#allocation22], 1

</llo_original>
